<compile_context>
chip_gen: v5e
topology: v5e:2x2
jax: 0.10.0
libtpu: 0.0.40
codegen_flags: <defaults>
</compile_context>

<pallas_src>
import functools

import jax
import jax.numpy as jnp
from jax.experimental import pallas as pl
from jax.experimental.pallas import tpu as pltpu

GROUPNORM_GROUPS = 8      # must divide in_channels (real SD uses 32)
GN_EPS = 1e-5             # nn.GroupNorm default eps


# ------------------------------------- kernel -------------------------------------
def _unet_output_kernel(x_ref, gn_g_ref, gn_b_ref, w_ref, cb_ref, o_ref,
                        *, groups, out_h, out_w):
    H, W = out_h, out_w
    Hp, Wp, C = x_ref.shape[1], x_ref.shape[2], x_ref.shape[3]
    Cout = o_ref.shape[3]
    cg = C // groups
    inv_n = 1.0 / float(H * W * cg)

    # bf16 input tile -> one upcast; all statistics / elementwise math in f32.
    xf = x_ref[0].astype(jnp.float32)                              # (Hp, Wp, C), zero halo

    # ---- GroupNorm statistics: var = E[x^2] - mean^2.  Halo (and alignment) columns
    # are exactly zero, so padded-slab sums equal interior sums; no centered slab and
    # no mask are needed for the statistics.
    csum = jnp.sum(xf, axis=(0, 1), keepdims=True).reshape(1, C)            # (1, C)
    csq = jnp.sum(xf * xf, axis=(0, 1), keepdims=True).reshape(1, C)        # (1, C)

    # Channel <-> group pooling via a tiny in-kernel one-hot (G, C) mask (no constant
    # operands, no MXU, exact f32).
    gi = jax.lax.broadcasted_iota(jnp.int32, (groups, C), 0)
    ci = jax.lax.broadcasted_iota(jnp.int32, (groups, C), 1)
    pool = ((ci >= gi * cg) & (ci < (gi + 1) * cg)).astype(jnp.float32)     # (G, C)

    gmean = jnp.sum(pool * csum, axis=1, keepdims=True) * inv_n             # (G, 1)
    gmsq = jnp.sum(pool * csq, axis=1, keepdims=True) * inv_n               # (G, 1)
    ginv = jax.lax.rsqrt(gmsq - gmean * gmean + GN_EPS)                     # (G, 1)

    mean_c = jnp.sum(pool * gmean, axis=0, keepdims=True)                   # (1, C)
    inv_c = jnp.sum(pool * ginv, axis=0, keepdims=True)                     # (1, C)

    # ---- GroupNorm affine folded into a single per-channel scale/shift (one slab FMA).
    scale = inv_c * gn_g_ref[...]                                           # (1, C)
    shift = gn_b_ref[...] - mean_c * scale                                  # (1, C)
    y = xf * scale + shift                                                  # (Hp, Wp, C)

    # ---- SiLU, then re-zero the halo with a channel-independent (Hp, Wp, 1) mask so
    # the conv sees true zero padding.
    a = y * jax.nn.sigmoid(y)
    r = jax.lax.broadcasted_iota(jnp.int32, (Hp, Wp, 1), 0)
    c = jax.lax.broadcasted_iota(jnp.int32, (Hp, Wp, 1), 1)
    interior = (r >= 1) & (r <= H) & (c >= 1) & (c <= W)
    a = jnp.where(interior, a, 0.0)

    # ---- 3x3 conv: ONE bf16 matmul on the un-shifted padded slab, then shift-and-add
    # the 9 small Cout-wide result slices into the interior window.  Wp is a multiple
    # of 8, so both reshapes below are layout no-ops.
    lhs = a.reshape(Hp * Wp, C).astype(jnp.bfloat16)
    z = jnp.dot(lhs, w_ref[...], preferred_element_type=jnp.float32)        # (Hp*Wp, 9*Cout)
    z = z.reshape(Hp, Wp, 9 * Cout)

    acc = None
    for dy in range(3):
        for dx in range(3):
            t = dy * 3 + dx
            tap = z[dy:dy + H, dx:dx + W, t * Cout:(t + 1) * Cout]          # (H, W, Cout)
            acc = tap if acc is None else acc + tap

    # Full-extent (H, W, Cout) block => one contiguous output DMA per image.
    o_ref[0] = acc + cb_ref[...]


# ------------------------------------- wrapper -------------------------------------
def _vmem_limit_bytes():
    try:
        cap = int(pltpu.get_tpu_info().vmem_capacity_bytes)
    except Exception:
        cap = 128 * 1024 * 1024
    # ~96 MB on 128-MiB parts (v5e/v6e), ~48 MB on 64-MiB parts (v7x).
    return int(min(96 * 1024 * 1024, (cap * 3) // 4))


def unet_output_layer(x_nchw, params, *, groups=GROUPNORM_GROUPS):
    B, C, H, W = x_nchw.shape
    assert C % groups == 0
    Cout = params["conv_w"].shape[0]

    # Layout plumbing in the wrapper (fuses under jit): NCHW -> NHWC, cast to bf16
    # (halves kernel HBM read bytes), zero halo pad with the padded width rounded up
    # to a multiple of 8.
    # TODO(synk): fold the halo pad into the kernel (zero-filled VMEM scratch + DMA of
    # the unpadded block) to drop this extra wrapper HBM pass entirely.
    Hp = H + 2
    Wp = ((W + 2 + 7) // 8) * 8
    x_nhwc = jnp.transpose(x_nchw, (0, 2, 3, 1)).astype(jnp.bfloat16)
    x_pad = jnp.pad(x_nhwc, ((0, 0), (1, 1), (1, Wp - W - 1), (0, 0)))     # (B, Hp, Wp, C)

    gn_g = params["gn_g"].reshape(1, C).astype(jnp.float32)
    gn_b = params["gn_b"].reshape(1, C).astype(jnp.float32)
    # Conv weight (Cout, Cin, 3, 3) -> (Cin, 9*Cout) with tap-major / cout-minor lanes.
    w9 = jnp.transpose(params["conv_w"], (1, 2, 3, 0)).reshape(C, 9 * Cout)
    w9 = w9.astype(jnp.bfloat16)
    cb = params["conv_b"].reshape(1, Cout).astype(jnp.float32)

    out_nhwc = pl.pallas_call(
        functools.partial(_unet_output_kernel, groups=groups, out_h=H, out_w=W),
        out_shape=jax.ShapeDtypeStruct((B, H, W, Cout), jnp.float32),
        grid=(B,),
        in_specs=[
            pl.BlockSpec((1, Hp, Wp, C), lambda b: (b, 0, 0, 0)),
            pl.BlockSpec((1, C), lambda b: (0, 0)),
            pl.BlockSpec((1, C), lambda b: (0, 0)),
            pl.BlockSpec((C, 9 * Cout), lambda b: (0, 0)),
            pl.BlockSpec((1, Cout), lambda b: (0, 0)),
        ],
        out_specs=pl.BlockSpec((1, H, W, Cout), lambda b: (b, 0, 0, 0)),
        compiler_params=pltpu.CompilerParams(
            dimension_semantics=("parallel",),
            vmem_limit_bytes=_vmem_limit_bytes()),
    )(x_pad, gn_g, gn_b, w9, cb)

    # NHWC -> NCHW
    return jnp.transpose(out_nhwc, (0, 3, 1, 2))


# ------------------------------ deterministic parameters ------------------------------
def init_params(key, in_channels, out_channels):
    k1, k2, k3, k4 = jax.random.split(key, 4)
    return {
        "gn_g": 1.0 + 0.1 * jax.random.normal(k1, (in_channels,), jnp.float32),
        "gn_b": 0.1 * jax.random.normal(k2, (in_channels,), jnp.float32),
        "conv_w": 0.06 * jax.random.normal(
            k3, (out_channels, in_channels, 3, 3), jnp.float32),
        "conv_b": 0.06 * jax.random.normal(k4, (out_channels,), jnp.float32),
    }


# --------------------------- independent pure-JAX reference ---------------------------
def reference(x, p, *, groups=GROUPNORM_GROUPS):
    B, C, H, W = x.shape
    xg = x.reshape(B, groups, -1)
    mu = xg.mean(-1, keepdims=True)
    var = ((xg - mu) ** 2).mean(-1, keepdims=True)
    xn = ((xg - mu) / jnp.sqrt(var + GN_EPS)).reshape(B, C, H, W)
    xn = xn * p["gn_g"].reshape(1, C, 1, 1) + p["gn_b"].reshape(1, C, 1, 1)
    a = xn * jax.nn.sigmoid(xn)                                  # SiLU
    out = jax.lax.conv_general_dilated(
        a, p["conv_w"], window_strides=(1, 1), padding=((1, 1), (1, 1)),
        dimension_numbers=("NCHW", "OIHW", "NCHW"),
        precision=jax.lax.Precision.HIGHEST)
    return out + p["conv_b"].reshape(1, -1, 1, 1)


if __name__ == "__main__":
    B, Cin, Cout, H, W = 2, 32, 4, 16, 16      # small shapes consistent with the module

    key = jax.random.PRNGKey(0)
    kx, kp = jax.random.split(key)
    x = jax.random.normal(kx, (B, Cin, H, W), jnp.float32)
    params = init_params(kp, Cin, Cout)

    fwd = jax.jit(unet_output_layer)
    out = jax.block_until_ready(fwd(x, params))

    ref = jax.block_until_ready(reference(x, params))
    assert out.shape == (B, Cout, H, W)
    err = float(jnp.max(jnp.abs(out - ref)))
    # bf16 activation/weight operands with f32 accumulation vs an f32 HIGHEST reference.
    if not err < 5e-2:
        raise AssertionError(f"mismatch vs reference: max abs err {err}")
    print("KERNEL_OK")
</pallas_src>

<mosaic_0001>
module attributes {stable_mosaic.version = 11 : i64} {
  func.func @_unet_output_kernel(%arg0: i32, %arg1: memref<1x18x24x32xbf16, #tpu.memory_space<vmem>>, %arg2: memref<1x32xf32, #tpu.memory_space<vmem>>, %arg3: memref<1x32xf32, #tpu.memory_space<vmem>>, %arg4: memref<32x36xbf16, #tpu.memory_space<vmem>>, %arg5: memref<1x4xf32, #tpu.memory_space<vmem>>, %arg6: memref<1x16x16x4xf32, #tpu.memory_space<vmem>>) attributes {dimension_semantics = [#tpu.dimension_semantics<parallel>], iteration_bounds = array<i64: 2>, scalar_prefetch = 0 : i64, scratch_operands = 0 : i64, tpu.core_type = #tpu.core_type<tc>, window_params = [{transform_indices = @transform_0, window_bounds = array<i64: 1, 18, 24, 32>}, {pipeline_mode = #tpu.pipeline_mode<synchronous>, transform_indices = @transform_1, window_bounds = array<i64: 1, 32>}, {pipeline_mode = #tpu.pipeline_mode<synchronous>, transform_indices = @transform_2, window_bounds = array<i64: 1, 32>}, {pipeline_mode = #tpu.pipeline_mode<synchronous>, transform_indices = @transform_3, window_bounds = array<i64: 32, 36>}, {pipeline_mode = #tpu.pipeline_mode<synchronous>, transform_indices = @transform_4, window_bounds = array<i64: 1, 4>}, {transform_indices = @transform_5, window_bounds = array<i64: 1, 16, 16, 4>}]} {
    %c0 = arith.constant 0 : index
    %c0_0 = arith.constant 0 : index
    %c0_1 = arith.constant 0 : index
    %c0_2 = arith.constant 0 : index
    %0 = vector.load %arg1[%c0, %c0_0, %c0_1, %c0_2] : memref<1x18x24x32xbf16, #tpu.memory_space<vmem>>, vector<1x18x24x32xbf16>
    %1 = vector.shape_cast %0 : vector<1x18x24x32xbf16> to vector<18x24x32xbf16>
    %2 = arith.extf %1 : vector<18x24x32xbf16> to vector<18x24x32xf32>
    %cst = arith.constant dense<0.000000e+00> : vector<32xf32>
    %3 = vector.multi_reduction <add>, %2, %cst [0, 1] : vector<18x24x32xf32> to vector<32xf32>
    %4 = vector.shape_cast %3 : vector<32xf32> to vector<1x1x32xf32>
    %5 = vector.shape_cast %4 : vector<1x1x32xf32> to vector<1x32xf32>
    %6 = arith.mulf %2, %2 : vector<18x24x32xf32>
    %cst_3 = arith.constant dense<0.000000e+00> : vector<32xf32>
    %7 = vector.multi_reduction <add>, %6, %cst_3 [0, 1] : vector<18x24x32xf32> to vector<32xf32>
    %8 = vector.shape_cast %7 : vector<32xf32> to vector<1x1x32xf32>
    %9 = vector.shape_cast %8 : vector<1x1x32xf32> to vector<1x32xf32>
    %10 = tpu.iota {dimensions = array<i32: 0>} : vector<8x32xi32>
    %11 = tpu.iota {dimensions = array<i32: 1>} : vector<8x32xi32>
    %c4_i32 = arith.constant 4 : i32
    %12 = vector.broadcast %c4_i32 : i32 to vector<8x32xi32>
    %13 = arith.muli %10, %12 : vector<8x32xi32>
    %14 = arith.cmpi sge, %11, %13 : vector<8x32xi32>
    %c1_i32 = arith.constant 1 : i32
    %15 = vector.broadcast %c1_i32 : i32 to vector<8x32xi32>
    %16 = arith.addi %10, %15 : vector<8x32xi32>
    %c4_i32_4 = arith.constant 4 : i32
    %17 = vector.broadcast %c4_i32_4 : i32 to vector<8x32xi32>
    %18 = arith.muli %16, %17 : vector<8x32xi32>
    %19 = arith.cmpi slt, %11, %18 : vector<8x32xi32>
    %20 = arith.andi %14, %19 : vector<8x32xi1>
    %21 = arith.extui %20 : vector<8x32xi1> to vector<8x32xi32>
    %22 = arith.sitofp %21 : vector<8x32xi32> to vector<8x32xf32>
    %23 = vector.broadcast %5 : vector<1x32xf32> to vector<8x32xf32>
    %24 = arith.mulf %22, %23 : vector<8x32xf32>
    %cst_5 = arith.constant dense<0.000000e+00> : vector<8xf32>
    %25 = vector.multi_reduction <add>, %24, %cst_5 [1] : vector<8x32xf32> to vector<8xf32>
    %26 = vector.shape_cast %25 : vector<8xf32> to vector<8x1xf32>
    %cst_6 = arith.constant 9.765625E-4 : f32
    %27 = vector.broadcast %cst_6 : f32 to vector<8x1xf32>
    %28 = arith.mulf %26, %27 : vector<8x1xf32>
    %29 = vector.broadcast %9 : vector<1x32xf32> to vector<8x32xf32>
    %30 = arith.mulf %22, %29 : vector<8x32xf32>
    %cst_7 = arith.constant dense<0.000000e+00> : vector<8xf32>
    %31 = vector.multi_reduction <add>, %30, %cst_7 [1] : vector<8x32xf32> to vector<8xf32>
    %32 = vector.shape_cast %31 : vector<8xf32> to vector<8x1xf32>
    %cst_8 = arith.constant 9.765625E-4 : f32
    %33 = vector.broadcast %cst_8 : f32 to vector<8x1xf32>
    %34 = arith.mulf %32, %33 : vector<8x1xf32>
    %35 = arith.mulf %28, %28 : vector<8x1xf32>
    %36 = arith.subf %34, %35 : vector<8x1xf32>
    %cst_9 = arith.constant 9.99999974E-6 : f32
    %37 = vector.broadcast %cst_9 : f32 to vector<8x1xf32>
    %38 = arith.addf %36, %37 : vector<8x1xf32>
    %39 = math.rsqrt %38 : vector<8x1xf32>
    %40 = vector.broadcast %28 : vector<8x1xf32> to vector<8x32xf32>
    %41 = arith.mulf %22, %40 : vector<8x32xf32>
    %cst_10 = arith.constant dense<0.000000e+00> : vector<32xf32>
    %42 = vector.multi_reduction <add>, %41, %cst_10 [0] : vector<8x32xf32> to vector<32xf32>
    %43 = vector.shape_cast %42 : vector<32xf32> to vector<1x32xf32>
    %44 = vector.broadcast %39 : vector<8x1xf32> to vector<8x32xf32>
    %45 = arith.mulf %22, %44 : vector<8x32xf32>
    %cst_11 = arith.constant dense<0.000000e+00> : vector<32xf32>
    %46 = vector.multi_reduction <add>, %45, %cst_11 [0] : vector<8x32xf32> to vector<32xf32>
    %47 = vector.shape_cast %46 : vector<32xf32> to vector<1x32xf32>
    %c0_12 = arith.constant 0 : index
    %c0_13 = arith.constant 0 : index
    %48 = vector.load %arg2[%c0_12, %c0_13] : memref<1x32xf32, #tpu.memory_space<vmem>>, vector<1x32xf32>
    %49 = arith.mulf %47, %48 : vector<1x32xf32>
    %c0_14 = arith.constant 0 : index
    %c0_15 = arith.constant 0 : index
    %50 = vector.load %arg3[%c0_14, %c0_15] : memref<1x32xf32, #tpu.memory_space<vmem>>, vector<1x32xf32>
    %51 = arith.mulf %43, %49 : vector<1x32xf32>
    %52 = arith.subf %50, %51 : vector<1x32xf32>
    %53 = vector.shape_cast %49 : vector<1x32xf32> to vector<1x1x32xf32>
    %54 = vector.broadcast %53 : vector<1x1x32xf32> to vector<18x24x32xf32>
    %55 = arith.mulf %2, %54 : vector<18x24x32xf32>
    %56 = vector.shape_cast %52 : vector<1x32xf32> to vector<1x1x32xf32>
    %57 = vector.broadcast %56 : vector<1x1x32xf32> to vector<18x24x32xf32>
    %58 = arith.addf %55, %57 : vector<18x24x32xf32>
    %59 = arith.negf %58 : vector<18x24x32xf32>
    %60 = math.exp %59 : vector<18x24x32xf32>
    %cst_16 = arith.constant 1.000000e+00 : f32
    %61 = vector.broadcast %cst_16 : f32 to vector<18x24x32xf32>
    %62 = arith.addf %61, %60 : vector<18x24x32xf32>
    %63 = arith.divf %61, %62 : vector<18x24x32xf32>
    %64 = arith.mulf %58, %63 : vector<18x24x32xf32>
    %65 = tpu.iota {dimensions = array<i32: 0>} : vector<18x24x1xi32>
    %66 = tpu.iota {dimensions = array<i32: 1>} : vector<18x24x1xi32>
    %c1_i32_17 = arith.constant 1 : i32
    %67 = vector.broadcast %c1_i32_17 : i32 to vector<18x24x1xi32>
    %68 = arith.cmpi sge, %65, %67 : vector<18x24x1xi32>
    %c16_i32 = arith.constant 16 : i32
    %69 = vector.broadcast %c16_i32 : i32 to vector<18x24x1xi32>
    %70 = arith.cmpi sle, %65, %69 : vector<18x24x1xi32>
    %71 = arith.andi %68, %70 : vector<18x24x1xi1>
    %c1_i32_18 = arith.constant 1 : i32
    %72 = vector.broadcast %c1_i32_18 : i32 to vector<18x24x1xi32>
    %73 = arith.cmpi sge, %66, %72 : vector<18x24x1xi32>
    %74 = arith.andi %71, %73 : vector<18x24x1xi1>
    %c16_i32_19 = arith.constant 16 : i32
    %75 = vector.broadcast %c16_i32_19 : i32 to vector<18x24x1xi32>
    %76 = arith.cmpi sle, %66, %75 : vector<18x24x1xi32>
    %77 = arith.andi %74, %76 : vector<18x24x1xi1>
    %cst_20 = arith.constant 0.000000e+00 : f32
    %78 = vector.shape_cast %77 : vector<18x24x1xi1> to vector<18x24x1xi1>
    %79 = vector.broadcast %78 : vector<18x24x1xi1> to vector<18x24x32xi1>
    %80 = vector.broadcast %cst_20 : f32 to vector<18x24x32xf32>
    %81 = arith.select %79, %64, %80 : vector<18x24x32xi1>, vector<18x24x32xf32>
    %82 = vector.shape_cast %81 : vector<18x24x32xf32> to vector<432x32xf32>
    %83 = arith.truncf %82 : vector<432x32xf32> to vector<432x32xbf16>
    %c0_21 = arith.constant 0 : index
    %c0_22 = arith.constant 0 : index
    %84 = vector.load %arg4[%c0_21, %c0_22] : memref<32x36xbf16, #tpu.memory_space<vmem>>, vector<32x36xbf16>
    %cst_23 = arith.constant dense<0.000000e+00> : vector<432x36xf32>
    %85 = tpu.matmul %83, %84, %cst_23 {dimension_numbers = #tpu.dot_dimension_numbers<[1], [0], [0], [1], [0, 0, 1, 1], [], []>} : vector<432x32xbf16>, vector<32x36xbf16>, vector<432x36xf32> -> vector<432x36xf32>
    %86 = vector.shape_cast %85 : vector<432x36xf32> to vector<18x24x36xf32>
    %87 = vector.extract_strided_slice %86 {offsets = [0, 0, 0], sizes = [16, 16, 4], strides = [1, 1, 1]} : vector<18x24x36xf32> to vector<16x16x4xf32>
    %88 = vector.extract_strided_slice %86 {offsets = [0, 1, 4], sizes = [16, 16, 4], strides = [1, 1, 1]} : vector<18x24x36xf32> to vector<16x16x4xf32>
    %89 = arith.addf %87, %88 : vector<16x16x4xf32>
    %90 = vector.extract_strided_slice %86 {offsets = [0, 2, 8], sizes = [16, 16, 4], strides = [1, 1, 1]} : vector<18x24x36xf32> to vector<16x16x4xf32>
    %91 = arith.addf %89, %90 : vector<16x16x4xf32>
    %92 = vector.extract_strided_slice %86 {offsets = [1, 0, 12], sizes = [16, 16, 4], strides = [1, 1, 1]} : vector<18x24x36xf32> to vector<16x16x4xf32>
    %93 = arith.addf %91, %92 : vector<16x16x4xf32>
    %94 = vector.extract_strided_slice %86 {offsets = [1, 1, 16], sizes = [16, 16, 4], strides = [1, 1, 1]} : vector<18x24x36xf32> to vector<16x16x4xf32>
    %95 = arith.addf %93, %94 : vector<16x16x4xf32>
    %96 = vector.extract_strided_slice %86 {offsets = [1, 2, 20], sizes = [16, 16, 4], strides = [1, 1, 1]} : vector<18x24x36xf32> to vector<16x16x4xf32>
    %97 = arith.addf %95, %96 : vector<16x16x4xf32>
    %98 = vector.extract_strided_slice %86 {offsets = [2, 0, 24], sizes = [16, 16, 4], strides = [1, 1, 1]} : vector<18x24x36xf32> to vector<16x16x4xf32>
    %99 = arith.addf %97, %98 : vector<16x16x4xf32>
    %100 = vector.extract_strided_slice %86 {offsets = [2, 1, 28], sizes = [16, 16, 4], strides = [1, 1, 1]} : vector<18x24x36xf32> to vector<16x16x4xf32>
    %101 = arith.addf %99, %100 : vector<16x16x4xf32>
    %102 = vector.extract_strided_slice %86 {offsets = [2, 2, 32], sizes = [16, 16, 4], strides = [1, 1, 1]} : vector<18x24x36xf32> to vector<16x16x4xf32>
    %103 = arith.addf %101, %102 : vector<16x16x4xf32>
    %c0_24 = arith.constant 0 : index
    %c0_25 = arith.constant 0 : index
    %104 = vector.load %arg5[%c0_24, %c0_25] : memref<1x4xf32, #tpu.memory_space<vmem>>, vector<1x4xf32>
    %105 = vector.shape_cast %104 : vector<1x4xf32> to vector<1x1x4xf32>
    %106 = vector.broadcast %105 : vector<1x1x4xf32> to vector<16x16x4xf32>
    %107 = arith.addf %103, %106 : vector<16x16x4xf32>
    %c0_26 = arith.constant 0 : index
    %c0_27 = arith.constant 0 : index
    %c0_28 = arith.constant 0 : index
    %c0_29 = arith.constant 0 : index
    %108 = vector.load %arg6[%c0_26, %c0_27, %c0_28, %c0_29] : memref<1x16x16x4xf32, #tpu.memory_space<vmem>>, vector<1x16x16x4xf32>
    %109 = vector.shape_cast %108 : vector<1x16x16x4xf32> to vector<16x16x4xf32>
    %110 = vector.shape_cast %107 : vector<16x16x4xf32> to vector<1x16x16x4xf32>
    tpu.vector_store %arg6[%c0_26, %c0_27, %c0_28, %c0_29], %110 {strides = array<i32>} : memref<1x16x16x4xf32, #tpu.memory_space<vmem>>, vector<1x16x16x4xf32>,
    return
  }
  func.func @transform_0(%arg0: i32) -> (i32, i32, i32, i32) {
    %c0_i32 = arith.constant 0 : i32
    %c0_i32_0 = arith.constant 0 : i32
    %c0_i32_1 = arith.constant 0 : i32
    %c0_i32_2 = arith.constant 0 : i32
    return %arg0, %c0_i32, %c0_i32_0, %c0_i32_1 : i32, i32, i32, i32
  }
  func.func @transform_1(%arg0: i32) -> (i32, i32) {
    %c0_i32 = arith.constant 0 : i32
    %c0_i32_0 = arith.constant 0 : i32
    %c0_i32_1 = arith.constant 0 : i32
    return %c0_i32, %c0_i32_0 : i32, i32
  }
  func.func @transform_2(%arg0: i32) -> (i32, i32) {
    %c0_i32 = arith.constant 0 : i32
    %c0_i32_0 = arith.constant 0 : i32
    %c0_i32_1 = arith.constant 0 : i32
    return %c0_i32, %c0_i32_0 : i32, i32
  }
  func.func @transform_3(%arg0: i32) -> (i32, i32) {
    %c0_i32 = arith.constant 0 : i32
    %c0_i32_0 = arith.constant 0 : i32
    %c0_i32_1 = arith.constant 0 : i32
    return %c0_i32, %c0_i32_0 : i32, i32
  }
  func.func @transform_4(%arg0: i32) -> (i32, i32) {
    %c0_i32 = arith.constant 0 : i32
    %c0_i32_0 = arith.constant 0 : i32
    %c0_i32_1 = arith.constant 0 : i32
    return %c0_i32, %c0_i32_0 : i32, i32
  }
  func.func @transform_5(%arg0: i32) -> (i32, i32, i32, i32) {
    %c0_i32 = arith.constant 0 : i32
    %c0_i32_0 = arith.constant 0 : i32
    %c0_i32_1 = arith.constant 0 : i32
    %c0_i32_2 = arith.constant 0 : i32
    return %arg0, %c0_i32, %c0_i32_0, %c0_i32_1 : i32, i32, i32, i32
  }
}

</mosaic_0001>

<llo_original>
// kernel: unet_output_layer.1
$region0: #{unet_output_layer.1}
  #allocation0 [shape = 'u32[]', space=smem, size = 0x4, offset = 0x4, fixed_abs, tag = 'smem constant byte address 0x4 - core index']
  #allocation1 [shape = 'u32[72,128]{1,0:T(1,128)}', space=vmem, size = 0x9000, scoped, tag = 'internal scratch']
  %s0 = inlined_call_operand.vmem [shape: bf16[2,18,24,32], index: 0, kind: input, shape index: {}]
  %s1 = inlined_call_operand.vmem [shape: f32[1,32], index: 1, kind: input, shape index: {}]
  %s2 = inlined_call_operand.vmem [shape: f32[1,32], index: 2, kind: input, shape index: {}]
  %s3 = inlined_call_operand.vmem [shape: bf16[32,36], index: 3, kind: input, shape index: {}]
  %s4 = inlined_call_operand.vmem [shape: f32[1,4], index: 4, kind: input, shape index: {}]
  %s5 = inlined_call_operand.vmem [shape: f32[2,16,16,4], index: 5, kind: output, shape index: {}]
  %s6 = sld [smem:[#allocation0]]
  $region53: #{unet_output_layer.1} parent=0
    _
  %s8 = ssub.s32 1, %s6
  %s9 = scalar_select 0, %s8, %s6
  loop: start=0, step=1, limit=4
  $region2: #{unet_output_layer.1} parent=0 // loop_pre_header
    _
  $region3: #{unet_output_layer.1} parent=0 // loop_header
    %s11 = sphi 0, %s15
    %p12 = scmp.ge.s32.totalorder %s11, 4
    %s21 = sphi 0, %s23
    %s24 = sphi 0, %s21
    %s25 = sphi 0, %s24
    %s41 = sphi 0, %s25
    %s45 = sphi 0, %s45
    %s47 = sphi 0, %s45
    %s48 = sphi 0, %s47
    %s62 = sphi 0, %s48
    %s66 = sphi 0, %s66
    %s68 = sphi 0, %s66
    %s69 = sphi 0, %s68
    %s83 = sphi 0, %s69
    %s87 = sphi 0, %s87
    %s89 = sphi 0, %s87
    %s90 = sphi 0, %s89
    %s104 = sphi 0, %s90
    %s108 = sphi 0, %s108
    %s110 = sphi 0, %s108
    %s111 = sphi 0, %s110
    %s125 = sphi 0, %s111
    %s131 = sphi 0, %s133
    %s134 = sphi 0, %s131
    %s135 = sphi 0, %s134
    %s151 = sphi 0, %s135
  $region4: #{unet_output_layer.1} parent=0 // loop_header_branch
    %14 = sbr.rel (%p12) target = $region8
  $region5: #{unet_output_layer.1} parent=0 // loop_body
    %s16 = ssub.s32 %s11, 1
    %s17 = ssub.s32 %s11, 2
    %s18 = sadd.s32 %s11, 1
    %s19 = ssub.s32 %s11, %s18
    %p20 = scmp.eq.s32.totalorder %s19, 0
    %s22 = sadd.s32 %s21, 1
    %s23 = scalar_select %p20, %s21, %s22
    %p26 = pneg %p20
    %p27 = scmp.eq.s32.totalorder %s11, 1
    %p28 = por %p26, %p27
    %p29 = scmp.ne.s32.totalorder %s21, %s24
    %p30 = scmp.eq.s32.totalorder %s11, 0
    %p31 = por %p29, %p30
    %p32 = scmp.ne.s32.totalorder %s21, %s24
    %p33 = scmp.eq.s32.totalorder %s16, 1
    %p34 = por %p32, %p33
    %p35 = scmp.ne.s32.totalorder %s24, %s25
    %p36 = scmp.eq.s32.totalorder %s16, 0
    %p37 = por %p35, %p36
    %p38 = scmp.ne.s32.totalorder %s24, %s25
    %p39 = scmp.eq.s32.totalorder %s17, 1
    %p40 = por %p38, %p39
    %p42 = scmp.ne.s32.totalorder %s25, %s41
    %p43 = scmp.eq.s32.totalorder %s17, 0
    %p44 = por %p42, %p43
    %s46 = sadd.s32 %s45, 1
    %p49 = scmp.eq.s32.totalorder %s11, 1
    %p50 = scmp.ne.s32.totalorder %s45, %s47
    %p51 = scmp.eq.s32.totalorder %s11, 0
    %p52 = por %p50, %p51
    %p53 = scmp.ne.s32.totalorder %s45, %s47
    %p54 = scmp.eq.s32.totalorder %s16, 1
    %p55 = por %p53, %p54
    %p56 = scmp.ne.s32.totalorder %s47, %s48
    %p57 = scmp.eq.s32.totalorder %s16, 0
    %p58 = por %p56, %p57
    %p59 = scmp.ne.s32.totalorder %s47, %s48
    %p60 = scmp.eq.s32.totalorder %s17, 1
    %p61 = por %p59, %p60
    %p63 = scmp.ne.s32.totalorder %s48, %s62
    %p64 = scmp.eq.s32.totalorder %s17, 0
    %p65 = por %p63, %p64
    %s67 = sadd.s32 %s66, 1
    %p70 = scmp.eq.s32.totalorder %s11, 1
    %p71 = scmp.ne.s32.totalorder %s66, %s68
    %p72 = scmp.eq.s32.totalorder %s11, 0
    %p73 = por %p71, %p72
    %p74 = scmp.ne.s32.totalorder %s66, %s68
    %p75 = scmp.eq.s32.totalorder %s16, 1
    %p76 = por %p74, %p75
    %p77 = scmp.ne.s32.totalorder %s68, %s69
    %p78 = scmp.eq.s32.totalorder %s16, 0
    %p79 = por %p77, %p78
    %p80 = scmp.ne.s32.totalorder %s68, %s69
    %p81 = scmp.eq.s32.totalorder %s17, 1
    %p82 = por %p80, %p81
    %p84 = scmp.ne.s32.totalorder %s69, %s83
    %p85 = scmp.eq.s32.totalorder %s17, 0
    %p86 = por %p84, %p85
    %s88 = sadd.s32 %s87, 1
    %p91 = scmp.eq.s32.totalorder %s11, 1
    %p92 = scmp.ne.s32.totalorder %s87, %s89
    %p93 = scmp.eq.s32.totalorder %s11, 0
    %p94 = por %p92, %p93
    %p95 = scmp.ne.s32.totalorder %s87, %s89
    %p96 = scmp.eq.s32.totalorder %s16, 1
    %p97 = por %p95, %p96
    %p98 = scmp.ne.s32.totalorder %s89, %s90
    %p99 = scmp.eq.s32.totalorder %s16, 0
    %p100 = por %p98, %p99
    %p101 = scmp.ne.s32.totalorder %s89, %s90
    %p102 = scmp.eq.s32.totalorder %s17, 1
    %p103 = por %p101, %p102
    %p105 = scmp.ne.s32.totalorder %s90, %s104
    %p106 = scmp.eq.s32.totalorder %s17, 0
    %p107 = por %p105, %p106
    %s109 = sadd.s32 %s108, 1
    %p112 = scmp.eq.s32.totalorder %s11, 1
    %p113 = scmp.ne.s32.totalorder %s108, %s110
    %p114 = scmp.eq.s32.totalorder %s11, 0
    %p115 = por %p113, %p114
    %p116 = scmp.ne.s32.totalorder %s108, %s110
    %p117 = scmp.eq.s32.totalorder %s16, 1
    %p118 = por %p116, %p117
    %p119 = scmp.ne.s32.totalorder %s110, %s111
    %p120 = scmp.eq.s32.totalorder %s16, 0
    %p121 = por %p119, %p120
    %p122 = scmp.ne.s32.totalorder %s110, %s111
    %p123 = scmp.eq.s32.totalorder %s17, 1
    %p124 = por %p122, %p123
    %p126 = scmp.ne.s32.totalorder %s111, %s125
    %p127 = scmp.eq.s32.totalorder %s17, 0
    %p128 = por %p126, %p127
    %s129 = ssub.s32 %s11, %s18
    %p130 = scmp.eq.s32.totalorder %s129, 0
    %s132 = sadd.s32 %s131, 1
    %s133 = scalar_select %p130, %s131, %s132
    %p136 = pneg %p130
    %p137 = scmp.eq.s32.totalorder %s11, 1
    %p138 = por %p136, %p137
    %p139 = scmp.ne.s32.totalorder %s131, %s134
    %p140 = scmp.eq.s32.totalorder %s11, 0
    %p141 = por %p139, %p140
    %p142 = scmp.ne.s32.totalorder %s131, %s134
    %p143 = scmp.eq.s32.totalorder %s16, 1
    %p144 = por %p142, %p143
    %p145 = scmp.ne.s32.totalorder %s134, %s135
    %p146 = scmp.eq.s32.totalorder %s16, 0
    %p147 = por %p145, %p146
    %p148 = scmp.ne.s32.totalorder %s134, %s135
    %p149 = scmp.eq.s32.totalorder %s17, 1
    %p150 = por %p148, %p149
    %p152 = scmp.ne.s32.totalorder %s135, %s151
    %p153 = scmp.eq.s32.totalorder %s17, 0
    %p154 = por %p152, %p153
    %p155 = scmp.le.s32.totalorder 1, %s11
    %p156 = scmp.lt.s32.totalorder %s11, 3
    %p157 = pnand %p155, %p156
    %p158 = pneg %p157
    // Predicated region
    $region9: #{unet_output_layer.1} parent=5 // pred_check
      _
    $region10: #{unet_output_layer.1} parent=5 // pred_check_branch
      %160 = sbr.rel (%p157) target = $region12
    $region11: #{unet_output_layer.1} parent=5 // pred_region
      %s161 = ssub.s32 %s11, 1
      // Predicated region
      $region13: #{unet_output_layer.1} parent=11 // pred_check
        %p162 = pneg %p58
      $region14: #{unet_output_layer.1} parent=11 // pred_check_branch
        %164 = sbr.rel (%p162) target = $region16
      $region15: #{unet_output_layer.1} parent=11 // pred_region
        _
      $region16: #{unet_output_layer.1} parent=11 // pred_fallthru
        _
      // Predicated region
      $region17: #{unet_output_layer.1} parent=11 // pred_check
        %p165 = pneg %p79
      $region18: #{unet_output_layer.1} parent=11 // pred_check_branch
        %167 = sbr.rel (%p165) target = $region20
      $region19: #{unet_output_layer.1} parent=11 // pred_region
        _
      $region20: #{unet_output_layer.1} parent=11 // pred_fallthru
        _
      // Predicated region
      $region21: #{unet_output_layer.1} parent=11 // pred_check
        %p168 = pneg %p100
      $region22: #{unet_output_layer.1} parent=11 // pred_check_branch
        %170 = sbr.rel (%p168) target = $region24
      $region23: #{unet_output_layer.1} parent=11 // pred_region
        _
      $region24: #{unet_output_layer.1} parent=11 // pred_fallthru
        _
      // Predicated region
      $region25: #{unet_output_layer.1} parent=11 // pred_check
        %p171 = pneg %p121
      $region26: #{unet_output_layer.1} parent=11 // pred_check_branch
        %173 = sbr.rel (%p171) target = $region28
      $region27: #{unet_output_layer.1} parent=11 // pred_region
        _
      $region28: #{unet_output_layer.1} parent=11 // pred_fallthru
        _
    $region12: #{unet_output_layer.1} parent=5 // pred_fallthru
      _
    %p174 = scmp.lt.s32.totalorder %s11, 2
    // Predicated region
    $region29: #{unet_output_layer.1} parent=5 // pred_check
      %p175 = pneg %p174
    $region30: #{unet_output_layer.1} parent=5 // pred_check_branch
      %177 = sbr.rel (%p175) target = $region32
    $region31: #{unet_output_layer.1} parent=5 // pred_region
      // Predicated region
      $region33: #{unet_output_layer.1} parent=31 // pred_check
        %p178 = pneg %p31
      $region34: #{unet_output_layer.1} parent=31 // pred_check_branch
        %180 = sbr.rel (%p178) target = $region36
      $region35: #{unet_output_layer.1} parent=31 // pred_region
        %p181 = scmp.lt.s32.totalorder %s11, 1
        %s182 = scalar_select %p181, %s11, 1
        %s183 = smul.addr %s182, 54
        %s184 = smul.addr %s183, 4
        %s185 = scalar_lea.vmem %s0, %s184
      $region36: #{unet_output_layer.1} parent=31 // pred_fallthru
        _
    $region32: #{unet_output_layer.1} parent=5 // pred_fallthru
      _
    %p186 = scmp.le.s32.totalorder 1, %s11
    %p187 = scmp.lt.s32.totalorder %s11, 3
    %p188 = pnand %p186, %p187
    %p189 = pneg %p188
    // Predicated region
    $region37: #{unet_output_layer.1} parent=5 // pred_check
      _
    $region38: #{unet_output_layer.1} parent=5 // pred_check_branch
      %191 = sbr.rel (%p188) target = $region40
    $region39: #{unet_output_layer.1} parent=5 // pred_region
      %s192 = ssub.s32 %s11, 1
      %p193 = scmp.lt.s32.totalorder %s16, 1
      %s194 = scalar_select %p193, %s16, 1
      %s195 = smul.addr %s194, 54
      %s196 = smul.addr %s195, 4
      %s197 = scalar_lea.vmem %s0, %s196
      %p198 = pneg %p37
      %p199 = pneg %p34
      %p200 = pneg %p58
      %p201 = pneg %p55
      %p202 = pneg %p79
      %p203 = pneg %p76
      %p204 = pneg %p100
      %p205 = pneg %p97
      %p206 = pneg %p121
      %p207 = pneg %p118
      %p208 = pneg %p147
      %p209 = pneg %p144
      %p210 = scmp.lt.s32.totalorder %s16, 1
      %s211 = scalar_select %p210, %s16, 1
      %s212 = smul.addr %s211, 32
      %s213 = smul.addr %s212, 8
      %s214 = scalar_lea.vmem %s5, %s213
      %p215 = scmp.lt.s32.totalorder %s16, 1
      %s216 = scalar_select %p215, %s16, 1
      %s217 = smul.addr %s216, 54
      %s218 = smul.addr %s217, 4
      %s219 = scalar_lea.vmem %s0, %s218
      %p220 = scmp.lt.s32.totalorder %s16, 1
      %s221 = scalar_select %p220, %s16, 1
      %s222 = smul.addr %s221, 32
      %s223 = smul.addr %s222, 8
      %s224 = scalar_lea.vmem %s5, %s223
      %v226 = vld [vmem:[%s219] sm:$0xf]
      %v227 = vld [vmem:[%s219 + $0x4] sm:$0xf]
      %v228 = vld [vmem:[%s219 + $0x8] sm:$0xf]
      %v229 = vld [vmem:[%s219 + $0xc] sm:$0xf]
      %v230 = vld [vmem:[%s219 + $0x10] sm:$0xf]
      %v231 = vld [vmem:[%s219 + $0x14] sm:$0xf]
      %v232 = vld [vmem:[%s219 + $0x18] sm:$0xf]
      %v233 = vld [vmem:[%s219 + $0x1c] sm:$0xf]
      %v234 = vld [vmem:[%s219 + $0x20] sm:$0xf]
      %v235 = vld [vmem:[%s219 + $0x24] sm:$0xf]
      %v236 = vld [vmem:[%s219 + $0x28] sm:$0xf]
      %v237 = vld [vmem:[%s219 + $0x2c] sm:$0xf]
      %v238 = vld [vmem:[%s219 + $0x30] sm:$0xf]
      %v239 = vld [vmem:[%s219 + $0x34] sm:$0xf]
      %v240 = vld [vmem:[%s219 + $0x38] sm:$0xf]
      %v241 = vld [vmem:[%s219 + $0x3c] sm:$0xf]
      %v242 = vld [vmem:[%s219 + $0x40] sm:$0xf]
      %v243 = vld [vmem:[%s219 + $0x44] sm:$0xf]
      %v244 = vld [vmem:[%s219 + $0x48] sm:$0xf]
      %v245 = vld [vmem:[%s219 + $0x4c] sm:$0xf]
      %v246 = vld [vmem:[%s219 + $0x50] sm:$0xf]
      %v247 = vld [vmem:[%s219 + $0x54] sm:$0xf]
      %v248 = vld [vmem:[%s219 + $0x58] sm:$0xf]
      %v249 = vld [vmem:[%s219 + $0x5c] sm:$0xf]
      %v250 = vld [vmem:[%s219 + $0x60] sm:$0xf]
      %v251 = vld [vmem:[%s219 + $0x64] sm:$0xf]
      %v252 = vld [vmem:[%s219 + $0x68] sm:$0xf]
      %v253 = vld [vmem:[%s219 + $0x6c] sm:$0xf]
      %v254 = vld [vmem:[%s219 + $0x70] sm:$0xf]
      %v255 = vld [vmem:[%s219 + $0x74] sm:$0xf]
      %v256 = vld [vmem:[%s219 + $0x78] sm:$0xf]
      %v257 = vld [vmem:[%s219 + $0x7c] sm:$0xf]
      %v258 = vld [vmem:[%s219 + $0x80] sm:$0xf]
      %v259 = vld [vmem:[%s219 + $0x84] sm:$0xf]
      %v260 = vld [vmem:[%s219 + $0x88] sm:$0xf]
      %v261 = vld [vmem:[%s219 + $0x8c] sm:$0xf]
      %v262 = vld [vmem:[%s219 + $0x90] sm:$0xf]
      %v263 = vld [vmem:[%s219 + $0x94] sm:$0xf]
      %v264 = vld [vmem:[%s219 + $0x98] sm:$0xf]
      %v265 = vld [vmem:[%s219 + $0x9c] sm:$0xf]
      %v266 = vld [vmem:[%s219 + $0xa0] sm:$0xf]
      %v267 = vld [vmem:[%s219 + $0xa4] sm:$0xf]
      %v268 = vld [vmem:[%s219 + $0xa8] sm:$0xf]
      %v269 = vld [vmem:[%s219 + $0xac] sm:$0xf]
      %v270 = vld [vmem:[%s219 + $0xb0] sm:$0xf]
      %v271 = vld [vmem:[%s219 + $0xb4] sm:$0xf]
      %v272 = vld [vmem:[%s219 + $0xb8] sm:$0xf]
      %v273 = vld [vmem:[%s219 + $0xbc] sm:$0xf]
      %v274 = vld [vmem:[%s219 + $0xc0] sm:$0xf]
      %v275 = vld [vmem:[%s219 + $0xc4] sm:$0xf]
      %v276 = vld [vmem:[%s219 + $0xc8] sm:$0xf]
      %v277 = vld [vmem:[%s219 + $0xcc] sm:$0xf]
      %v278 = vld [vmem:[%s219 + $0xd0] sm:$0xf]
      %v279 = vld [vmem:[%s219 + $0xd4] sm:$0xf]
      %v280 = vunpack.c.l.bf16 %v226
      %v281 = vunpack.c.l.bf16 %v227
      %v282 = vunpack.c.l.bf16 %v228
      %v283 = vunpack.c.l.bf16 %v229
      %v284 = vunpack.c.l.bf16 %v230
      %v285 = vunpack.c.l.bf16 %v231
      %v286 = vunpack.c.l.bf16 %v232
      %v287 = vunpack.c.l.bf16 %v233
      %v288 = vunpack.c.l.bf16 %v234
      %v289 = vunpack.c.l.bf16 %v235
      %v290 = vunpack.c.l.bf16 %v236
      %v291 = vunpack.c.l.bf16 %v237
      %v292 = vunpack.c.l.bf16 %v238
      %v293 = vunpack.c.l.bf16 %v239
      %v294 = vunpack.c.l.bf16 %v240
      %v295 = vunpack.c.l.bf16 %v241
      %v296 = vunpack.c.l.bf16 %v242
      %v297 = vunpack.c.l.bf16 %v243
      %v298 = vunpack.c.l.bf16 %v244
      %v299 = vunpack.c.l.bf16 %v245
      %v300 = vunpack.c.l.bf16 %v246
      %v301 = vunpack.c.l.bf16 %v247
      %v302 = vunpack.c.l.bf16 %v248
      %v303 = vunpack.c.l.bf16 %v249
      %v304 = vunpack.c.l.bf16 %v250
      %v305 = vunpack.c.l.bf16 %v251
      %v306 = vunpack.c.l.bf16 %v252
      %v307 = vunpack.c.l.bf16 %v253
      %v308 = vunpack.c.l.bf16 %v254
      %v309 = vunpack.c.l.bf16 %v255
      %v310 = vunpack.c.l.bf16 %v256
      %v311 = vunpack.c.l.bf16 %v257
      %v312 = vunpack.c.l.bf16 %v258
      %v313 = vunpack.c.l.bf16 %v259
      %v314 = vunpack.c.l.bf16 %v260
      %v315 = vunpack.c.l.bf16 %v261
      %v316 = vunpack.c.l.bf16 %v262
      %v317 = vunpack.c.l.bf16 %v263
      %v318 = vunpack.c.l.bf16 %v264
      %v319 = vunpack.c.l.bf16 %v265
      %v320 = vunpack.c.l.bf16 %v266
      %v321 = vunpack.c.l.bf16 %v267
      %v322 = vunpack.c.l.bf16 %v268
      %v323 = vunpack.c.l.bf16 %v269
      %v324 = vunpack.c.l.bf16 %v270
      %v325 = vunpack.c.l.bf16 %v271
      %v326 = vunpack.c.l.bf16 %v272
      %v327 = vunpack.c.l.bf16 %v273
      %v328 = vunpack.c.l.bf16 %v274
      %v329 = vunpack.c.l.bf16 %v275
      %v330 = vunpack.c.l.bf16 %v276
      %v331 = vunpack.c.l.bf16 %v277
      %v332 = vunpack.c.l.bf16 %v278
      %v333 = vunpack.c.l.bf16 %v279
      %vm334 = vcmask 261120
      %v335 = vsel %vm334, %v280, 0.0
      %v336 = vsel %vm334, %v281, 0.0
      %v337 = vadd.f32 %v335, %v336
      %v338 = vsel %vm334, %v282, 0.0
      %v339 = vadd.f32 %v337, %v338
      %v340 = vsel %vm334, %v283, 0.0
      %v341 = vadd.f32 %v339, %v340
      %v342 = vsel %vm334, %v284, 0.0
      %v343 = vadd.f32 %v341, %v342
      %v344 = vsel %vm334, %v285, 0.0
      %v345 = vadd.f32 %v343, %v344
      %v346 = vsel %vm334, %v286, 0.0
      %v347 = vadd.f32 %v345, %v346
      %v348 = vsel %vm334, %v287, 0.0
      %v349 = vadd.f32 %v347, %v348
      %v350 = vsel %vm334, %v288, 0.0
      %v351 = vadd.f32 %v349, %v350
      %v352 = vsel %vm334, %v289, 0.0
      %v353 = vadd.f32 %v351, %v352
      %v354 = vsel %vm334, %v290, 0.0
      %v355 = vadd.f32 %v353, %v354
      %v356 = vsel %vm334, %v291, 0.0
      %v357 = vadd.f32 %v355, %v356
      %v358 = vsel %vm334, %v292, 0.0
      %v359 = vadd.f32 %v357, %v358
      %v360 = vsel %vm334, %v293, 0.0
      %v361 = vadd.f32 %v359, %v360
      %v362 = vsel %vm334, %v294, 0.0
      %v363 = vadd.f32 %v361, %v362
      %v364 = vsel %vm334, %v295, 0.0
      %v365 = vadd.f32 %v363, %v364
      %v366 = vsel %vm334, %v296, 0.0
      %v367 = vadd.f32 %v365, %v366
      %v368 = vsel %vm334, %v297, 0.0
      %v369 = vadd.f32 %v367, %v368
      %v370 = vsel %vm334, %v298, 0.0
      %v371 = vadd.f32 %v369, %v370
      %v372 = vsel %vm334, %v299, 0.0
      %v373 = vadd.f32 %v371, %v372
      %v374 = vsel %vm334, %v300, 0.0
      %v375 = vadd.f32 %v373, %v374
      %v376 = vsel %vm334, %v301, 0.0
      %v377 = vadd.f32 %v375, %v376
      %v378 = vsel %vm334, %v302, 0.0
      %v379 = vadd.f32 %v377, %v378
      %v380 = vsel %vm334, %v303, 0.0
      %v381 = vadd.f32 %v379, %v380
      %v382 = vsel %vm334, %v304, 0.0
      %v383 = vadd.f32 %v381, %v382
      %v384 = vsel %vm334, %v305, 0.0
      %v385 = vadd.f32 %v383, %v384
      %v386 = vsel %vm334, %v306, 0.0
      %v387 = vadd.f32 %v385, %v386
      %v388 = vsel %vm334, %v307, 0.0
      %v389 = vadd.f32 %v387, %v388
      %v390 = vsel %vm334, %v308, 0.0
      %v391 = vadd.f32 %v389, %v390
      %v392 = vsel %vm334, %v309, 0.0
      %v393 = vadd.f32 %v391, %v392
      %v394 = vsel %vm334, %v310, 0.0
      %v395 = vadd.f32 %v393, %v394
      %v396 = vsel %vm334, %v311, 0.0
      %v397 = vadd.f32 %v395, %v396
      %v398 = vsel %vm334, %v312, 0.0
      %v399 = vadd.f32 %v397, %v398
      %v400 = vsel %vm334, %v313, 0.0
      %v401 = vadd.f32 %v399, %v400
      %v402 = vsel %vm334, %v314, 0.0
      %v403 = vadd.f32 %v401, %v402
      %v404 = vsel %vm334, %v315, 0.0
      %v405 = vadd.f32 %v403, %v404
      %v406 = vsel %vm334, %v316, 0.0
      %v407 = vadd.f32 %v405, %v406
      %v408 = vsel %vm334, %v317, 0.0
      %v409 = vadd.f32 %v407, %v408
      %v410 = vsel %vm334, %v318, 0.0
      %v411 = vadd.f32 %v409, %v410
      %v412 = vsel %vm334, %v319, 0.0
      %v413 = vadd.f32 %v411, %v412
      %v414 = vsel %vm334, %v320, 0.0
      %v415 = vadd.f32 %v413, %v414
      %v416 = vsel %vm334, %v321, 0.0
      %v417 = vadd.f32 %v415, %v416
      %v418 = vsel %vm334, %v322, 0.0
      %v419 = vadd.f32 %v417, %v418
      %v420 = vsel %vm334, %v323, 0.0
      %v421 = vadd.f32 %v419, %v420
      %v422 = vsel %vm334, %v324, 0.0
      %v423 = vadd.f32 %v421, %v422
      %v424 = vsel %vm334, %v325, 0.0
      %v425 = vadd.f32 %v423, %v424
      %v426 = vsel %vm334, %v326, 0.0
      %v427 = vadd.f32 %v425, %v426
      %v428 = vsel %vm334, %v327, 0.0
      %v429 = vadd.f32 %v427, %v428
      %v430 = vsel %vm334, %v328, 0.0
      %v431 = vadd.f32 %v429, %v430
      %v432 = vsel %vm334, %v329, 0.0
      %v433 = vadd.f32 %v431, %v432
      %v434 = vsel %vm334, %v330, 0.0
      %v435 = vadd.f32 %v433, %v434
      %v436 = vsel %vm334, %v331, 0.0
      %v437 = vadd.f32 %v435, %v436
      %v438 = vsel %vm334, %v332, 0.0
      %v439 = vadd.f32 %v437, %v438
      %v440 = vsel %vm334, %v333, 0.0
      %v441 = vadd.f32 %v439, %v440
      %v442 = vrot.slane %v441, 4
      %v443 = vadd.f32 %v441, %v442
      %v444 = vrot.slane %v443, 2
      %v445 = vadd.f32 %v443, %v444
      %v446 = vrot.slane %v445, 1
      %v447 = vadd.f32 %v445, %v446
      %v448 = vmul.f32 %v280, %v280
      %v449 = vmul.f32 %v281, %v281
      %v450 = vmul.f32 %v282, %v282
      %v451 = vmul.f32 %v283, %v283
      %v452 = vmul.f32 %v284, %v284
      %v453 = vmul.f32 %v285, %v285
      %v454 = vmul.f32 %v286, %v286
      %v455 = vmul.f32 %v287, %v287
      %v456 = vmul.f32 %v288, %v288
      %v457 = vmul.f32 %v289, %v289
      %v458 = vmul.f32 %v290, %v290
      %v459 = vmul.f32 %v291, %v291
      %v460 = vmul.f32 %v292, %v292
      %v461 = vmul.f32 %v293, %v293
      %v462 = vmul.f32 %v294, %v294
      %v463 = vmul.f32 %v295, %v295
      %v464 = vmul.f32 %v296, %v296
      %v465 = vmul.f32 %v297, %v297
      %v466 = vmul.f32 %v298, %v298
      %v467 = vmul.f32 %v299, %v299
      %v468 = vmul.f32 %v300, %v300
      %v469 = vmul.f32 %v301, %v301
      %v470 = vmul.f32 %v302, %v302
      %v471 = vmul.f32 %v303, %v303
      %v472 = vmul.f32 %v304, %v304
      %v473 = vmul.f32 %v305, %v305
      %v474 = vmul.f32 %v306, %v306
      %v475 = vmul.f32 %v307, %v307
      %v476 = vmul.f32 %v308, %v308
      %v477 = vmul.f32 %v309, %v309
      %v478 = vmul.f32 %v310, %v310
      %v479 = vmul.f32 %v311, %v311
      %v480 = vmul.f32 %v312, %v312
      %v481 = vmul.f32 %v313, %v313
      %v482 = vmul.f32 %v314, %v314
      %v483 = vmul.f32 %v315, %v315
      %v484 = vmul.f32 %v316, %v316
      %v485 = vmul.f32 %v317, %v317
      %v486 = vmul.f32 %v318, %v318
      %v487 = vmul.f32 %v319, %v319
      %v488 = vmul.f32 %v320, %v320
      %v489 = vmul.f32 %v321, %v321
      %v490 = vmul.f32 %v322, %v322
      %v491 = vmul.f32 %v323, %v323
      %v492 = vmul.f32 %v324, %v324
      %v493 = vmul.f32 %v325, %v325
      %v494 = vmul.f32 %v326, %v326
      %v495 = vmul.f32 %v327, %v327
      %v496 = vmul.f32 %v328, %v328
      %v497 = vmul.f32 %v329, %v329
      %v498 = vmul.f32 %v330, %v330
      %v499 = vmul.f32 %v331, %v331
      %v500 = vmul.f32 %v332, %v332
      %v501 = vmul.f32 %v333, %v333
      %v502 = vsel %vm334, %v448, 0.0
      %v503 = vsel %vm334, %v449, 0.0
      %v504 = vadd.f32 %v502, %v503
      %v505 = vsel %vm334, %v450, 0.0
      %v506 = vadd.f32 %v504, %v505
      %v507 = vsel %vm334, %v451, 0.0
      %v508 = vadd.f32 %v506, %v507
      %v509 = vsel %vm334, %v452, 0.0
      %v510 = vadd.f32 %v508, %v509
      %v511 = vsel %vm334, %v453, 0.0
      %v512 = vadd.f32 %v510, %v511
      %v513 = vsel %vm334, %v454, 0.0
      %v514 = vadd.f32 %v512, %v513
      %v515 = vsel %vm334, %v455, 0.0
      %v516 = vadd.f32 %v514, %v515
      %v517 = vsel %vm334, %v456, 0.0
      %v518 = vadd.f32 %v516, %v517
      %v519 = vsel %vm334, %v457, 0.0
      %v520 = vadd.f32 %v518, %v519
      %v521 = vsel %vm334, %v458, 0.0
      %v522 = vadd.f32 %v520, %v521
      %v523 = vsel %vm334, %v459, 0.0
      %v524 = vadd.f32 %v522, %v523
      %v525 = vsel %vm334, %v460, 0.0
      %v526 = vadd.f32 %v524, %v525
      %v527 = vsel %vm334, %v461, 0.0
      %v528 = vadd.f32 %v526, %v527
      %v529 = vsel %vm334, %v462, 0.0
      %v530 = vadd.f32 %v528, %v529
      %v531 = vsel %vm334, %v463, 0.0
      %v532 = vadd.f32 %v530, %v531
      %v533 = vsel %vm334, %v464, 0.0
      %v534 = vadd.f32 %v532, %v533
      %v535 = vsel %vm334, %v465, 0.0
      %v536 = vadd.f32 %v534, %v535
      %v537 = vsel %vm334, %v466, 0.0
      %v538 = vadd.f32 %v536, %v537
      %v539 = vsel %vm334, %v467, 0.0
      %v540 = vadd.f32 %v538, %v539
      %v541 = vsel %vm334, %v468, 0.0
      %v542 = vadd.f32 %v540, %v541
      %v543 = vsel %vm334, %v469, 0.0
      %v544 = vadd.f32 %v542, %v543
      %v545 = vsel %vm334, %v470, 0.0
      %v546 = vadd.f32 %v544, %v545
      %v547 = vsel %vm334, %v471, 0.0
      %v548 = vadd.f32 %v546, %v547
      %v549 = vsel %vm334, %v472, 0.0
      %v550 = vadd.f32 %v548, %v549
      %v551 = vsel %vm334, %v473, 0.0
      %v552 = vadd.f32 %v550, %v551
      %v553 = vsel %vm334, %v474, 0.0
      %v554 = vadd.f32 %v552, %v553
      %v555 = vsel %vm334, %v475, 0.0
      %v556 = vadd.f32 %v554, %v555
      %v557 = vsel %vm334, %v476, 0.0
      %v558 = vadd.f32 %v556, %v557
      %v559 = vsel %vm334, %v477, 0.0
      %v560 = vadd.f32 %v558, %v559
      %v561 = vsel %vm334, %v478, 0.0
      %v562 = vadd.f32 %v560, %v561
      %v563 = vsel %vm334, %v479, 0.0
      %v564 = vadd.f32 %v562, %v563
      %v565 = vsel %vm334, %v480, 0.0
      %v566 = vadd.f32 %v564, %v565
      %v567 = vsel %vm334, %v481, 0.0
      %v568 = vadd.f32 %v566, %v567
      %v569 = vsel %vm334, %v482, 0.0
      %v570 = vadd.f32 %v568, %v569
      %v571 = vsel %vm334, %v483, 0.0
      %v572 = vadd.f32 %v570, %v571
      %v573 = vsel %vm334, %v484, 0.0
      %v574 = vadd.f32 %v572, %v573
      %v575 = vsel %vm334, %v485, 0.0
      %v576 = vadd.f32 %v574, %v575
      %v577 = vsel %vm334, %v486, 0.0
      %v578 = vadd.f32 %v576, %v577
      %v579 = vsel %vm334, %v487, 0.0
      %v580 = vadd.f32 %v578, %v579
      %v581 = vsel %vm334, %v488, 0.0
      %v582 = vadd.f32 %v580, %v581
      %v583 = vsel %vm334, %v489, 0.0
      %v584 = vadd.f32 %v582, %v583
      %v585 = vsel %vm334, %v490, 0.0
      %v586 = vadd.f32 %v584, %v585
      %v587 = vsel %vm334, %v491, 0.0
      %v588 = vadd.f32 %v586, %v587
      %v589 = vsel %vm334, %v492, 0.0
      %v590 = vadd.f32 %v588, %v589
      %v591 = vsel %vm334, %v493, 0.0
      %v592 = vadd.f32 %v590, %v591
      %v593 = vsel %vm334, %v494, 0.0
      %v594 = vadd.f32 %v592, %v593
      %v595 = vsel %vm334, %v495, 0.0
      %v596 = vadd.f32 %v594, %v595
      %v597 = vsel %vm334, %v496, 0.0
      %v598 = vadd.f32 %v596, %v597
      %v599 = vsel %vm334, %v497, 0.0
      %v600 = vadd.f32 %v598, %v599
      %v601 = vsel %vm334, %v498, 0.0
      %v602 = vadd.f32 %v600, %v601
      %v603 = vsel %vm334, %v499, 0.0
      %v604 = vadd.f32 %v602, %v603
      %v605 = vsel %vm334, %v500, 0.0
      %v606 = vadd.f32 %v604, %v605
      %v607 = vsel %vm334, %v501, 0.0
      %v608 = vadd.f32 %v606, %v607
      %v609 = vrot.slane %v608, 4
      %v610 = vadd.f32 %v608, %v609
      %v611 = vrot.slane %v610, 2
      %v612 = vadd.f32 %v610, %v611
      %v613 = vrot.slane %v612, 1
      %v614 = vadd.f32 %v612, %v613
      %v615 = vlaneseq
      %v616 = vshrl.u32 %v615, 7
      %v617 = vlaneseq
      %v618 = vand.u32 %v617, 127
      %v619 = vmul.u32 %v616, 4
      %vm620 = vcmp.ge.s32.totalorder %v618, %v619
      %v621 = vadd.s32 %v616, 1
      %v622 = vmul.u32 %v621, 4
      %vm623 = vcmp.lt.s32.totalorder %v618, %v622
      %vm624 = vmand %vm620, %vm623
      %v625 = vsel %vm624, 1, 0
      %v626 = vcvt.s32.f32 %v625
      %v627 = vmul.f32 %v626, %v447
      %v628 = vsel %vm334, %v627, 0.0
      %629 = vadd.xlane.f32.xlu0 %v628
      %v630 = vpop.xlane.xlu0 %629
      %v631 = vmul.f32 %v630, 0.0009765625
      %v632 = vmul.f32 %v626, %v614
      %v633 = vsel %vm334, %v632, 0.0
      %634 = vadd.xlane.f32.xlu0 %v633
      %v635 = vpop.xlane.xlu0 %634
      %v636 = vmul.f32 %v635, 0.0009765625
      %v637 = vmul.f32 %v631, %v631
      %v638 = vsub.f32 %v636, %v637
      %v639 = vadd.f32 %v638, 1e-05
      %v640 = vrsqrt.pop %v639
      %v641 = vmul.f32 %v640, %v639
      %v642 = vmul.f32 %v641, %v640
      %v643 = vmul.f32 0.5, %v642
      %v644 = vsub.f32 1.5, %v643
      %v645 = vmul.f32 %v640, %v644
      %vm646 = vweird.f32 %v639
      %vm647 = vweird.f32 %v640
      %vm648 = vmor %vm646, %vm647
      %v649 = vsel %vm648, %v640, %v645
      %v650 = vmul.f32 %v626, %v631
      %v651 = vsel %vm334, %v650, 0.0
      %v652 = vrot.slane %v651, 4
      %v653 = vadd.f32 %v651, %v652
      %v654 = vrot.slane %v653, 2
      %v655 = vadd.f32 %v653, %v654
      %v656 = vrot.slane %v655, 1
      %v657 = vadd.f32 %v655, %v656
      %v658 = vmul.f32 %v626, %v649
      %v659 = vsel %vm334, %v658, 0.0
      %v660 = vrot.slane %v659, 4
      %v661 = vadd.f32 %v659, %v660
      %v662 = vrot.slane %v661, 2
      %v663 = vadd.f32 %v661, %v662
      %v664 = vrot.slane %v663, 1
      %v665 = vadd.f32 %v663, %v664
      %v666 = vld [vmem:[%s1] sm:$0x1]
      %v667 = vmul.f32 %v665, %v666
      %v668 = vld [vmem:[%s2] sm:$0x1]
      %v669 = vmul.f32 %v657, %v667
      %v670 = vsub.f32 %v668, %v669
      %v671 = vperm.slane %v667, 0
      %v672 = vmul.f32 %v280, %v671
      %v673 = vmul.f32 %v281, %v671
      %v674 = vmul.f32 %v282, %v671
      %v675 = vmul.f32 %v283, %v671
      %v676 = vmul.f32 %v284, %v671
      %v677 = vmul.f32 %v285, %v671
      %v678 = vmul.f32 %v286, %v671
      %v679 = vmul.f32 %v287, %v671
      %v680 = vmul.f32 %v288, %v671
      %v681 = vmul.f32 %v289, %v671
      %v682 = vmul.f32 %v290, %v671
      %v683 = vmul.f32 %v291, %v671
      %v684 = vmul.f32 %v292, %v671
      %v685 = vmul.f32 %v293, %v671
      %v686 = vmul.f32 %v294, %v671
      %v687 = vmul.f32 %v295, %v671
      %v688 = vmul.f32 %v296, %v671
      %v689 = vmul.f32 %v297, %v671
      %v690 = vmul.f32 %v298, %v671
      %v691 = vmul.f32 %v299, %v671
      %v692 = vmul.f32 %v300, %v671
      %v693 = vmul.f32 %v301, %v671
      %v694 = vmul.f32 %v302, %v671
      %v695 = vmul.f32 %v303, %v671
      %v696 = vmul.f32 %v304, %v671
      %v697 = vmul.f32 %v305, %v671
      %v698 = vmul.f32 %v306, %v671
      %v699 = vmul.f32 %v307, %v671
      %v700 = vmul.f32 %v308, %v671
      %v701 = vmul.f32 %v309, %v671
      %v702 = vmul.f32 %v310, %v671
      %v703 = vmul.f32 %v311, %v671
      %v704 = vmul.f32 %v312, %v671
      %v705 = vmul.f32 %v313, %v671
      %v706 = vmul.f32 %v314, %v671
      %v707 = vmul.f32 %v315, %v671
      %v708 = vmul.f32 %v316, %v671
      %v709 = vmul.f32 %v317, %v671
      %v710 = vmul.f32 %v318, %v671
      %v711 = vmul.f32 %v319, %v671
      %v712 = vmul.f32 %v320, %v671
      %v713 = vmul.f32 %v321, %v671
      %v714 = vmul.f32 %v322, %v671
      %v715 = vmul.f32 %v323, %v671
      %v716 = vmul.f32 %v324, %v671
      %v717 = vmul.f32 %v325, %v671
      %v718 = vmul.f32 %v326, %v671
      %v719 = vmul.f32 %v327, %v671
      %v720 = vmul.f32 %v328, %v671
      %v721 = vmul.f32 %v329, %v671
      %v722 = vmul.f32 %v330, %v671
      %v723 = vmul.f32 %v331, %v671
      %v724 = vmul.f32 %v332, %v671
      %v725 = vmul.f32 %v333, %v671
      %v727 = vperm.slane %v670, 0
      %v729 = vadd.f32 %v672, %v727
      %v730 = vadd.f32 %v673, %v727
      %v731 = vadd.f32 %v674, %v727
      %v732 = vadd.f32 %v675, %v727
      %v733 = vadd.f32 %v676, %v727
      %v734 = vadd.f32 %v677, %v727
      %v735 = vadd.f32 %v678, %v727
      %v736 = vadd.f32 %v679, %v727
      %v737 = vadd.f32 %v680, %v727
      %v738 = vadd.f32 %v681, %v727
      %v739 = vadd.f32 %v682, %v727
      %v740 = vadd.f32 %v683, %v727
      %v741 = vadd.f32 %v684, %v727
      %v742 = vadd.f32 %v685, %v727
      %v743 = vadd.f32 %v686, %v727
      %v744 = vadd.f32 %v687, %v727
      %v745 = vadd.f32 %v688, %v727
      %v746 = vadd.f32 %v689, %v727
      %v747 = vadd.f32 %v690, %v727
      %v748 = vadd.f32 %v691, %v727
      %v749 = vadd.f32 %v692, %v727
      %v750 = vadd.f32 %v693, %v727
      %v751 = vadd.f32 %v694, %v727
      %v752 = vadd.f32 %v695, %v727
      %v753 = vadd.f32 %v696, %v727
      %v754 = vadd.f32 %v697, %v727
      %v755 = vadd.f32 %v698, %v727
      %v756 = vadd.f32 %v699, %v727
      %v757 = vadd.f32 %v700, %v727
      %v758 = vadd.f32 %v701, %v727
      %v759 = vadd.f32 %v702, %v727
      %v760 = vadd.f32 %v703, %v727
      %v761 = vadd.f32 %v704, %v727
      %v762 = vadd.f32 %v705, %v727
      %v763 = vadd.f32 %v706, %v727
      %v764 = vadd.f32 %v707, %v727
      %v765 = vadd.f32 %v708, %v727
      %v766 = vadd.f32 %v709, %v727
      %v767 = vadd.f32 %v710, %v727
      %v768 = vadd.f32 %v711, %v727
      %v769 = vadd.f32 %v712, %v727
      %v770 = vadd.f32 %v713, %v727
      %v771 = vadd.f32 %v714, %v727
      %v772 = vadd.f32 %v715, %v727
      %v773 = vadd.f32 %v716, %v727
      %v774 = vadd.f32 %v717, %v727
      %v775 = vadd.f32 %v718, %v727
      %v776 = vadd.f32 %v719, %v727
      %v777 = vadd.f32 %v720, %v727
      %v778 = vadd.f32 %v721, %v727
      %v779 = vadd.f32 %v722, %v727
      %v780 = vadd.f32 %v723, %v727
      %v781 = vadd.f32 %v724, %v727
      %v782 = vadd.f32 %v725, %v727
      %v783 = vxor.u32 %v729, 2147483648
      %v784 = vxor.u32 %v730, 2147483648
      %v785 = vxor.u32 %v731, 2147483648
      %v786 = vxor.u32 %v732, 2147483648
      %v787 = vxor.u32 %v733, 2147483648
      %v788 = vxor.u32 %v734, 2147483648
      %v789 = vxor.u32 %v735, 2147483648
      %v790 = vxor.u32 %v736, 2147483648
      %v791 = vxor.u32 %v737, 2147483648
      %v792 = vxor.u32 %v738, 2147483648
      %v793 = vxor.u32 %v739, 2147483648
      %v794 = vxor.u32 %v740, 2147483648
      %v795 = vxor.u32 %v741, 2147483648
      %v796 = vxor.u32 %v742, 2147483648
      %v797 = vxor.u32 %v743, 2147483648
      %v798 = vxor.u32 %v744, 2147483648
      %v799 = vxor.u32 %v745, 2147483648
      %v800 = vxor.u32 %v746, 2147483648
      %v801 = vxor.u32 %v747, 2147483648
      %v802 = vxor.u32 %v748, 2147483648
      %v803 = vxor.u32 %v749, 2147483648
      %v804 = vxor.u32 %v750, 2147483648
      %v805 = vxor.u32 %v751, 2147483648
      %v806 = vxor.u32 %v752, 2147483648
      %v807 = vxor.u32 %v753, 2147483648
      %v808 = vxor.u32 %v754, 2147483648
      %v809 = vxor.u32 %v755, 2147483648
      %v810 = vxor.u32 %v756, 2147483648
      %v811 = vxor.u32 %v757, 2147483648
      %v812 = vxor.u32 %v758, 2147483648
      %v813 = vxor.u32 %v759, 2147483648
      %v814 = vxor.u32 %v760, 2147483648
      %v815 = vxor.u32 %v761, 2147483648
      %v816 = vxor.u32 %v762, 2147483648
      %v817 = vxor.u32 %v763, 2147483648
      %v818 = vxor.u32 %v764, 2147483648
      %v819 = vxor.u32 %v765, 2147483648
      %v820 = vxor.u32 %v766, 2147483648
      %v821 = vxor.u32 %v767, 2147483648
      %v822 = vxor.u32 %v768, 2147483648
      %v823 = vxor.u32 %v769, 2147483648
      %v824 = vxor.u32 %v770, 2147483648
      %v825 = vxor.u32 %v771, 2147483648
      %v826 = vxor.u32 %v772, 2147483648
      %v827 = vxor.u32 %v773, 2147483648
      %v828 = vxor.u32 %v774, 2147483648
      %v829 = vxor.u32 %v775, 2147483648
      %v830 = vxor.u32 %v776, 2147483648
      %v831 = vxor.u32 %v777, 2147483648
      %v832 = vxor.u32 %v778, 2147483648
      %v833 = vxor.u32 %v779, 2147483648
      %v834 = vxor.u32 %v780, 2147483648
      %v835 = vxor.u32 %v781, 2147483648
      %v836 = vxor.u32 %v782, 2147483648
      %v837 = vmul.f32 %v783, 1.442695
      %v838 = vpow.pop %v837
      %v839 = vmul.f32 %v784, 1.442695
      %v840 = vpow.pop %v839
      %v841 = vmul.f32 %v785, 1.442695
      %v842 = vpow.pop %v841
      %v843 = vmul.f32 %v786, 1.442695
      %v844 = vpow.pop %v843
      %v845 = vmul.f32 %v787, 1.442695
      %v846 = vpow.pop %v845
      %v847 = vmul.f32 %v788, 1.442695
      %v848 = vpow.pop %v847
      %v849 = vmul.f32 %v789, 1.442695
      %v850 = vpow.pop %v849
      %v851 = vmul.f32 %v790, 1.442695
      %v852 = vpow.pop %v851
      %v853 = vmul.f32 %v791, 1.442695
      %v854 = vpow.pop %v853
      %v855 = vmul.f32 %v792, 1.442695
      %v856 = vpow.pop %v855
      %v857 = vmul.f32 %v793, 1.442695
      %v858 = vpow.pop %v857
      %v859 = vmul.f32 %v794, 1.442695
      %v860 = vpow.pop %v859
      %v861 = vmul.f32 %v795, 1.442695
      %v862 = vpow.pop %v861
      %v863 = vmul.f32 %v796, 1.442695
      %v864 = vpow.pop %v863
      %v865 = vmul.f32 %v797, 1.442695
      %v866 = vpow.pop %v865
      %v867 = vmul.f32 %v798, 1.442695
      %v868 = vpow.pop %v867
      %v869 = vmul.f32 %v799, 1.442695
      %v870 = vpow.pop %v869
      %v871 = vmul.f32 %v800, 1.442695
      %v872 = vpow.pop %v871
      %v873 = vmul.f32 %v801, 1.442695
      %v874 = vpow.pop %v873
      %v875 = vmul.f32 %v802, 1.442695
      %v876 = vpow.pop %v875
      %v877 = vmul.f32 %v803, 1.442695
      %v878 = vpow.pop %v877
      %v879 = vmul.f32 %v804, 1.442695
      %v880 = vpow.pop %v879
      %v881 = vmul.f32 %v805, 1.442695
      %v882 = vpow.pop %v881
      %v883 = vmul.f32 %v806, 1.442695
      %v884 = vpow.pop %v883
      %v885 = vmul.f32 %v807, 1.442695
      %v886 = vpow.pop %v885
      %v887 = vmul.f32 %v808, 1.442695
      %v888 = vpow.pop %v887
      %v889 = vmul.f32 %v809, 1.442695
      %v890 = vpow.pop %v889
      %v891 = vmul.f32 %v810, 1.442695
      %v892 = vpow.pop %v891
      %v893 = vmul.f32 %v811, 1.442695
      %v894 = vpow.pop %v893
      %v895 = vmul.f32 %v812, 1.442695
      %v896 = vpow.pop %v895
      %v897 = vmul.f32 %v813, 1.442695
      %v898 = vpow.pop %v897
      %v899 = vmul.f32 %v814, 1.442695
      %v900 = vpow.pop %v899
      %v901 = vmul.f32 %v815, 1.442695
      %v902 = vpow.pop %v901
      %v903 = vmul.f32 %v816, 1.442695
      %v904 = vpow.pop %v903
      %v905 = vmul.f32 %v817, 1.442695
      %v906 = vpow.pop %v905
      %v907 = vmul.f32 %v818, 1.442695
      %v908 = vpow.pop %v907
      %v909 = vmul.f32 %v819, 1.442695
      %v910 = vpow.pop %v909
      %v911 = vmul.f32 %v820, 1.442695
      %v912 = vpow.pop %v911
      %v913 = vmul.f32 %v821, 1.442695
      %v914 = vpow.pop %v913
      %v915 = vmul.f32 %v822, 1.442695
      %v916 = vpow.pop %v915
      %v917 = vmul.f32 %v823, 1.442695
      %v918 = vpow.pop %v917
      %v919 = vmul.f32 %v824, 1.442695
      %v920 = vpow.pop %v919
      %v921 = vmul.f32 %v825, 1.442695
      %v922 = vpow.pop %v921
      %v923 = vmul.f32 %v826, 1.442695
      %v924 = vpow.pop %v923
      %v925 = vmul.f32 %v827, 1.442695
      %v926 = vpow.pop %v925
      %v927 = vmul.f32 %v828, 1.442695
      %v928 = vpow.pop %v927
      %v929 = vmul.f32 %v829, 1.442695
      %v930 = vpow.pop %v929
      %v931 = vmul.f32 %v830, 1.442695
      %v932 = vpow.pop %v931
      %v933 = vmul.f32 %v831, 1.442695
      %v934 = vpow.pop %v933
      %v935 = vmul.f32 %v832, 1.442695
      %v936 = vpow.pop %v935
      %v937 = vmul.f32 %v833, 1.442695
      %v938 = vpow.pop %v937
      %v939 = vmul.f32 %v834, 1.442695
      %v940 = vpow.pop %v939
      %v941 = vmul.f32 %v835, 1.442695
      %v942 = vpow.pop %v941
      %v943 = vmul.f32 %v836, 1.442695
      %v944 = vpow.pop %v943
      %v945 = vadd.f32 %v838, 1.0
      %v946 = vadd.f32 %v840, 1.0
      %v947 = vadd.f32 %v842, 1.0
      %v948 = vadd.f32 %v844, 1.0
      %v949 = vadd.f32 %v846, 1.0
      %v950 = vadd.f32 %v848, 1.0
      %v951 = vadd.f32 %v850, 1.0
      %v952 = vadd.f32 %v852, 1.0
      %v953 = vadd.f32 %v854, 1.0
      %v954 = vadd.f32 %v856, 1.0
      %v955 = vadd.f32 %v858, 1.0
      %v956 = vadd.f32 %v860, 1.0
      %v957 = vadd.f32 %v862, 1.0
      %v958 = vadd.f32 %v864, 1.0
      %v959 = vadd.f32 %v866, 1.0
      %v960 = vadd.f32 %v868, 1.0
      %v961 = vadd.f32 %v870, 1.0
      %v962 = vadd.f32 %v872, 1.0
      %v963 = vadd.f32 %v874, 1.0
      %v964 = vadd.f32 %v876, 1.0
      %v965 = vadd.f32 %v878, 1.0
      %v966 = vadd.f32 %v880, 1.0
      %v967 = vadd.f32 %v882, 1.0
      %v968 = vadd.f32 %v884, 1.0
      %v969 = vadd.f32 %v886, 1.0
      %v970 = vadd.f32 %v888, 1.0
      %v971 = vadd.f32 %v890, 1.0
      %v972 = vadd.f32 %v892, 1.0
      %v973 = vadd.f32 %v894, 1.0
      %v974 = vadd.f32 %v896, 1.0
      %v975 = vadd.f32 %v898, 1.0
      %v976 = vadd.f32 %v900, 1.0
      %v977 = vadd.f32 %v902, 1.0
      %v978 = vadd.f32 %v904, 1.0
      %v979 = vadd.f32 %v906, 1.0
      %v980 = vadd.f32 %v908, 1.0
      %v981 = vadd.f32 %v910, 1.0
      %v982 = vadd.f32 %v912, 1.0
      %v983 = vadd.f32 %v914, 1.0
      %v984 = vadd.f32 %v916, 1.0
      %v985 = vadd.f32 %v918, 1.0
      %v986 = vadd.f32 %v920, 1.0
      %v987 = vadd.f32 %v922, 1.0
      %v988 = vadd.f32 %v924, 1.0
      %v989 = vadd.f32 %v926, 1.0
      %v990 = vadd.f32 %v928, 1.0
      %v991 = vadd.f32 %v930, 1.0
      %v992 = vadd.f32 %v932, 1.0
      %v993 = vadd.f32 %v934, 1.0
      %v994 = vadd.f32 %v936, 1.0
      %v995 = vadd.f32 %v938, 1.0
      %v996 = vadd.f32 %v940, 1.0
      %v997 = vadd.f32 %v942, 1.0
      %v998 = vadd.f32 %v944, 1.0
      %v999 = vrcp.pop %v945
      %v1000 = vmul.f32 %v945, %v999
      %v1001 = vsub.f32 1.0, %v1000
      %v1002 = vmul.f32 %v999, %v1001
      %v1003 = vadd.f32 %v999, %v1002
      %vm1004 = vweird.f32 %v945
      %vm1005 = vweird.f32 %v999
      %vm1006 = vmor %vm1004, %vm1005
      %v1007 = vsel %vm1006, %v999, %v1003
      %v1008 = vand.u32 2147483647, %v945
      %vm1009 = vcmp.eq.f32.partialorder %v1008, 8.507059e+37
      %v1010 = vand.u32 %v945, 2147483648
      %v1011 = vor.u32 1.1754944e-38, %v1010
      %v1012 = vsel %vm1009, %v1011, %v1007
      %v1013 = vmul.f32 1.0, %v1012
      %v1014 = vrcp.pop %v946
      %v1015 = vmul.f32 %v946, %v1014
      %v1016 = vsub.f32 1.0, %v1015
      %v1017 = vmul.f32 %v1014, %v1016
      %v1018 = vadd.f32 %v1014, %v1017
      %vm1019 = vweird.f32 %v946
      %vm1020 = vweird.f32 %v1014
      %vm1021 = vmor %vm1019, %vm1020
      %v1022 = vsel %vm1021, %v1014, %v1018
      %v1023 = vand.u32 2147483647, %v946
      %vm1024 = vcmp.eq.f32.partialorder %v1023, 8.507059e+37
      %v1025 = vand.u32 %v946, 2147483648
      %v1026 = vor.u32 1.1754944e-38, %v1025
      %v1027 = vsel %vm1024, %v1026, %v1022
      %v1028 = vmul.f32 1.0, %v1027
      %v1029 = vrcp.pop %v947
      %v1030 = vmul.f32 %v947, %v1029
      %v1031 = vsub.f32 1.0, %v1030
      %v1032 = vmul.f32 %v1029, %v1031
      %v1033 = vadd.f32 %v1029, %v1032
      %vm1034 = vweird.f32 %v947
      %vm1035 = vweird.f32 %v1029
      %vm1036 = vmor %vm1034, %vm1035
      %v1037 = vsel %vm1036, %v1029, %v1033
      %v1038 = vand.u32 2147483647, %v947
      %vm1039 = vcmp.eq.f32.partialorder %v1038, 8.507059e+37
      %v1040 = vand.u32 %v947, 2147483648
      %v1041 = vor.u32 1.1754944e-38, %v1040
      %v1042 = vsel %vm1039, %v1041, %v1037
      %v1043 = vmul.f32 1.0, %v1042
      %v1044 = vrcp.pop %v948
      %v1045 = vmul.f32 %v948, %v1044
      %v1046 = vsub.f32 1.0, %v1045
      %v1047 = vmul.f32 %v1044, %v1046
      %v1048 = vadd.f32 %v1044, %v1047
      %vm1049 = vweird.f32 %v948
      %vm1050 = vweird.f32 %v1044
      %vm1051 = vmor %vm1049, %vm1050
      %v1052 = vsel %vm1051, %v1044, %v1048
      %v1053 = vand.u32 2147483647, %v948
      %vm1054 = vcmp.eq.f32.partialorder %v1053, 8.507059e+37
      %v1055 = vand.u32 %v948, 2147483648
      %v1056 = vor.u32 1.1754944e-38, %v1055
      %v1057 = vsel %vm1054, %v1056, %v1052
      %v1058 = vmul.f32 1.0, %v1057
      %v1059 = vrcp.pop %v949
      %v1060 = vmul.f32 %v949, %v1059
      %v1061 = vsub.f32 1.0, %v1060
      %v1062 = vmul.f32 %v1059, %v1061
      %v1063 = vadd.f32 %v1059, %v1062
      %vm1064 = vweird.f32 %v949
      %vm1065 = vweird.f32 %v1059
      %vm1066 = vmor %vm1064, %vm1065
      %v1067 = vsel %vm1066, %v1059, %v1063
      %v1068 = vand.u32 2147483647, %v949
      %vm1069 = vcmp.eq.f32.partialorder %v1068, 8.507059e+37
      %v1070 = vand.u32 %v949, 2147483648
      %v1071 = vor.u32 1.1754944e-38, %v1070
      %v1072 = vsel %vm1069, %v1071, %v1067
      %v1073 = vmul.f32 1.0, %v1072
      %v1074 = vrcp.pop %v950
      %v1075 = vmul.f32 %v950, %v1074
      %v1076 = vsub.f32 1.0, %v1075
      %v1077 = vmul.f32 %v1074, %v1076
      %v1078 = vadd.f32 %v1074, %v1077
      %vm1079 = vweird.f32 %v950
      %vm1080 = vweird.f32 %v1074
      %vm1081 = vmor %vm1079, %vm1080
      %v1082 = vsel %vm1081, %v1074, %v1078
      %v1083 = vand.u32 2147483647, %v950
      %vm1084 = vcmp.eq.f32.partialorder %v1083, 8.507059e+37
      %v1085 = vand.u32 %v950, 2147483648
      %v1086 = vor.u32 1.1754944e-38, %v1085
      %v1087 = vsel %vm1084, %v1086, %v1082
      %v1088 = vmul.f32 1.0, %v1087
      %v1089 = vrcp.pop %v951
      %v1090 = vmul.f32 %v951, %v1089
      %v1091 = vsub.f32 1.0, %v1090
      %v1092 = vmul.f32 %v1089, %v1091
      %v1093 = vadd.f32 %v1089, %v1092
      %vm1094 = vweird.f32 %v951
      %vm1095 = vweird.f32 %v1089
      %vm1096 = vmor %vm1094, %vm1095
      %v1097 = vsel %vm1096, %v1089, %v1093
      %v1098 = vand.u32 2147483647, %v951
      %vm1099 = vcmp.eq.f32.partialorder %v1098, 8.507059e+37
      %v1100 = vand.u32 %v951, 2147483648
      %v1101 = vor.u32 1.1754944e-38, %v1100
      %v1102 = vsel %vm1099, %v1101, %v1097
      %v1103 = vmul.f32 1.0, %v1102
      %v1104 = vrcp.pop %v952
      %v1105 = vmul.f32 %v952, %v1104
      %v1106 = vsub.f32 1.0, %v1105
      %v1107 = vmul.f32 %v1104, %v1106
      %v1108 = vadd.f32 %v1104, %v1107
      %vm1109 = vweird.f32 %v952
      %vm1110 = vweird.f32 %v1104
      %vm1111 = vmor %vm1109, %vm1110
      %v1112 = vsel %vm1111, %v1104, %v1108
      %v1113 = vand.u32 2147483647, %v952
      %vm1114 = vcmp.eq.f32.partialorder %v1113, 8.507059e+37
      %v1115 = vand.u32 %v952, 2147483648
      %v1116 = vor.u32 1.1754944e-38, %v1115
      %v1117 = vsel %vm1114, %v1116, %v1112
      %v1118 = vmul.f32 1.0, %v1117
      %v1119 = vrcp.pop %v953
      %v1120 = vmul.f32 %v953, %v1119
      %v1121 = vsub.f32 1.0, %v1120
      %v1122 = vmul.f32 %v1119, %v1121
      %v1123 = vadd.f32 %v1119, %v1122
      %vm1124 = vweird.f32 %v953
      %vm1125 = vweird.f32 %v1119
      %vm1126 = vmor %vm1124, %vm1125
      %v1127 = vsel %vm1126, %v1119, %v1123
      %v1128 = vand.u32 2147483647, %v953
      %vm1129 = vcmp.eq.f32.partialorder %v1128, 8.507059e+37
      %v1130 = vand.u32 %v953, 2147483648
      %v1131 = vor.u32 1.1754944e-38, %v1130
      %v1132 = vsel %vm1129, %v1131, %v1127
      %v1133 = vmul.f32 1.0, %v1132
      %v1134 = vrcp.pop %v954
      %v1135 = vmul.f32 %v954, %v1134
      %v1136 = vsub.f32 1.0, %v1135
      %v1137 = vmul.f32 %v1134, %v1136
      %v1138 = vadd.f32 %v1134, %v1137
      %vm1139 = vweird.f32 %v954
      %vm1140 = vweird.f32 %v1134
      %vm1141 = vmor %vm1139, %vm1140
      %v1142 = vsel %vm1141, %v1134, %v1138
      %v1143 = vand.u32 2147483647, %v954
      %vm1144 = vcmp.eq.f32.partialorder %v1143, 8.507059e+37
      %v1145 = vand.u32 %v954, 2147483648
      %v1146 = vor.u32 1.1754944e-38, %v1145
      %v1147 = vsel %vm1144, %v1146, %v1142
      %v1148 = vmul.f32 1.0, %v1147
      %v1149 = vrcp.pop %v955
      %v1150 = vmul.f32 %v955, %v1149
      %v1151 = vsub.f32 1.0, %v1150
      %v1152 = vmul.f32 %v1149, %v1151
      %v1153 = vadd.f32 %v1149, %v1152
      %vm1154 = vweird.f32 %v955
      %vm1155 = vweird.f32 %v1149
      %vm1156 = vmor %vm1154, %vm1155
      %v1157 = vsel %vm1156, %v1149, %v1153
      %v1158 = vand.u32 2147483647, %v955
      %vm1159 = vcmp.eq.f32.partialorder %v1158, 8.507059e+37
      %v1160 = vand.u32 %v955, 2147483648
      %v1161 = vor.u32 1.1754944e-38, %v1160
      %v1162 = vsel %vm1159, %v1161, %v1157
      %v1163 = vmul.f32 1.0, %v1162
      %v1164 = vrcp.pop %v956
      %v1165 = vmul.f32 %v956, %v1164
      %v1166 = vsub.f32 1.0, %v1165
      %v1167 = vmul.f32 %v1164, %v1166
      %v1168 = vadd.f32 %v1164, %v1167
      %vm1169 = vweird.f32 %v956
      %vm1170 = vweird.f32 %v1164
      %vm1171 = vmor %vm1169, %vm1170
      %v1172 = vsel %vm1171, %v1164, %v1168
      %v1173 = vand.u32 2147483647, %v956
      %vm1174 = vcmp.eq.f32.partialorder %v1173, 8.507059e+37
      %v1175 = vand.u32 %v956, 2147483648
      %v1176 = vor.u32 1.1754944e-38, %v1175
      %v1177 = vsel %vm1174, %v1176, %v1172
      %v1178 = vmul.f32 1.0, %v1177
      %v1179 = vrcp.pop %v957
      %v1180 = vmul.f32 %v957, %v1179
      %v1181 = vsub.f32 1.0, %v1180
      %v1182 = vmul.f32 %v1179, %v1181
      %v1183 = vadd.f32 %v1179, %v1182
      %vm1184 = vweird.f32 %v957
      %vm1185 = vweird.f32 %v1179
      %vm1186 = vmor %vm1184, %vm1185
      %v1187 = vsel %vm1186, %v1179, %v1183
      %v1188 = vand.u32 2147483647, %v957
      %vm1189 = vcmp.eq.f32.partialorder %v1188, 8.507059e+37
      %v1190 = vand.u32 %v957, 2147483648
      %v1191 = vor.u32 1.1754944e-38, %v1190
      %v1192 = vsel %vm1189, %v1191, %v1187
      %v1193 = vmul.f32 1.0, %v1192
      %v1194 = vrcp.pop %v958
      %v1195 = vmul.f32 %v958, %v1194
      %v1196 = vsub.f32 1.0, %v1195
      %v1197 = vmul.f32 %v1194, %v1196
      %v1198 = vadd.f32 %v1194, %v1197
      %vm1199 = vweird.f32 %v958
      %vm1200 = vweird.f32 %v1194
      %vm1201 = vmor %vm1199, %vm1200
      %v1202 = vsel %vm1201, %v1194, %v1198
      %v1203 = vand.u32 2147483647, %v958
      %vm1204 = vcmp.eq.f32.partialorder %v1203, 8.507059e+37
      %v1205 = vand.u32 %v958, 2147483648
      %v1206 = vor.u32 1.1754944e-38, %v1205
      %v1207 = vsel %vm1204, %v1206, %v1202
      %v1208 = vmul.f32 1.0, %v1207
      %v1209 = vrcp.pop %v959
      %v1210 = vmul.f32 %v959, %v1209
      %v1211 = vsub.f32 1.0, %v1210
      %v1212 = vmul.f32 %v1209, %v1211
      %v1213 = vadd.f32 %v1209, %v1212
      %vm1214 = vweird.f32 %v959
      %vm1215 = vweird.f32 %v1209
      %vm1216 = vmor %vm1214, %vm1215
      %v1217 = vsel %vm1216, %v1209, %v1213
      %v1218 = vand.u32 2147483647, %v959
      %vm1219 = vcmp.eq.f32.partialorder %v1218, 8.507059e+37
      %v1220 = vand.u32 %v959, 2147483648
      %v1221 = vor.u32 1.1754944e-38, %v1220
      %v1222 = vsel %vm1219, %v1221, %v1217
      %v1223 = vmul.f32 1.0, %v1222
      %v1224 = vrcp.pop %v960
      %v1225 = vmul.f32 %v960, %v1224
      %v1226 = vsub.f32 1.0, %v1225
      %v1227 = vmul.f32 %v1224, %v1226
      %v1228 = vadd.f32 %v1224, %v1227
      %vm1229 = vweird.f32 %v960
      %vm1230 = vweird.f32 %v1224
      %vm1231 = vmor %vm1229, %vm1230
      %v1232 = vsel %vm1231, %v1224, %v1228
      %v1233 = vand.u32 2147483647, %v960
      %vm1234 = vcmp.eq.f32.partialorder %v1233, 8.507059e+37
      %v1235 = vand.u32 %v960, 2147483648
      %v1236 = vor.u32 1.1754944e-38, %v1235
      %v1237 = vsel %vm1234, %v1236, %v1232
      %v1238 = vmul.f32 1.0, %v1237
      %v1239 = vrcp.pop %v961
      %v1240 = vmul.f32 %v961, %v1239
      %v1241 = vsub.f32 1.0, %v1240
      %v1242 = vmul.f32 %v1239, %v1241
      %v1243 = vadd.f32 %v1239, %v1242
      %vm1244 = vweird.f32 %v961
      %vm1245 = vweird.f32 %v1239
      %vm1246 = vmor %vm1244, %vm1245
      %v1247 = vsel %vm1246, %v1239, %v1243
      %v1248 = vand.u32 2147483647, %v961
      %vm1249 = vcmp.eq.f32.partialorder %v1248, 8.507059e+37
      %v1250 = vand.u32 %v961, 2147483648
      %v1251 = vor.u32 1.1754944e-38, %v1250
      %v1252 = vsel %vm1249, %v1251, %v1247
      %v1253 = vmul.f32 1.0, %v1252
      %v1254 = vrcp.pop %v962
      %v1255 = vmul.f32 %v962, %v1254
      %v1256 = vsub.f32 1.0, %v1255
      %v1257 = vmul.f32 %v1254, %v1256
      %v1258 = vadd.f32 %v1254, %v1257
      %vm1259 = vweird.f32 %v962
      %vm1260 = vweird.f32 %v1254
      %vm1261 = vmor %vm1259, %vm1260
      %v1262 = vsel %vm1261, %v1254, %v1258
      %v1263 = vand.u32 2147483647, %v962
      %vm1264 = vcmp.eq.f32.partialorder %v1263, 8.507059e+37
      %v1265 = vand.u32 %v962, 2147483648
      %v1266 = vor.u32 1.1754944e-38, %v1265
      %v1267 = vsel %vm1264, %v1266, %v1262
      %v1268 = vmul.f32 1.0, %v1267
      %v1269 = vrcp.pop %v963
      %v1270 = vmul.f32 %v963, %v1269
      %v1271 = vsub.f32 1.0, %v1270
      %v1272 = vmul.f32 %v1269, %v1271
      %v1273 = vadd.f32 %v1269, %v1272
      %vm1274 = vweird.f32 %v963
      %vm1275 = vweird.f32 %v1269
      %vm1276 = vmor %vm1274, %vm1275
      %v1277 = vsel %vm1276, %v1269, %v1273
      %v1278 = vand.u32 2147483647, %v963
      %vm1279 = vcmp.eq.f32.partialorder %v1278, 8.507059e+37
      %v1280 = vand.u32 %v963, 2147483648
      %v1281 = vor.u32 1.1754944e-38, %v1280
      %v1282 = vsel %vm1279, %v1281, %v1277
      %v1283 = vmul.f32 1.0, %v1282
      %v1284 = vrcp.pop %v964
      %v1285 = vmul.f32 %v964, %v1284
      %v1286 = vsub.f32 1.0, %v1285
      %v1287 = vmul.f32 %v1284, %v1286
      %v1288 = vadd.f32 %v1284, %v1287
      %vm1289 = vweird.f32 %v964
      %vm1290 = vweird.f32 %v1284
      %vm1291 = vmor %vm1289, %vm1290
      %v1292 = vsel %vm1291, %v1284, %v1288
      %v1293 = vand.u32 2147483647, %v964
      %vm1294 = vcmp.eq.f32.partialorder %v1293, 8.507059e+37
      %v1295 = vand.u32 %v964, 2147483648
      %v1296 = vor.u32 1.1754944e-38, %v1295
      %v1297 = vsel %vm1294, %v1296, %v1292
      %v1298 = vmul.f32 1.0, %v1297
      %v1299 = vrcp.pop %v965
      %v1300 = vmul.f32 %v965, %v1299
      %v1301 = vsub.f32 1.0, %v1300
      %v1302 = vmul.f32 %v1299, %v1301
      %v1303 = vadd.f32 %v1299, %v1302
      %vm1304 = vweird.f32 %v965
      %vm1305 = vweird.f32 %v1299
      %vm1306 = vmor %vm1304, %vm1305
      %v1307 = vsel %vm1306, %v1299, %v1303
      %v1308 = vand.u32 2147483647, %v965
      %vm1309 = vcmp.eq.f32.partialorder %v1308, 8.507059e+37
      %v1310 = vand.u32 %v965, 2147483648
      %v1311 = vor.u32 1.1754944e-38, %v1310
      %v1312 = vsel %vm1309, %v1311, %v1307
      %v1313 = vmul.f32 1.0, %v1312
      %v1314 = vrcp.pop %v966
      %v1315 = vmul.f32 %v966, %v1314
      %v1316 = vsub.f32 1.0, %v1315
      %v1317 = vmul.f32 %v1314, %v1316
      %v1318 = vadd.f32 %v1314, %v1317
      %vm1319 = vweird.f32 %v966
      %vm1320 = vweird.f32 %v1314
      %vm1321 = vmor %vm1319, %vm1320
      %v1322 = vsel %vm1321, %v1314, %v1318
      %v1323 = vand.u32 2147483647, %v966
      %vm1324 = vcmp.eq.f32.partialorder %v1323, 8.507059e+37
      %v1325 = vand.u32 %v966, 2147483648
      %v1326 = vor.u32 1.1754944e-38, %v1325
      %v1327 = vsel %vm1324, %v1326, %v1322
      %v1328 = vmul.f32 1.0, %v1327
      %v1329 = vrcp.pop %v967
      %v1330 = vmul.f32 %v967, %v1329
      %v1331 = vsub.f32 1.0, %v1330
      %v1332 = vmul.f32 %v1329, %v1331
      %v1333 = vadd.f32 %v1329, %v1332
      %vm1334 = vweird.f32 %v967
      %vm1335 = vweird.f32 %v1329
      %vm1336 = vmor %vm1334, %vm1335
      %v1337 = vsel %vm1336, %v1329, %v1333
      %v1338 = vand.u32 2147483647, %v967
      %vm1339 = vcmp.eq.f32.partialorder %v1338, 8.507059e+37
      %v1340 = vand.u32 %v967, 2147483648
      %v1341 = vor.u32 1.1754944e-38, %v1340
      %v1342 = vsel %vm1339, %v1341, %v1337
      %v1343 = vmul.f32 1.0, %v1342
      %v1344 = vrcp.pop %v968
      %v1345 = vmul.f32 %v968, %v1344
      %v1346 = vsub.f32 1.0, %v1345
      %v1347 = vmul.f32 %v1344, %v1346
      %v1348 = vadd.f32 %v1344, %v1347
      %vm1349 = vweird.f32 %v968
      %vm1350 = vweird.f32 %v1344
      %vm1351 = vmor %vm1349, %vm1350
      %v1352 = vsel %vm1351, %v1344, %v1348
      %v1353 = vand.u32 2147483647, %v968
      %vm1354 = vcmp.eq.f32.partialorder %v1353, 8.507059e+37
      %v1355 = vand.u32 %v968, 2147483648
      %v1356 = vor.u32 1.1754944e-38, %v1355
      %v1357 = vsel %vm1354, %v1356, %v1352
      %v1358 = vmul.f32 1.0, %v1357
      %v1359 = vrcp.pop %v969
      %v1360 = vmul.f32 %v969, %v1359
      %v1361 = vsub.f32 1.0, %v1360
      %v1362 = vmul.f32 %v1359, %v1361
      %v1363 = vadd.f32 %v1359, %v1362
      %vm1364 = vweird.f32 %v969
      %vm1365 = vweird.f32 %v1359
      %vm1366 = vmor %vm1364, %vm1365
      %v1367 = vsel %vm1366, %v1359, %v1363
      %v1368 = vand.u32 2147483647, %v969
      %vm1369 = vcmp.eq.f32.partialorder %v1368, 8.507059e+37
      %v1370 = vand.u32 %v969, 2147483648
      %v1371 = vor.u32 1.1754944e-38, %v1370
      %v1372 = vsel %vm1369, %v1371, %v1367
      %v1373 = vmul.f32 1.0, %v1372
      %v1374 = vrcp.pop %v970
      %v1375 = vmul.f32 %v970, %v1374
      %v1376 = vsub.f32 1.0, %v1375
      %v1377 = vmul.f32 %v1374, %v1376
      %v1378 = vadd.f32 %v1374, %v1377
      %vm1379 = vweird.f32 %v970
      %vm1380 = vweird.f32 %v1374
      %vm1381 = vmor %vm1379, %vm1380
      %v1382 = vsel %vm1381, %v1374, %v1378
      %v1383 = vand.u32 2147483647, %v970
      %vm1384 = vcmp.eq.f32.partialorder %v1383, 8.507059e+37
      %v1385 = vand.u32 %v970, 2147483648
      %v1386 = vor.u32 1.1754944e-38, %v1385
      %v1387 = vsel %vm1384, %v1386, %v1382
      %v1388 = vmul.f32 1.0, %v1387
      %v1389 = vrcp.pop %v971
      %v1390 = vmul.f32 %v971, %v1389
      %v1391 = vsub.f32 1.0, %v1390
      %v1392 = vmul.f32 %v1389, %v1391
      %v1393 = vadd.f32 %v1389, %v1392
      %vm1394 = vweird.f32 %v971
      %vm1395 = vweird.f32 %v1389
      %vm1396 = vmor %vm1394, %vm1395
      %v1397 = vsel %vm1396, %v1389, %v1393
      %v1398 = vand.u32 2147483647, %v971
      %vm1399 = vcmp.eq.f32.partialorder %v1398, 8.507059e+37
      %v1400 = vand.u32 %v971, 2147483648
      %v1401 = vor.u32 1.1754944e-38, %v1400
      %v1402 = vsel %vm1399, %v1401, %v1397
      %v1403 = vmul.f32 1.0, %v1402
      %v1404 = vrcp.pop %v972
      %v1405 = vmul.f32 %v972, %v1404
      %v1406 = vsub.f32 1.0, %v1405
      %v1407 = vmul.f32 %v1404, %v1406
      %v1408 = vadd.f32 %v1404, %v1407
      %vm1409 = vweird.f32 %v972
      %vm1410 = vweird.f32 %v1404
      %vm1411 = vmor %vm1409, %vm1410
      %v1412 = vsel %vm1411, %v1404, %v1408
      %v1413 = vand.u32 2147483647, %v972
      %vm1414 = vcmp.eq.f32.partialorder %v1413, 8.507059e+37
      %v1415 = vand.u32 %v972, 2147483648
      %v1416 = vor.u32 1.1754944e-38, %v1415
      %v1417 = vsel %vm1414, %v1416, %v1412
      %v1418 = vmul.f32 1.0, %v1417
      %v1419 = vrcp.pop %v973
      %v1420 = vmul.f32 %v973, %v1419
      %v1421 = vsub.f32 1.0, %v1420
      %v1422 = vmul.f32 %v1419, %v1421
      %v1423 = vadd.f32 %v1419, %v1422
      %vm1424 = vweird.f32 %v973
      %vm1425 = vweird.f32 %v1419
      %vm1426 = vmor %vm1424, %vm1425
      %v1427 = vsel %vm1426, %v1419, %v1423
      %v1428 = vand.u32 2147483647, %v973
      %vm1429 = vcmp.eq.f32.partialorder %v1428, 8.507059e+37
      %v1430 = vand.u32 %v973, 2147483648
      %v1431 = vor.u32 1.1754944e-38, %v1430
      %v1432 = vsel %vm1429, %v1431, %v1427
      %v1433 = vmul.f32 1.0, %v1432
      %v1434 = vrcp.pop %v974
      %v1435 = vmul.f32 %v974, %v1434
      %v1436 = vsub.f32 1.0, %v1435
      %v1437 = vmul.f32 %v1434, %v1436
      %v1438 = vadd.f32 %v1434, %v1437
      %vm1439 = vweird.f32 %v974
      %vm1440 = vweird.f32 %v1434
      %vm1441 = vmor %vm1439, %vm1440
      %v1442 = vsel %vm1441, %v1434, %v1438
      %v1443 = vand.u32 2147483647, %v974
      %vm1444 = vcmp.eq.f32.partialorder %v1443, 8.507059e+37
      %v1445 = vand.u32 %v974, 2147483648
      %v1446 = vor.u32 1.1754944e-38, %v1445
      %v1447 = vsel %vm1444, %v1446, %v1442
      %v1448 = vmul.f32 1.0, %v1447
      %v1449 = vrcp.pop %v975
      %v1450 = vmul.f32 %v975, %v1449
      %v1451 = vsub.f32 1.0, %v1450
      %v1452 = vmul.f32 %v1449, %v1451
      %v1453 = vadd.f32 %v1449, %v1452
      %vm1454 = vweird.f32 %v975
      %vm1455 = vweird.f32 %v1449
      %vm1456 = vmor %vm1454, %vm1455
      %v1457 = vsel %vm1456, %v1449, %v1453
      %v1458 = vand.u32 2147483647, %v975
      %vm1459 = vcmp.eq.f32.partialorder %v1458, 8.507059e+37
      %v1460 = vand.u32 %v975, 2147483648
      %v1461 = vor.u32 1.1754944e-38, %v1460
      %v1462 = vsel %vm1459, %v1461, %v1457
      %v1463 = vmul.f32 1.0, %v1462
      %v1464 = vrcp.pop %v976
      %v1465 = vmul.f32 %v976, %v1464
      %v1466 = vsub.f32 1.0, %v1465
      %v1467 = vmul.f32 %v1464, %v1466
      %v1468 = vadd.f32 %v1464, %v1467
      %vm1469 = vweird.f32 %v976
      %vm1470 = vweird.f32 %v1464
      %vm1471 = vmor %vm1469, %vm1470
      %v1472 = vsel %vm1471, %v1464, %v1468
      %v1473 = vand.u32 2147483647, %v976
      %vm1474 = vcmp.eq.f32.partialorder %v1473, 8.507059e+37
      %v1475 = vand.u32 %v976, 2147483648
      %v1476 = vor.u32 1.1754944e-38, %v1475
      %v1477 = vsel %vm1474, %v1476, %v1472
      %v1478 = vmul.f32 1.0, %v1477
      %v1479 = vrcp.pop %v977
      %v1480 = vmul.f32 %v977, %v1479
      %v1481 = vsub.f32 1.0, %v1480
      %v1482 = vmul.f32 %v1479, %v1481
      %v1483 = vadd.f32 %v1479, %v1482
      %vm1484 = vweird.f32 %v977
      %vm1485 = vweird.f32 %v1479
      %vm1486 = vmor %vm1484, %vm1485
      %v1487 = vsel %vm1486, %v1479, %v1483
      %v1488 = vand.u32 2147483647, %v977
      %vm1489 = vcmp.eq.f32.partialorder %v1488, 8.507059e+37
      %v1490 = vand.u32 %v977, 2147483648
      %v1491 = vor.u32 1.1754944e-38, %v1490
      %v1492 = vsel %vm1489, %v1491, %v1487
      %v1493 = vmul.f32 1.0, %v1492
      %v1494 = vrcp.pop %v978
      %v1495 = vmul.f32 %v978, %v1494
      %v1496 = vsub.f32 1.0, %v1495
      %v1497 = vmul.f32 %v1494, %v1496
      %v1498 = vadd.f32 %v1494, %v1497
      %vm1499 = vweird.f32 %v978
      %vm1500 = vweird.f32 %v1494
      %vm1501 = vmor %vm1499, %vm1500
      %v1502 = vsel %vm1501, %v1494, %v1498
      %v1503 = vand.u32 2147483647, %v978
      %vm1504 = vcmp.eq.f32.partialorder %v1503, 8.507059e+37
      %v1505 = vand.u32 %v978, 2147483648
      %v1506 = vor.u32 1.1754944e-38, %v1505
      %v1507 = vsel %vm1504, %v1506, %v1502
      %v1508 = vmul.f32 1.0, %v1507
      %v1509 = vrcp.pop %v979
      %v1510 = vmul.f32 %v979, %v1509
      %v1511 = vsub.f32 1.0, %v1510
      %v1512 = vmul.f32 %v1509, %v1511
      %v1513 = vadd.f32 %v1509, %v1512
      %vm1514 = vweird.f32 %v979
      %vm1515 = vweird.f32 %v1509
      %vm1516 = vmor %vm1514, %vm1515
      %v1517 = vsel %vm1516, %v1509, %v1513
      %v1518 = vand.u32 2147483647, %v979
      %vm1519 = vcmp.eq.f32.partialorder %v1518, 8.507059e+37
      %v1520 = vand.u32 %v979, 2147483648
      %v1521 = vor.u32 1.1754944e-38, %v1520
      %v1522 = vsel %vm1519, %v1521, %v1517
      %v1523 = vmul.f32 1.0, %v1522
      %v1524 = vrcp.pop %v980
      %v1525 = vmul.f32 %v980, %v1524
      %v1526 = vsub.f32 1.0, %v1525
      %v1527 = vmul.f32 %v1524, %v1526
      %v1528 = vadd.f32 %v1524, %v1527
      %vm1529 = vweird.f32 %v980
      %vm1530 = vweird.f32 %v1524
      %vm1531 = vmor %vm1529, %vm1530
      %v1532 = vsel %vm1531, %v1524, %v1528
      %v1533 = vand.u32 2147483647, %v980
      %vm1534 = vcmp.eq.f32.partialorder %v1533, 8.507059e+37
      %v1535 = vand.u32 %v980, 2147483648
      %v1536 = vor.u32 1.1754944e-38, %v1535
      %v1537 = vsel %vm1534, %v1536, %v1532
      %v1538 = vmul.f32 1.0, %v1537
      %v1539 = vrcp.pop %v981
      %v1540 = vmul.f32 %v981, %v1539
      %v1541 = vsub.f32 1.0, %v1540
      %v1542 = vmul.f32 %v1539, %v1541
      %v1543 = vadd.f32 %v1539, %v1542
      %vm1544 = vweird.f32 %v981
      %vm1545 = vweird.f32 %v1539
      %vm1546 = vmor %vm1544, %vm1545
      %v1547 = vsel %vm1546, %v1539, %v1543
      %v1548 = vand.u32 2147483647, %v981
      %vm1549 = vcmp.eq.f32.partialorder %v1548, 8.507059e+37
      %v1550 = vand.u32 %v981, 2147483648
      %v1551 = vor.u32 1.1754944e-38, %v1550
      %v1552 = vsel %vm1549, %v1551, %v1547
      %v1553 = vmul.f32 1.0, %v1552
      %v1554 = vrcp.pop %v982
      %v1555 = vmul.f32 %v982, %v1554
      %v1556 = vsub.f32 1.0, %v1555
      %v1557 = vmul.f32 %v1554, %v1556
      %v1558 = vadd.f32 %v1554, %v1557
      %vm1559 = vweird.f32 %v982
      %vm1560 = vweird.f32 %v1554
      %vm1561 = vmor %vm1559, %vm1560
      %v1562 = vsel %vm1561, %v1554, %v1558
      %v1563 = vand.u32 2147483647, %v982
      %vm1564 = vcmp.eq.f32.partialorder %v1563, 8.507059e+37
      %v1565 = vand.u32 %v982, 2147483648
      %v1566 = vor.u32 1.1754944e-38, %v1565
      %v1567 = vsel %vm1564, %v1566, %v1562
      %v1568 = vmul.f32 1.0, %v1567
      %v1569 = vrcp.pop %v983
      %v1570 = vmul.f32 %v983, %v1569
      %v1571 = vsub.f32 1.0, %v1570
      %v1572 = vmul.f32 %v1569, %v1571
      %v1573 = vadd.f32 %v1569, %v1572
      %vm1574 = vweird.f32 %v983
      %vm1575 = vweird.f32 %v1569
      %vm1576 = vmor %vm1574, %vm1575
      %v1577 = vsel %vm1576, %v1569, %v1573
      %v1578 = vand.u32 2147483647, %v983
      %vm1579 = vcmp.eq.f32.partialorder %v1578, 8.507059e+37
      %v1580 = vand.u32 %v983, 2147483648
      %v1581 = vor.u32 1.1754944e-38, %v1580
      %v1582 = vsel %vm1579, %v1581, %v1577
      %v1583 = vmul.f32 1.0, %v1582
      %v1584 = vrcp.pop %v984
      %v1585 = vmul.f32 %v984, %v1584
      %v1586 = vsub.f32 1.0, %v1585
      %v1587 = vmul.f32 %v1584, %v1586
      %v1588 = vadd.f32 %v1584, %v1587
      %vm1589 = vweird.f32 %v984
      %vm1590 = vweird.f32 %v1584
      %vm1591 = vmor %vm1589, %vm1590
      %v1592 = vsel %vm1591, %v1584, %v1588
      %v1593 = vand.u32 2147483647, %v984
      %vm1594 = vcmp.eq.f32.partialorder %v1593, 8.507059e+37
      %v1595 = vand.u32 %v984, 2147483648
      %v1596 = vor.u32 1.1754944e-38, %v1595
      %v1597 = vsel %vm1594, %v1596, %v1592
      %v1598 = vmul.f32 1.0, %v1597
      %v1599 = vrcp.pop %v985
      %v1600 = vmul.f32 %v985, %v1599
      %v1601 = vsub.f32 1.0, %v1600
      %v1602 = vmul.f32 %v1599, %v1601
      %v1603 = vadd.f32 %v1599, %v1602
      %vm1604 = vweird.f32 %v985
      %vm1605 = vweird.f32 %v1599
      %vm1606 = vmor %vm1604, %vm1605
      %v1607 = vsel %vm1606, %v1599, %v1603
      %v1608 = vand.u32 2147483647, %v985
      %vm1609 = vcmp.eq.f32.partialorder %v1608, 8.507059e+37
      %v1610 = vand.u32 %v985, 2147483648
      %v1611 = vor.u32 1.1754944e-38, %v1610
      %v1612 = vsel %vm1609, %v1611, %v1607
      %v1613 = vmul.f32 1.0, %v1612
      %v1614 = vrcp.pop %v986
      %v1615 = vmul.f32 %v986, %v1614
      %v1616 = vsub.f32 1.0, %v1615
      %v1617 = vmul.f32 %v1614, %v1616
      %v1618 = vadd.f32 %v1614, %v1617
      %vm1619 = vweird.f32 %v986
      %vm1620 = vweird.f32 %v1614
      %vm1621 = vmor %vm1619, %vm1620
      %v1622 = vsel %vm1621, %v1614, %v1618
      %v1623 = vand.u32 2147483647, %v986
      %vm1624 = vcmp.eq.f32.partialorder %v1623, 8.507059e+37
      %v1625 = vand.u32 %v986, 2147483648
      %v1626 = vor.u32 1.1754944e-38, %v1625
      %v1627 = vsel %vm1624, %v1626, %v1622
      %v1628 = vmul.f32 1.0, %v1627
      %v1629 = vrcp.pop %v987
      %v1630 = vmul.f32 %v987, %v1629
      %v1631 = vsub.f32 1.0, %v1630
      %v1632 = vmul.f32 %v1629, %v1631
      %v1633 = vadd.f32 %v1629, %v1632
      %vm1634 = vweird.f32 %v987
      %vm1635 = vweird.f32 %v1629
      %vm1636 = vmor %vm1634, %vm1635
      %v1637 = vsel %vm1636, %v1629, %v1633
      %v1638 = vand.u32 2147483647, %v987
      %vm1639 = vcmp.eq.f32.partialorder %v1638, 8.507059e+37
      %v1640 = vand.u32 %v987, 2147483648
      %v1641 = vor.u32 1.1754944e-38, %v1640
      %v1642 = vsel %vm1639, %v1641, %v1637
      %v1643 = vmul.f32 1.0, %v1642
      %v1644 = vrcp.pop %v988
      %v1645 = vmul.f32 %v988, %v1644
      %v1646 = vsub.f32 1.0, %v1645
      %v1647 = vmul.f32 %v1644, %v1646
      %v1648 = vadd.f32 %v1644, %v1647
      %vm1649 = vweird.f32 %v988
      %vm1650 = vweird.f32 %v1644
      %vm1651 = vmor %vm1649, %vm1650
      %v1652 = vsel %vm1651, %v1644, %v1648
      %v1653 = vand.u32 2147483647, %v988
      %vm1654 = vcmp.eq.f32.partialorder %v1653, 8.507059e+37
      %v1655 = vand.u32 %v988, 2147483648
      %v1656 = vor.u32 1.1754944e-38, %v1655
      %v1657 = vsel %vm1654, %v1656, %v1652
      %v1658 = vmul.f32 1.0, %v1657
      %v1659 = vrcp.pop %v989
      %v1660 = vmul.f32 %v989, %v1659
      %v1661 = vsub.f32 1.0, %v1660
      %v1662 = vmul.f32 %v1659, %v1661
      %v1663 = vadd.f32 %v1659, %v1662
      %vm1664 = vweird.f32 %v989
      %vm1665 = vweird.f32 %v1659
      %vm1666 = vmor %vm1664, %vm1665
      %v1667 = vsel %vm1666, %v1659, %v1663
      %v1668 = vand.u32 2147483647, %v989
      %vm1669 = vcmp.eq.f32.partialorder %v1668, 8.507059e+37
      %v1670 = vand.u32 %v989, 2147483648
      %v1671 = vor.u32 1.1754944e-38, %v1670
      %v1672 = vsel %vm1669, %v1671, %v1667
      %v1673 = vmul.f32 1.0, %v1672
      %v1674 = vrcp.pop %v990
      %v1675 = vmul.f32 %v990, %v1674
      %v1676 = vsub.f32 1.0, %v1675
      %v1677 = vmul.f32 %v1674, %v1676
      %v1678 = vadd.f32 %v1674, %v1677
      %vm1679 = vweird.f32 %v990
      %vm1680 = vweird.f32 %v1674
      %vm1681 = vmor %vm1679, %vm1680
      %v1682 = vsel %vm1681, %v1674, %v1678
      %v1683 = vand.u32 2147483647, %v990
      %vm1684 = vcmp.eq.f32.partialorder %v1683, 8.507059e+37
      %v1685 = vand.u32 %v990, 2147483648
      %v1686 = vor.u32 1.1754944e-38, %v1685
      %v1687 = vsel %vm1684, %v1686, %v1682
      %v1688 = vmul.f32 1.0, %v1687
      %v1689 = vrcp.pop %v991
      %v1690 = vmul.f32 %v991, %v1689
      %v1691 = vsub.f32 1.0, %v1690
      %v1692 = vmul.f32 %v1689, %v1691
      %v1693 = vadd.f32 %v1689, %v1692
      %vm1694 = vweird.f32 %v991
      %vm1695 = vweird.f32 %v1689
      %vm1696 = vmor %vm1694, %vm1695
      %v1697 = vsel %vm1696, %v1689, %v1693
      %v1698 = vand.u32 2147483647, %v991
      %vm1699 = vcmp.eq.f32.partialorder %v1698, 8.507059e+37
      %v1700 = vand.u32 %v991, 2147483648
      %v1701 = vor.u32 1.1754944e-38, %v1700
      %v1702 = vsel %vm1699, %v1701, %v1697
      %v1703 = vmul.f32 1.0, %v1702
      %v1704 = vrcp.pop %v992
      %v1705 = vmul.f32 %v992, %v1704
      %v1706 = vsub.f32 1.0, %v1705
      %v1707 = vmul.f32 %v1704, %v1706
      %v1708 = vadd.f32 %v1704, %v1707
      %vm1709 = vweird.f32 %v992
      %vm1710 = vweird.f32 %v1704
      %vm1711 = vmor %vm1709, %vm1710
      %v1712 = vsel %vm1711, %v1704, %v1708
      %v1713 = vand.u32 2147483647, %v992
      %vm1714 = vcmp.eq.f32.partialorder %v1713, 8.507059e+37
      %v1715 = vand.u32 %v992, 2147483648
      %v1716 = vor.u32 1.1754944e-38, %v1715
      %v1717 = vsel %vm1714, %v1716, %v1712
      %v1718 = vmul.f32 1.0, %v1717
      %v1719 = vrcp.pop %v993
      %v1720 = vmul.f32 %v993, %v1719
      %v1721 = vsub.f32 1.0, %v1720
      %v1722 = vmul.f32 %v1719, %v1721
      %v1723 = vadd.f32 %v1719, %v1722
      %vm1724 = vweird.f32 %v993
      %vm1725 = vweird.f32 %v1719
      %vm1726 = vmor %vm1724, %vm1725
      %v1727 = vsel %vm1726, %v1719, %v1723
      %v1728 = vand.u32 2147483647, %v993
      %vm1729 = vcmp.eq.f32.partialorder %v1728, 8.507059e+37
      %v1730 = vand.u32 %v993, 2147483648
      %v1731 = vor.u32 1.1754944e-38, %v1730
      %v1732 = vsel %vm1729, %v1731, %v1727
      %v1733 = vmul.f32 1.0, %v1732
      %v1734 = vrcp.pop %v994
      %v1735 = vmul.f32 %v994, %v1734
      %v1736 = vsub.f32 1.0, %v1735
      %v1737 = vmul.f32 %v1734, %v1736
      %v1738 = vadd.f32 %v1734, %v1737
      %vm1739 = vweird.f32 %v994
      %vm1740 = vweird.f32 %v1734
      %vm1741 = vmor %vm1739, %vm1740
      %v1742 = vsel %vm1741, %v1734, %v1738
      %v1743 = vand.u32 2147483647, %v994
      %vm1744 = vcmp.eq.f32.partialorder %v1743, 8.507059e+37
      %v1745 = vand.u32 %v994, 2147483648
      %v1746 = vor.u32 1.1754944e-38, %v1745
      %v1747 = vsel %vm1744, %v1746, %v1742
      %v1748 = vmul.f32 1.0, %v1747
      %v1749 = vrcp.pop %v995
      %v1750 = vmul.f32 %v995, %v1749
      %v1751 = vsub.f32 1.0, %v1750
      %v1752 = vmul.f32 %v1749, %v1751
      %v1753 = vadd.f32 %v1749, %v1752
      %vm1754 = vweird.f32 %v995
      %vm1755 = vweird.f32 %v1749
      %vm1756 = vmor %vm1754, %vm1755
      %v1757 = vsel %vm1756, %v1749, %v1753
      %v1758 = vand.u32 2147483647, %v995
      %vm1759 = vcmp.eq.f32.partialorder %v1758, 8.507059e+37
      %v1760 = vand.u32 %v995, 2147483648
      %v1761 = vor.u32 1.1754944e-38, %v1760
      %v1762 = vsel %vm1759, %v1761, %v1757
      %v1763 = vmul.f32 1.0, %v1762
      %v1764 = vrcp.pop %v996
      %v1765 = vmul.f32 %v996, %v1764
      %v1766 = vsub.f32 1.0, %v1765
      %v1767 = vmul.f32 %v1764, %v1766
      %v1768 = vadd.f32 %v1764, %v1767
      %vm1769 = vweird.f32 %v996
      %vm1770 = vweird.f32 %v1764
      %vm1771 = vmor %vm1769, %vm1770
      %v1772 = vsel %vm1771, %v1764, %v1768
      %v1773 = vand.u32 2147483647, %v996
      %vm1774 = vcmp.eq.f32.partialorder %v1773, 8.507059e+37
      %v1775 = vand.u32 %v996, 2147483648
      %v1776 = vor.u32 1.1754944e-38, %v1775
      %v1777 = vsel %vm1774, %v1776, %v1772
      %v1778 = vmul.f32 1.0, %v1777
      %v1779 = vrcp.pop %v997
      %v1780 = vmul.f32 %v997, %v1779
      %v1781 = vsub.f32 1.0, %v1780
      %v1782 = vmul.f32 %v1779, %v1781
      %v1783 = vadd.f32 %v1779, %v1782
      %vm1784 = vweird.f32 %v997
      %vm1785 = vweird.f32 %v1779
      %vm1786 = vmor %vm1784, %vm1785
      %v1787 = vsel %vm1786, %v1779, %v1783
      %v1788 = vand.u32 2147483647, %v997
      %vm1789 = vcmp.eq.f32.partialorder %v1788, 8.507059e+37
      %v1790 = vand.u32 %v997, 2147483648
      %v1791 = vor.u32 1.1754944e-38, %v1790
      %v1792 = vsel %vm1789, %v1791, %v1787
      %v1793 = vmul.f32 1.0, %v1792
      %v1794 = vrcp.pop %v998
      %v1795 = vmul.f32 %v998, %v1794
      %v1796 = vsub.f32 1.0, %v1795
      %v1797 = vmul.f32 %v1794, %v1796
      %v1798 = vadd.f32 %v1794, %v1797
      %vm1799 = vweird.f32 %v998
      %vm1800 = vweird.f32 %v1794
      %vm1801 = vmor %vm1799, %vm1800
      %v1802 = vsel %vm1801, %v1794, %v1798
      %v1803 = vand.u32 2147483647, %v998
      %vm1804 = vcmp.eq.f32.partialorder %v1803, 8.507059e+37
      %v1805 = vand.u32 %v998, 2147483648
      %v1806 = vor.u32 1.1754944e-38, %v1805
      %v1807 = vsel %vm1804, %v1806, %v1802
      %v1808 = vmul.f32 1.0, %v1807
      %v1809 = vmul.f32 %v729, %v1013
      %v1810 = vmul.f32 %v730, %v1028
      %v1811 = vmul.f32 %v731, %v1043
      %v1812 = vmul.f32 %v732, %v1058
      %v1813 = vmul.f32 %v733, %v1073
      %v1814 = vmul.f32 %v734, %v1088
      %v1815 = vmul.f32 %v735, %v1103
      %v1816 = vmul.f32 %v736, %v1118
      %v1817 = vmul.f32 %v737, %v1133
      %v1818 = vmul.f32 %v738, %v1148
      %v1819 = vmul.f32 %v739, %v1163
      %v1820 = vmul.f32 %v740, %v1178
      %v1821 = vmul.f32 %v741, %v1193
      %v1822 = vmul.f32 %v742, %v1208
      %v1823 = vmul.f32 %v743, %v1223
      %v1824 = vmul.f32 %v744, %v1238
      %v1825 = vmul.f32 %v745, %v1253
      %v1826 = vmul.f32 %v746, %v1268
      %v1827 = vmul.f32 %v747, %v1283
      %v1828 = vmul.f32 %v748, %v1298
      %v1829 = vmul.f32 %v749, %v1313
      %v1830 = vmul.f32 %v750, %v1328
      %v1831 = vmul.f32 %v751, %v1343
      %v1832 = vmul.f32 %v752, %v1358
      %v1833 = vmul.f32 %v753, %v1373
      %v1834 = vmul.f32 %v754, %v1388
      %v1835 = vmul.f32 %v755, %v1403
      %v1836 = vmul.f32 %v756, %v1418
      %v1837 = vmul.f32 %v757, %v1433
      %v1838 = vmul.f32 %v758, %v1448
      %v1839 = vmul.f32 %v759, %v1463
      %v1840 = vmul.f32 %v760, %v1478
      %v1841 = vmul.f32 %v761, %v1493
      %v1842 = vmul.f32 %v762, %v1508
      %v1843 = vmul.f32 %v763, %v1523
      %v1844 = vmul.f32 %v764, %v1538
      %v1845 = vmul.f32 %v765, %v1553
      %v1846 = vmul.f32 %v766, %v1568
      %v1847 = vmul.f32 %v767, %v1583
      %v1848 = vmul.f32 %v768, %v1598
      %v1849 = vmul.f32 %v769, %v1613
      %v1850 = vmul.f32 %v770, %v1628
      %v1851 = vmul.f32 %v771, %v1643
      %v1852 = vmul.f32 %v772, %v1658
      %v1853 = vmul.f32 %v773, %v1673
      %v1854 = vmul.f32 %v774, %v1688
      %v1855 = vmul.f32 %v775, %v1703
      %v1856 = vmul.f32 %v776, %v1718
      %v1857 = vmul.f32 %v777, %v1733
      %v1858 = vmul.f32 %v778, %v1748
      %v1859 = vmul.f32 %v779, %v1763
      %v1860 = vmul.f32 %v780, %v1778
      %v1861 = vmul.f32 %v781, %v1793
      %v1862 = vmul.f32 %v782, %v1808
      %v1863 = vadd.s32 %v616, 8
      %v1864 = vadd.s32 %v616, 16
      %vm1865 = vcmp.ge.s32.totalorder %v616, 1
      %vm1866 = vcmp.ge.s32.totalorder %v1863, 1
      %vm1867 = vcmp.ge.s32.totalorder %v1864, 1
      %vm1868 = vmand 0, %vm1865
      %vm1869 = vmand 0, %vm1866
      %vm1870 = vmand 0, %vm1867
      %vm1871 = vmand 1, %vm1865
      %vm1872 = vmand 1, %vm1866
      %vm1873 = vmand 1, %vm1867
      %vm1874 = vcmp.le.s32.totalorder %v616, 16
      %vm1875 = vcmp.le.s32.totalorder %v1863, 16
      %vm1876 = vcmp.le.s32.totalorder %v1864, 16
      %vm1877 = vmand %vm1868, %vm1874
      %vm1878 = vmand %vm1869, %vm1875
      %vm1879 = vmand %vm1870, %vm1876
      %vm1880 = vmand %vm1871, %vm1874
      %vm1881 = vmand %vm1872, %vm1875
      %vm1882 = vmand %vm1873, %vm1876
      %v1883 = vsel %vm1877, 1, 0
      %v1884 = vsel %vm1878, 1, 0
      %v1885 = vsel %vm1879, 1, 0
      %v1886 = vsel %vm1880, 1, 0
      %v1887 = vsel %vm1881, 1, 0
      %v1888 = vsel %vm1882, 1, 0
      %vm1889 = vcmp.eq.s32.totalorder %v1883, 1
      %vm1890 = vcmp.eq.s32.totalorder %v1884, 1
      %vm1891 = vcmp.eq.s32.totalorder %v1885, 1
      %vm1892 = vcmp.eq.s32.totalorder %v1886, 1
      %vm1893 = vcmp.eq.s32.totalorder %v1887, 1
      %vm1894 = vcmp.eq.s32.totalorder %v1888, 1
      %v1895 = vsel %vm1889, %v1809, 0.0
      %v1896 = vsel %vm1890, %v1810, 0.0
      %v1897 = vsel %vm1891, %v1811, 0.0
      %v1898 = vsel %vm1892, %v1812, 0.0
      %v1899 = vsel %vm1893, %v1813, 0.0
      %v1900 = vsel %vm1894, %v1814, 0.0
      %v1901 = vsel %vm1892, %v1815, 0.0
      %v1902 = vsel %vm1893, %v1816, 0.0
      %v1903 = vsel %vm1894, %v1817, 0.0
      %v1904 = vsel %vm1892, %v1818, 0.0
      %v1905 = vsel %vm1893, %v1819, 0.0
      %v1906 = vsel %vm1894, %v1820, 0.0
      %v1907 = vsel %vm1892, %v1821, 0.0
      %v1908 = vsel %vm1893, %v1822, 0.0
      %v1909 = vsel %vm1894, %v1823, 0.0
      %v1910 = vsel %vm1892, %v1824, 0.0
      %v1911 = vsel %vm1893, %v1825, 0.0
      %v1912 = vsel %vm1894, %v1826, 0.0
      %v1913 = vsel %vm1892, %v1827, 0.0
      %v1914 = vsel %vm1893, %v1828, 0.0
      %v1915 = vsel %vm1894, %v1829, 0.0
      %v1916 = vsel %vm1892, %v1830, 0.0
      %v1917 = vsel %vm1893, %v1831, 0.0
      %v1918 = vsel %vm1894, %v1832, 0.0
      %v1919 = vsel %vm1892, %v1833, 0.0
      %v1920 = vsel %vm1893, %v1834, 0.0
      %v1921 = vsel %vm1894, %v1835, 0.0
      %v1922 = vsel %vm1892, %v1836, 0.0
      %v1923 = vsel %vm1893, %v1837, 0.0
      %v1924 = vsel %vm1894, %v1838, 0.0
      %v1925 = vsel %vm1892, %v1839, 0.0
      %v1926 = vsel %vm1893, %v1840, 0.0
      %v1927 = vsel %vm1894, %v1841, 0.0
      %v1928 = vsel %vm1892, %v1842, 0.0
      %v1929 = vsel %vm1893, %v1843, 0.0
      %v1930 = vsel %vm1894, %v1844, 0.0
      %v1931 = vsel %vm1892, %v1845, 0.0
      %v1932 = vsel %vm1893, %v1846, 0.0
      %v1933 = vsel %vm1894, %v1847, 0.0
      %v1934 = vsel %vm1892, %v1848, 0.0
      %v1935 = vsel %vm1893, %v1849, 0.0
      %v1936 = vsel %vm1894, %v1850, 0.0
      %v1937 = vsel %vm1892, %v1851, 0.0
      %v1938 = vsel %vm1893, %v1852, 0.0
      %v1939 = vsel %vm1894, %v1853, 0.0
      %v1940 = vsel %vm1892, %v1854, 0.0
      %v1941 = vsel %vm1893, %v1855, 0.0
      %v1942 = vsel %vm1894, %v1856, 0.0
      %v1943 = vsel %vm1892, %v1857, 0.0
      %v1944 = vsel %vm1893, %v1858, 0.0
      %v1945 = vsel %vm1894, %v1859, 0.0
      %v1946 = vsel %vm1889, %v1860, 0.0
      %v1947 = vsel %vm1890, %v1861, 0.0
      %v1948 = vsel %vm1891, %v1862, 0.0
      %v1949 = vpack.c.bf16 %v1896, %v1895
      %v1950 = vpack.c.bf16 %v1898, %v1897
      %v1951 = vpack.c.bf16 %v1900, %v1899
      %v1952 = vpack.c.bf16 %v1902, %v1901
      %v1953 = vpack.c.bf16 %v1904, %v1903
      %v1954 = vpack.c.bf16 %v1906, %v1905
      %v1955 = vpack.c.bf16 %v1908, %v1907
      %v1956 = vpack.c.bf16 %v1910, %v1909
      %v1957 = vpack.c.bf16 %v1912, %v1911
      %v1958 = vpack.c.bf16 %v1914, %v1913
      %v1959 = vpack.c.bf16 %v1916, %v1915
      %v1960 = vpack.c.bf16 %v1918, %v1917
      %v1961 = vpack.c.bf16 %v1920, %v1919
      %v1962 = vpack.c.bf16 %v1922, %v1921
      %v1963 = vpack.c.bf16 %v1924, %v1923
      %v1964 = vpack.c.bf16 %v1926, %v1925
      %v1965 = vpack.c.bf16 %v1928, %v1927
      %v1966 = vpack.c.bf16 %v1930, %v1929
      %v1967 = vpack.c.bf16 %v1932, %v1931
      %v1968 = vpack.c.bf16 %v1934, %v1933
      %v1969 = vpack.c.bf16 %v1936, %v1935
      %v1970 = vpack.c.bf16 %v1938, %v1937
      %v1971 = vpack.c.bf16 %v1940, %v1939
      %v1972 = vpack.c.bf16 %v1942, %v1941
      %v1973 = vpack.c.bf16 %v1944, %v1943
      %v1974 = vpack.c.bf16 %v1946, %v1945
      %v1975 = vpack.c.bf16 %v1948, %v1947
      %v1976 = vld [vmem:[%s3] sm:$0xf]
      %v1977 = vld [vmem:[%s3 + $0x4] sm:$0xf]
      %v1978 = vld [vmem:[%s3 + $0x8] sm:$0xf]
      %v1979 = vld [vmem:[%s3 + $0xc] sm:$0xf]
      %v1984 = vunpack.c.l.b16 %v1976
      %v1985 = vunpack.c.l.b16 %v1977
      %v1986 = vunpack.c.l.b16 %v1978
      %v1987 = vunpack.c.l.b16 %v1979
      %v1988 = vpack.c.b16 %v1985, %v1984
      %v1989 = vpack.c.b16 %v1987, %v1986
      %v1993 = vsel %vm334, %v1949, 0
      %v1996 = vsel %vm334, %v1950, 0
      %v1999 = vsel %vm334, %v1951, 0
      %v2002 = vsel %vm334, %v1952, 0
      %v2005 = vsel %vm334, %v1953, 0
      %v2008 = vsel %vm334, %v1954, 0
      %v2011 = vsel %vm334, %v1955, 0
      %v2014 = vsel %vm334, %v1956, 0
      %v2017 = vsel %vm334, %v1957, 0
      %v2020 = vsel %vm334, %v1958, 0
      %v2023 = vsel %vm334, %v1959, 0
      %v2026 = vsel %vm334, %v1960, 0
      %v2029 = vsel %vm334, %v1961, 0
      %v2032 = vsel %vm334, %v1962, 0
      %v2035 = vsel %vm334, %v1963, 0
      %v2038 = vsel %vm334, %v1964, 0
      %v2041 = vsel %vm334, %v1965, 0
      %v2044 = vsel %vm334, %v1966, 0
      %v2047 = vsel %vm334, %v1967, 0
      %v2050 = vsel %vm334, %v1968, 0
      %v2053 = vsel %vm334, %v1969, 0
      %v2056 = vsel %vm334, %v1970, 0
      %v2059 = vsel %vm334, %v1971, 0
      %v2062 = vsel %vm334, %v1972, 0
      %v2065 = vsel %vm334, %v1973, 0
      %v2068 = vsel %vm334, %v1974, 0
      %v2071 = vsel %vm334, %v1975, 0
      %2073 = vmatpush.bf16.msra.mxu0 0
      %2074 = vmatpush.bf16.msra.mxu0 0
      %2075 = vmatpush.bf16.msra.mxu0 0
      %2076 = vmatpush.bf16.msra.mxu0 0
      %2077 = vmatpush.bf16.msra.mxu0 0
      %2078 = vmatpush.bf16.msra.mxu0 0
      %2079 = vmatpush.bf16.msra.mxu0 %v1989
      %2080 = vmatpush.bf16.msra.mxu0 %v1988
      %2081 = vmatmul.bf16.gmra.mxu0 %v1993
      %v2082 = vpop.f32.mrf.mxu0
      %v2083 = vadd.f32 0.0, %v2082
      %v2084 = vpop.f32.mrf.mxu0
      %v2085 = vadd.f32 0.0, %v2084
      %2086 = vmatmul.bf16.gmra.mxu0 %v1996
      %v2087 = vpop.f32.mrf.mxu0
      %v2088 = vadd.f32 0.0, %v2087
      %v2089 = vpop.f32.mrf.mxu0
      %v2090 = vadd.f32 0.0, %v2089
      %2091 = vmatmul.bf16.gmra.mxu0 %v1999
      %v2092 = vpop.f32.mrf.mxu0
      %v2093 = vadd.f32 0.0, %v2092
      %v2094 = vpop.f32.mrf.mxu0
      %v2095 = vadd.f32 0.0, %v2094
      %2096 = vmatmul.bf16.gmra.mxu0 %v2002
      %v2097 = vpop.f32.mrf.mxu0
      %v2098 = vadd.f32 0.0, %v2097
      %v2099 = vpop.f32.mrf.mxu0
      %v2100 = vadd.f32 0.0, %v2099
      %2101 = vmatmul.bf16.gmra.mxu0 %v2005
      %v2102 = vpop.f32.mrf.mxu0
      %v2103 = vadd.f32 0.0, %v2102
      %v2104 = vpop.f32.mrf.mxu0
      %v2105 = vadd.f32 0.0, %v2104
      %2106 = vmatmul.bf16.gmra.mxu0 %v2008
      %v2107 = vpop.f32.mrf.mxu0
      %v2108 = vadd.f32 0.0, %v2107
      %v2109 = vpop.f32.mrf.mxu0
      %v2110 = vadd.f32 0.0, %v2109
      %2111 = vmatmul.bf16.gmra.mxu0 %v2011
      %v2112 = vpop.f32.mrf.mxu0
      %v2113 = vadd.f32 0.0, %v2112
      %v2114 = vpop.f32.mrf.mxu0
      %v2115 = vadd.f32 0.0, %v2114
      %2116 = vmatmul.bf16.gmra.mxu0 %v2014
      %v2117 = vpop.f32.mrf.mxu0
      %v2118 = vadd.f32 0.0, %v2117
      %v2119 = vpop.f32.mrf.mxu0
      %v2120 = vadd.f32 0.0, %v2119
      %2121 = vmatmul.bf16.gmra.mxu0 %v2017
      %v2122 = vpop.f32.mrf.mxu0
      %v2123 = vadd.f32 0.0, %v2122
      %v2124 = vpop.f32.mrf.mxu0
      %v2125 = vadd.f32 0.0, %v2124
      %2126 = vmatmul.bf16.gmra.mxu0 %v2020
      %v2127 = vpop.f32.mrf.mxu0
      %v2128 = vadd.f32 0.0, %v2127
      %v2129 = vpop.f32.mrf.mxu0
      %v2130 = vadd.f32 0.0, %v2129
      %2131 = vmatmul.bf16.gmra.mxu0 %v2023
      %v2132 = vpop.f32.mrf.mxu0
      %v2133 = vadd.f32 0.0, %v2132
      %v2134 = vpop.f32.mrf.mxu0
      %v2135 = vadd.f32 0.0, %v2134
      %2136 = vmatmul.bf16.gmra.mxu0 %v2026
      %v2137 = vpop.f32.mrf.mxu0
      %v2138 = vadd.f32 0.0, %v2137
      %v2139 = vpop.f32.mrf.mxu0
      %v2140 = vadd.f32 0.0, %v2139
      %2141 = vmatmul.bf16.gmra.mxu0 %v2029
      %v2142 = vpop.f32.mrf.mxu0
      %v2143 = vadd.f32 0.0, %v2142
      %v2144 = vpop.f32.mrf.mxu0
      %v2145 = vadd.f32 0.0, %v2144
      %2146 = vmatmul.bf16.gmra.mxu0 %v2032
      %v2147 = vpop.f32.mrf.mxu0
      %v2148 = vadd.f32 0.0, %v2147
      %v2149 = vpop.f32.mrf.mxu0
      %v2150 = vadd.f32 0.0, %v2149
      %2151 = vmatmul.bf16.gmra.mxu0 %v2035
      %v2152 = vpop.f32.mrf.mxu0
      %v2153 = vadd.f32 0.0, %v2152
      %v2154 = vpop.f32.mrf.mxu0
      %v2155 = vadd.f32 0.0, %v2154
      %2156 = vmatmul.bf16.gmra.mxu0 %v2038
      %v2157 = vpop.f32.mrf.mxu0
      %v2158 = vadd.f32 0.0, %v2157
      %v2159 = vpop.f32.mrf.mxu0
      %v2160 = vadd.f32 0.0, %v2159
      %2161 = vmatmul.bf16.gmra.mxu0 %v2041
      %v2162 = vpop.f32.mrf.mxu0
      %v2163 = vadd.f32 0.0, %v2162
      %v2164 = vpop.f32.mrf.mxu0
      %v2165 = vadd.f32 0.0, %v2164
      %2166 = vmatmul.bf16.gmra.mxu0 %v2044
      %v2167 = vpop.f32.mrf.mxu0
      %v2168 = vadd.f32 0.0, %v2167
      %v2169 = vpop.f32.mrf.mxu0
      %v2170 = vadd.f32 0.0, %v2169
      %2171 = vmatmul.bf16.gmra.mxu0 %v2047
      %v2172 = vpop.f32.mrf.mxu0
      %v2173 = vadd.f32 0.0, %v2172
      %v2174 = vpop.f32.mrf.mxu0
      %v2175 = vadd.f32 0.0, %v2174
      %2176 = vmatmul.bf16.gmra.mxu0 %v2050
      %v2177 = vpop.f32.mrf.mxu0
      %v2178 = vadd.f32 0.0, %v2177
      %v2179 = vpop.f32.mrf.mxu0
      %v2180 = vadd.f32 0.0, %v2179
      %2181 = vmatmul.bf16.gmra.mxu0 %v2053
      %v2182 = vpop.f32.mrf.mxu0
      %v2183 = vadd.f32 0.0, %v2182
      %v2184 = vpop.f32.mrf.mxu0
      %v2185 = vadd.f32 0.0, %v2184
      %2186 = vmatmul.bf16.gmra.mxu0 %v2056
      %v2187 = vpop.f32.mrf.mxu0
      %v2188 = vadd.f32 0.0, %v2187
      %v2189 = vpop.f32.mrf.mxu0
      %v2190 = vadd.f32 0.0, %v2189
      %2191 = vmatmul.bf16.gmra.mxu0 %v2059
      %v2192 = vpop.f32.mrf.mxu0
      %v2193 = vadd.f32 0.0, %v2192
      %v2194 = vpop.f32.mrf.mxu0
      %v2195 = vadd.f32 0.0, %v2194
      %2196 = vmatmul.bf16.gmra.mxu0 %v2062
      %v2197 = vpop.f32.mrf.mxu0
      %v2198 = vadd.f32 0.0, %v2197
      %v2199 = vpop.f32.mrf.mxu0
      %v2200 = vadd.f32 0.0, %v2199
      %2201 = vmatmul.bf16.gmra.mxu0 %v2065
      %v2202 = vpop.f32.mrf.mxu0
      %v2203 = vadd.f32 0.0, %v2202
      %v2204 = vpop.f32.mrf.mxu0
      %v2205 = vadd.f32 0.0, %v2204
      %2206 = vmatmul.bf16.gmra.mxu0 %v2068
      %v2207 = vpop.f32.mrf.mxu0
      %v2208 = vadd.f32 0.0, %v2207
      %v2209 = vpop.f32.mrf.mxu0
      %v2210 = vadd.f32 0.0, %v2209
      %2211 = vmatmul.bf16.gmra.mxu0 %v2071
      %v2212 = vpop.f32.mrf.mxu0
      %v2213 = vadd.f32 0.0, %v2212
      %v2214 = vpop.f32.mrf.mxu0
      %v2215 = vadd.f32 0.0, %v2214
      %2216 = vdwg.mxu0
      %vm2265 = vcmask 1046528
      %v2266 = vrot.slane %v2083, 1
      %v2267 = vrot.slane %v2085, 1
      %v2268 = vsel %vm2265, %v2266, %v2267
      %v2269 = vrot.slane %v2088, 1
      %v2270 = vsel %vm2265, %v2267, %v2269
      %v2271 = vrot.slane %v2090, 1
      %v2272 = vrot.slane %v2093, 1
      %v2273 = vsel %vm2265, %v2271, %v2272
      %v2274 = vrot.slane %v2095, 1
      %v2275 = vsel %vm2265, %v2272, %v2274
      %v2276 = vrot.slane %v2098, 1
      %v2277 = vrot.slane %v2100, 1
      %v2278 = vsel %vm2265, %v2276, %v2277
      %v2279 = vrot.slane %v2103, 1
      %v2280 = vsel %vm2265, %v2277, %v2279
      %v2281 = vrot.slane %v2105, 1
      %v2282 = vrot.slane %v2108, 1
      %v2283 = vsel %vm2265, %v2281, %v2282
      %v2284 = vrot.slane %v2110, 1
      %v2285 = vsel %vm2265, %v2282, %v2284
      %v2286 = vrot.slane %v2113, 1
      %v2287 = vrot.slane %v2115, 1
      %v2288 = vsel %vm2265, %v2286, %v2287
      %v2289 = vrot.slane %v2118, 1
      %v2290 = vsel %vm2265, %v2287, %v2289
      %v2291 = vrot.slane %v2120, 1
      %v2292 = vrot.slane %v2123, 1
      %v2293 = vsel %vm2265, %v2291, %v2292
      %v2294 = vrot.slane %v2125, 1
      %v2295 = vsel %vm2265, %v2292, %v2294
      %v2296 = vrot.slane %v2128, 1
      %v2297 = vrot.slane %v2130, 1
      %v2298 = vsel %vm2265, %v2296, %v2297
      %v2299 = vrot.slane %v2133, 1
      %v2300 = vsel %vm2265, %v2297, %v2299
      %v2301 = vrot.slane %v2135, 1
      %v2302 = vrot.slane %v2138, 1
      %v2303 = vsel %vm2265, %v2301, %v2302
      %v2304 = vrot.slane %v2140, 1
      %v2305 = vsel %vm2265, %v2302, %v2304
      %v2306 = vrot.slane %v2143, 1
      %v2307 = vrot.slane %v2145, 1
      %v2308 = vsel %vm2265, %v2306, %v2307
      %v2309 = vrot.slane %v2148, 1
      %v2310 = vsel %vm2265, %v2307, %v2309
      %v2311 = vrot.slane %v2150, 1
      %v2312 = vrot.slane %v2153, 1
      %v2313 = vsel %vm2265, %v2311, %v2312
      %v2314 = vrot.slane %v2155, 1
      %v2315 = vsel %vm2265, %v2312, %v2314
      %v2316 = vrot.slane %v2158, 1
      %v2317 = vrot.slane %v2160, 1
      %v2318 = vsel %vm2265, %v2316, %v2317
      %v2319 = vrot.slane %v2163, 1
      %v2320 = vsel %vm2265, %v2317, %v2319
      %v2321 = vrot.slane %v2165, 1
      %v2322 = vrot.slane %v2168, 1
      %v2323 = vsel %vm2265, %v2321, %v2322
      %v2324 = vrot.slane %v2170, 1
      %v2325 = vsel %vm2265, %v2322, %v2324
      %v2326 = vrot.slane %v2173, 1
      %v2327 = vrot.slane %v2175, 1
      %v2328 = vsel %vm2265, %v2326, %v2327
      %v2329 = vrot.slane %v2178, 1
      %v2330 = vsel %vm2265, %v2327, %v2329
      %v2331 = vrot.slane %v2180, 1
      %v2332 = vrot.slane %v2183, 1
      %v2333 = vsel %vm2265, %v2331, %v2332
      %v2334 = vrot.slane %v2185, 1
      %v2335 = vsel %vm2265, %v2332, %v2334
      %v2336 = vrot.slane %v2188, 1
      %v2337 = vrot.slane %v2190, 1
      %v2338 = vsel %vm2265, %v2336, %v2337
      %v2339 = vrot.slane %v2193, 1
      %v2340 = vsel %vm2265, %v2337, %v2339
      %v2341 = vrot.slane %v2195, 1
      %v2342 = vrot.slane %v2198, 1
      %v2343 = vsel %vm2265, %v2341, %v2342
      %v2344 = vrot.slane %v2200, 1
      %v2345 = vsel %vm2265, %v2342, %v2344
      %2346 = vrot.lane.b32.xlu0 %v2268, 124
      %v2347 = vpop.permute.xlu0 %2346
      %2348 = vrot.lane.b32.xlu0 %v2270, 124
      %v2349 = vpop.permute.xlu0 %2348
      %2350 = vrot.lane.b32.xlu0 %v2273, 124
      %v2351 = vpop.permute.xlu0 %2350
      %2352 = vrot.lane.b32.xlu0 %v2275, 124
      %v2353 = vpop.permute.xlu0 %2352
      %2354 = vrot.lane.b32.xlu0 %v2278, 124
      %v2355 = vpop.permute.xlu0 %2354
      %2356 = vrot.lane.b32.xlu0 %v2280, 124
      %v2357 = vpop.permute.xlu0 %2356
      %2358 = vrot.lane.b32.xlu0 %v2283, 124
      %v2359 = vpop.permute.xlu0 %2358
      %2360 = vrot.lane.b32.xlu0 %v2285, 124
      %v2361 = vpop.permute.xlu0 %2360
      %2362 = vrot.lane.b32.xlu0 %v2288, 124
      %v2363 = vpop.permute.xlu0 %2362
      %2364 = vrot.lane.b32.xlu0 %v2290, 124
      %v2365 = vpop.permute.xlu0 %2364
      %2366 = vrot.lane.b32.xlu0 %v2293, 124
      %v2367 = vpop.permute.xlu0 %2366
      %2368 = vrot.lane.b32.xlu0 %v2295, 124
      %v2369 = vpop.permute.xlu0 %2368
      %2370 = vrot.lane.b32.xlu0 %v2298, 124
      %v2371 = vpop.permute.xlu0 %2370
      %2372 = vrot.lane.b32.xlu0 %v2300, 124
      %v2373 = vpop.permute.xlu0 %2372
      %2374 = vrot.lane.b32.xlu0 %v2303, 124
      %v2375 = vpop.permute.xlu0 %2374
      %2376 = vrot.lane.b32.xlu0 %v2305, 124
      %v2377 = vpop.permute.xlu0 %2376
      %2378 = vrot.lane.b32.xlu0 %v2308, 124
      %v2379 = vpop.permute.xlu0 %2378
      %2380 = vrot.lane.b32.xlu0 %v2310, 124
      %v2381 = vpop.permute.xlu0 %2380
      %2382 = vrot.lane.b32.xlu0 %v2313, 124
      %v2383 = vpop.permute.xlu0 %2382
      %2384 = vrot.lane.b32.xlu0 %v2315, 124
      %v2385 = vpop.permute.xlu0 %2384
      %2386 = vrot.lane.b32.xlu0 %v2318, 124
      %v2387 = vpop.permute.xlu0 %2386
      %2388 = vrot.lane.b32.xlu0 %v2320, 124
      %v2389 = vpop.permute.xlu0 %2388
      %2390 = vrot.lane.b32.xlu0 %v2323, 124
      %v2391 = vpop.permute.xlu0 %2390
      %2392 = vrot.lane.b32.xlu0 %v2325, 124
      %v2393 = vpop.permute.xlu0 %2392
      %2394 = vrot.lane.b32.xlu0 %v2328, 124
      %v2395 = vpop.permute.xlu0 %2394
      %2396 = vrot.lane.b32.xlu0 %v2330, 124
      %v2397 = vpop.permute.xlu0 %2396
      %2398 = vrot.lane.b32.xlu0 %v2333, 124
      %v2399 = vpop.permute.xlu0 %2398
      %2400 = vrot.lane.b32.xlu0 %v2335, 124
      %v2401 = vpop.permute.xlu0 %2400
      %2402 = vrot.lane.b32.xlu0 %v2338, 124
      %v2403 = vpop.permute.xlu0 %2402
      %2404 = vrot.lane.b32.xlu0 %v2340, 124
      %v2405 = vpop.permute.xlu0 %2404
      %2406 = vrot.lane.b32.xlu0 %v2343, 124
      %v2407 = vpop.permute.xlu0 %2406
      %2408 = vrot.lane.b32.xlu0 %v2345, 124
      %v2409 = vpop.permute.xlu0 %2408
      %v2442 = vadd.f32 %v2083, %v2347
      %v2443 = vadd.f32 %v2085, %v2349
      %v2444 = vadd.f32 %v2090, %v2351
      %v2445 = vadd.f32 %v2093, %v2353
      %v2446 = vadd.f32 %v2098, %v2355
      %v2447 = vadd.f32 %v2100, %v2357
      %v2448 = vadd.f32 %v2105, %v2359
      %v2449 = vadd.f32 %v2108, %v2361
      %v2450 = vadd.f32 %v2113, %v2363
      %v2451 = vadd.f32 %v2115, %v2365
      %v2452 = vadd.f32 %v2120, %v2367
      %v2453 = vadd.f32 %v2123, %v2369
      %v2454 = vadd.f32 %v2128, %v2371
      %v2455 = vadd.f32 %v2130, %v2373
      %v2456 = vadd.f32 %v2135, %v2375
      %v2457 = vadd.f32 %v2138, %v2377
      %v2458 = vadd.f32 %v2143, %v2379
      %v2459 = vadd.f32 %v2145, %v2381
      %v2460 = vadd.f32 %v2150, %v2383
      %v2461 = vadd.f32 %v2153, %v2385
      %v2462 = vadd.f32 %v2158, %v2387
      %v2463 = vadd.f32 %v2160, %v2389
      %v2464 = vadd.f32 %v2165, %v2391
      %v2465 = vadd.f32 %v2168, %v2393
      %v2466 = vadd.f32 %v2173, %v2395
      %v2467 = vadd.f32 %v2175, %v2397
      %v2468 = vadd.f32 %v2180, %v2399
      %v2469 = vadd.f32 %v2183, %v2401
      %v2470 = vadd.f32 %v2188, %v2403
      %v2471 = vadd.f32 %v2190, %v2405
      %v2472 = vadd.f32 %v2195, %v2407
      %v2473 = vadd.f32 %v2198, %v2409
      %vm2474 = vcmask 1045504
      %v2475 = vrot.slane %v2083, 2
      %v2476 = vrot.slane %v2085, 2
      %v2477 = vsel %vm2474, %v2475, %v2476
      %v2478 = vrot.slane %v2088, 2
      %v2479 = vsel %vm2474, %v2476, %v2478
      %v2480 = vrot.slane %v2090, 2
      %v2481 = vrot.slane %v2093, 2
      %v2482 = vsel %vm2474, %v2480, %v2481
      %v2483 = vrot.slane %v2095, 2
      %v2484 = vsel %vm2474, %v2481, %v2483
      %v2485 = vrot.slane %v2098, 2
      %v2486 = vrot.slane %v2100, 2
      %v2487 = vsel %vm2474, %v2485, %v2486
      %v2488 = vrot.slane %v2103, 2
      %v2489 = vsel %vm2474, %v2486, %v2488
      %v2490 = vrot.slane %v2105, 2
      %v2491 = vrot.slane %v2108, 2
      %v2492 = vsel %vm2474, %v2490, %v2491
      %v2493 = vrot.slane %v2110, 2
      %v2494 = vsel %vm2474, %v2491, %v2493
      %v2495 = vrot.slane %v2113, 2
      %v2496 = vrot.slane %v2115, 2
      %v2497 = vsel %vm2474, %v2495, %v2496
      %v2498 = vrot.slane %v2118, 2
      %v2499 = vsel %vm2474, %v2496, %v2498
      %v2500 = vrot.slane %v2120, 2
      %v2501 = vrot.slane %v2123, 2
      %v2502 = vsel %vm2474, %v2500, %v2501
      %v2503 = vrot.slane %v2125, 2
      %v2504 = vsel %vm2474, %v2501, %v2503
      %v2505 = vrot.slane %v2128, 2
      %v2506 = vrot.slane %v2130, 2
      %v2507 = vsel %vm2474, %v2505, %v2506
      %v2508 = vrot.slane %v2133, 2
      %v2509 = vsel %vm2474, %v2506, %v2508
      %v2510 = vrot.slane %v2135, 2
      %v2511 = vrot.slane %v2138, 2
      %v2512 = vsel %vm2474, %v2510, %v2511
      %v2513 = vrot.slane %v2140, 2
      %v2514 = vsel %vm2474, %v2511, %v2513
      %v2515 = vrot.slane %v2143, 2
      %v2516 = vrot.slane %v2145, 2
      %v2517 = vsel %vm2474, %v2515, %v2516
      %v2518 = vrot.slane %v2148, 2
      %v2519 = vsel %vm2474, %v2516, %v2518
      %v2520 = vrot.slane %v2150, 2
      %v2521 = vrot.slane %v2153, 2
      %v2522 = vsel %vm2474, %v2520, %v2521
      %v2523 = vrot.slane %v2155, 2
      %v2524 = vsel %vm2474, %v2521, %v2523
      %v2525 = vrot.slane %v2158, 2
      %v2526 = vrot.slane %v2160, 2
      %v2527 = vsel %vm2474, %v2525, %v2526
      %v2528 = vrot.slane %v2163, 2
      %v2529 = vsel %vm2474, %v2526, %v2528
      %v2530 = vrot.slane %v2165, 2
      %v2531 = vrot.slane %v2168, 2
      %v2532 = vsel %vm2474, %v2530, %v2531
      %v2533 = vrot.slane %v2170, 2
      %v2534 = vsel %vm2474, %v2531, %v2533
      %v2535 = vrot.slane %v2173, 2
      %v2536 = vrot.slane %v2175, 2
      %v2537 = vsel %vm2474, %v2535, %v2536
      %v2538 = vrot.slane %v2178, 2
      %v2539 = vsel %vm2474, %v2536, %v2538
      %v2540 = vrot.slane %v2180, 2
      %v2541 = vrot.slane %v2183, 2
      %v2542 = vsel %vm2474, %v2540, %v2541
      %v2543 = vrot.slane %v2185, 2
      %v2544 = vsel %vm2474, %v2541, %v2543
      %v2545 = vrot.slane %v2188, 2
      %v2546 = vrot.slane %v2190, 2
      %v2547 = vsel %vm2474, %v2545, %v2546
      %v2548 = vrot.slane %v2193, 2
      %v2549 = vsel %vm2474, %v2546, %v2548
      %v2550 = vrot.slane %v2195, 2
      %v2551 = vrot.slane %v2198, 2
      %v2552 = vsel %vm2474, %v2550, %v2551
      %v2553 = vrot.slane %v2200, 2
      %v2554 = vsel %vm2474, %v2551, %v2553
      %2555 = vrot.lane.b32.xlu0 %v2477, 120
      %v2556 = vpop.permute.xlu0 %2555
      %2557 = vrot.lane.b32.xlu0 %v2479, 120
      %v2558 = vpop.permute.xlu0 %2557
      %2559 = vrot.lane.b32.xlu0 %v2482, 120
      %v2560 = vpop.permute.xlu0 %2559
      %2561 = vrot.lane.b32.xlu0 %v2484, 120
      %v2562 = vpop.permute.xlu0 %2561
      %2563 = vrot.lane.b32.xlu0 %v2487, 120
      %v2564 = vpop.permute.xlu0 %2563
      %2565 = vrot.lane.b32.xlu0 %v2489, 120
      %v2566 = vpop.permute.xlu0 %2565
      %2567 = vrot.lane.b32.xlu0 %v2492, 120
      %v2568 = vpop.permute.xlu0 %2567
      %2569 = vrot.lane.b32.xlu0 %v2494, 120
      %v2570 = vpop.permute.xlu0 %2569
      %2571 = vrot.lane.b32.xlu0 %v2497, 120
      %v2572 = vpop.permute.xlu0 %2571
      %2573 = vrot.lane.b32.xlu0 %v2499, 120
      %v2574 = vpop.permute.xlu0 %2573
      %2575 = vrot.lane.b32.xlu0 %v2502, 120
      %v2576 = vpop.permute.xlu0 %2575
      %2577 = vrot.lane.b32.xlu0 %v2504, 120
      %v2578 = vpop.permute.xlu0 %2577
      %2579 = vrot.lane.b32.xlu0 %v2507, 120
      %v2580 = vpop.permute.xlu0 %2579
      %2581 = vrot.lane.b32.xlu0 %v2509, 120
      %v2582 = vpop.permute.xlu0 %2581
      %2583 = vrot.lane.b32.xlu0 %v2512, 120
      %v2584 = vpop.permute.xlu0 %2583
      %2585 = vrot.lane.b32.xlu0 %v2514, 120
      %v2586 = vpop.permute.xlu0 %2585
      %2587 = vrot.lane.b32.xlu0 %v2517, 120
      %v2588 = vpop.permute.xlu0 %2587
      %2589 = vrot.lane.b32.xlu0 %v2519, 120
      %v2590 = vpop.permute.xlu0 %2589
      %2591 = vrot.lane.b32.xlu0 %v2522, 120
      %v2592 = vpop.permute.xlu0 %2591
      %2593 = vrot.lane.b32.xlu0 %v2524, 120
      %v2594 = vpop.permute.xlu0 %2593
      %2595 = vrot.lane.b32.xlu0 %v2527, 120
      %v2596 = vpop.permute.xlu0 %2595
      %2597 = vrot.lane.b32.xlu0 %v2529, 120
      %v2598 = vpop.permute.xlu0 %2597
      %2599 = vrot.lane.b32.xlu0 %v2532, 120
      %v2600 = vpop.permute.xlu0 %2599
      %2601 = vrot.lane.b32.xlu0 %v2534, 120
      %v2602 = vpop.permute.xlu0 %2601
      %2603 = vrot.lane.b32.xlu0 %v2537, 120
      %v2604 = vpop.permute.xlu0 %2603
      %2605 = vrot.lane.b32.xlu0 %v2539, 120
      %v2606 = vpop.permute.xlu0 %2605
      %2607 = vrot.lane.b32.xlu0 %v2542, 120
      %v2608 = vpop.permute.xlu0 %2607
      %2609 = vrot.lane.b32.xlu0 %v2544, 120
      %v2610 = vpop.permute.xlu0 %2609
      %2611 = vrot.lane.b32.xlu0 %v2547, 120
      %v2612 = vpop.permute.xlu0 %2611
      %2613 = vrot.lane.b32.xlu0 %v2549, 120
      %v2614 = vpop.permute.xlu0 %2613
      %2615 = vrot.lane.b32.xlu0 %v2552, 120
      %v2616 = vpop.permute.xlu0 %2615
      %2617 = vrot.lane.b32.xlu0 %v2554, 120
      %v2618 = vpop.permute.xlu0 %2617
      %v2651 = vadd.f32 %v2442, %v2556
      %v2652 = vadd.f32 %v2443, %v2558
      %v2653 = vadd.f32 %v2444, %v2560
      %v2654 = vadd.f32 %v2445, %v2562
      %v2655 = vadd.f32 %v2446, %v2564
      %v2656 = vadd.f32 %v2447, %v2566
      %v2657 = vadd.f32 %v2448, %v2568
      %v2658 = vadd.f32 %v2449, %v2570
      %v2659 = vadd.f32 %v2450, %v2572
      %v2660 = vadd.f32 %v2451, %v2574
      %v2661 = vadd.f32 %v2452, %v2576
      %v2662 = vadd.f32 %v2453, %v2578
      %v2663 = vadd.f32 %v2454, %v2580
      %v2664 = vadd.f32 %v2455, %v2582
      %v2665 = vadd.f32 %v2456, %v2584
      %v2666 = vadd.f32 %v2457, %v2586
      %v2667 = vadd.f32 %v2458, %v2588
      %v2668 = vadd.f32 %v2459, %v2590
      %v2669 = vadd.f32 %v2460, %v2592
      %v2670 = vadd.f32 %v2461, %v2594
      %v2671 = vadd.f32 %v2462, %v2596
      %v2672 = vadd.f32 %v2463, %v2598
      %v2673 = vadd.f32 %v2464, %v2600
      %v2674 = vadd.f32 %v2465, %v2602
      %v2675 = vadd.f32 %v2466, %v2604
      %v2676 = vadd.f32 %v2467, %v2606
      %v2677 = vadd.f32 %v2468, %v2608
      %v2678 = vadd.f32 %v2469, %v2610
      %v2679 = vadd.f32 %v2470, %v2612
      %v2680 = vadd.f32 %v2471, %v2614
      %v2681 = vadd.f32 %v2472, %v2616
      %v2682 = vadd.f32 %v2473, %v2618
      %2685 = vrot.lane.b32.xlu0 %v2090, 116
      %v2686 = vpop.permute.xlu0 %2685
      %2687 = vrot.lane.b32.xlu0 %v2093, 116
      %v2688 = vpop.permute.xlu0 %2687
      %2689 = vrot.lane.b32.xlu0 %v2098, 116
      %v2690 = vpop.permute.xlu0 %2689
      %2691 = vrot.lane.b32.xlu0 %v2100, 116
      %v2692 = vpop.permute.xlu0 %2691
      %2693 = vrot.lane.b32.xlu0 %v2105, 116
      %v2694 = vpop.permute.xlu0 %2693
      %2695 = vrot.lane.b32.xlu0 %v2108, 116
      %v2696 = vpop.permute.xlu0 %2695
      %2697 = vrot.lane.b32.xlu0 %v2113, 116
      %v2698 = vpop.permute.xlu0 %2697
      %2699 = vrot.lane.b32.xlu0 %v2115, 116
      %v2700 = vpop.permute.xlu0 %2699
      %2701 = vrot.lane.b32.xlu0 %v2120, 116
      %v2702 = vpop.permute.xlu0 %2701
      %2703 = vrot.lane.b32.xlu0 %v2123, 116
      %v2704 = vpop.permute.xlu0 %2703
      %2705 = vrot.lane.b32.xlu0 %v2128, 116
      %v2706 = vpop.permute.xlu0 %2705
      %2707 = vrot.lane.b32.xlu0 %v2130, 116
      %v2708 = vpop.permute.xlu0 %2707
      %2709 = vrot.lane.b32.xlu0 %v2135, 116
      %v2710 = vpop.permute.xlu0 %2709
      %2711 = vrot.lane.b32.xlu0 %v2138, 116
      %v2712 = vpop.permute.xlu0 %2711
      %2713 = vrot.lane.b32.xlu0 %v2143, 116
      %v2714 = vpop.permute.xlu0 %2713
      %2715 = vrot.lane.b32.xlu0 %v2145, 116
      %v2716 = vpop.permute.xlu0 %2715
      %2717 = vrot.lane.b32.xlu0 %v2150, 116
      %v2718 = vpop.permute.xlu0 %2717
      %2719 = vrot.lane.b32.xlu0 %v2153, 116
      %v2720 = vpop.permute.xlu0 %2719
      %2721 = vrot.lane.b32.xlu0 %v2158, 116
      %v2722 = vpop.permute.xlu0 %2721
      %2723 = vrot.lane.b32.xlu0 %v2160, 116
      %v2724 = vpop.permute.xlu0 %2723
      %2725 = vrot.lane.b32.xlu0 %v2165, 116
      %v2726 = vpop.permute.xlu0 %2725
      %2727 = vrot.lane.b32.xlu0 %v2168, 116
      %v2728 = vpop.permute.xlu0 %2727
      %2729 = vrot.lane.b32.xlu0 %v2173, 116
      %v2730 = vpop.permute.xlu0 %2729
      %2731 = vrot.lane.b32.xlu0 %v2175, 116
      %v2732 = vpop.permute.xlu0 %2731
      %2733 = vrot.lane.b32.xlu0 %v2180, 116
      %v2734 = vpop.permute.xlu0 %2733
      %2735 = vrot.lane.b32.xlu0 %v2183, 116
      %v2736 = vpop.permute.xlu0 %2735
      %2737 = vrot.lane.b32.xlu0 %v2188, 116
      %v2738 = vpop.permute.xlu0 %2737
      %2739 = vrot.lane.b32.xlu0 %v2190, 116
      %v2740 = vpop.permute.xlu0 %2739
      %2741 = vrot.lane.b32.xlu0 %v2195, 116
      %v2742 = vpop.permute.xlu0 %2741
      %2743 = vrot.lane.b32.xlu0 %v2198, 116
      %v2744 = vpop.permute.xlu0 %2743
      %2745 = vrot.lane.b32.xlu0 %v2203, 116
      %v2746 = vpop.permute.xlu0 %2745
      %2747 = vrot.lane.b32.xlu0 %v2205, 116
      %v2748 = vpop.permute.xlu0 %2747
      %v2781 = vadd.f32 %v2651, %v2686
      %v2782 = vadd.f32 %v2652, %v2688
      %v2783 = vadd.f32 %v2653, %v2690
      %v2784 = vadd.f32 %v2654, %v2692
      %v2785 = vadd.f32 %v2655, %v2694
      %v2786 = vadd.f32 %v2656, %v2696
      %v2787 = vadd.f32 %v2657, %v2698
      %v2788 = vadd.f32 %v2658, %v2700
      %v2789 = vadd.f32 %v2659, %v2702
      %v2790 = vadd.f32 %v2660, %v2704
      %v2791 = vadd.f32 %v2661, %v2706
      %v2792 = vadd.f32 %v2662, %v2708
      %v2793 = vadd.f32 %v2663, %v2710
      %v2794 = vadd.f32 %v2664, %v2712
      %v2795 = vadd.f32 %v2665, %v2714
      %v2796 = vadd.f32 %v2666, %v2716
      %v2797 = vadd.f32 %v2667, %v2718
      %v2798 = vadd.f32 %v2668, %v2720
      %v2799 = vadd.f32 %v2669, %v2722
      %v2800 = vadd.f32 %v2670, %v2724
      %v2801 = vadd.f32 %v2671, %v2726
      %v2802 = vadd.f32 %v2672, %v2728
      %v2803 = vadd.f32 %v2673, %v2730
      %v2804 = vadd.f32 %v2674, %v2732
      %v2805 = vadd.f32 %v2675, %v2734
      %v2806 = vadd.f32 %v2676, %v2736
      %v2807 = vadd.f32 %v2677, %v2738
      %v2808 = vadd.f32 %v2678, %v2740
      %v2809 = vadd.f32 %v2679, %v2742
      %v2810 = vadd.f32 %v2680, %v2744
      %v2811 = vadd.f32 %v2681, %v2746
      %v2812 = vadd.f32 %v2682, %v2748
      %v2814 = vrot.slane %v2203, 1
      %v2815 = vrot.slane %v2205, 1
      %v2816 = vsel %vm2265, %v2814, %v2815
      %v2817 = vrot.slane %v2208, 1
      %v2818 = vsel %vm2265, %v2815, %v2817
      %2819 = vrot.lane.b32.xlu0 %v2273, 112
      %v2820 = vpop.permute.xlu0 %2819
      %2821 = vrot.lane.b32.xlu0 %v2275, 112
      %v2822 = vpop.permute.xlu0 %2821
      %2823 = vrot.lane.b32.xlu0 %v2278, 112
      %v2824 = vpop.permute.xlu0 %2823
      %2825 = vrot.lane.b32.xlu0 %v2280, 112
      %v2826 = vpop.permute.xlu0 %2825
      %2827 = vrot.lane.b32.xlu0 %v2283, 112
      %v2828 = vpop.permute.xlu0 %2827
      %2829 = vrot.lane.b32.xlu0 %v2285, 112
      %v2830 = vpop.permute.xlu0 %2829
      %2831 = vrot.lane.b32.xlu0 %v2288, 112
      %v2832 = vpop.permute.xlu0 %2831
      %2833 = vrot.lane.b32.xlu0 %v2290, 112
      %v2834 = vpop.permute.xlu0 %2833
      %2835 = vrot.lane.b32.xlu0 %v2293, 112
      %v2836 = vpop.permute.xlu0 %2835
      %2837 = vrot.lane.b32.xlu0 %v2295, 112
      %v2838 = vpop.permute.xlu0 %2837
      %2839 = vrot.lane.b32.xlu0 %v2298, 112
      %v2840 = vpop.permute.xlu0 %2839
      %2841 = vrot.lane.b32.xlu0 %v2300, 112
      %v2842 = vpop.permute.xlu0 %2841
      %2843 = vrot.lane.b32.xlu0 %v2303, 112
      %v2844 = vpop.permute.xlu0 %2843
      %2845 = vrot.lane.b32.xlu0 %v2305, 112
      %v2846 = vpop.permute.xlu0 %2845
      %2847 = vrot.lane.b32.xlu0 %v2308, 112
      %v2848 = vpop.permute.xlu0 %2847
      %2849 = vrot.lane.b32.xlu0 %v2310, 112
      %v2850 = vpop.permute.xlu0 %2849
      %2851 = vrot.lane.b32.xlu0 %v2313, 112
      %v2852 = vpop.permute.xlu0 %2851
      %2853 = vrot.lane.b32.xlu0 %v2315, 112
      %v2854 = vpop.permute.xlu0 %2853
      %2855 = vrot.lane.b32.xlu0 %v2318, 112
      %v2856 = vpop.permute.xlu0 %2855
      %2857 = vrot.lane.b32.xlu0 %v2320, 112
      %v2858 = vpop.permute.xlu0 %2857
      %2859 = vrot.lane.b32.xlu0 %v2323, 112
      %v2860 = vpop.permute.xlu0 %2859
      %2861 = vrot.lane.b32.xlu0 %v2325, 112
      %v2862 = vpop.permute.xlu0 %2861
      %2863 = vrot.lane.b32.xlu0 %v2328, 112
      %v2864 = vpop.permute.xlu0 %2863
      %2865 = vrot.lane.b32.xlu0 %v2330, 112
      %v2866 = vpop.permute.xlu0 %2865
      %2867 = vrot.lane.b32.xlu0 %v2333, 112
      %v2868 = vpop.permute.xlu0 %2867
      %2869 = vrot.lane.b32.xlu0 %v2335, 112
      %v2870 = vpop.permute.xlu0 %2869
      %2871 = vrot.lane.b32.xlu0 %v2338, 112
      %v2872 = vpop.permute.xlu0 %2871
      %2873 = vrot.lane.b32.xlu0 %v2340, 112
      %v2874 = vpop.permute.xlu0 %2873
      %2875 = vrot.lane.b32.xlu0 %v2343, 112
      %v2876 = vpop.permute.xlu0 %2875
      %2877 = vrot.lane.b32.xlu0 %v2345, 112
      %v2878 = vpop.permute.xlu0 %2877
      %2879 = vrot.lane.b32.xlu0 %v2816, 112
      %v2880 = vpop.permute.xlu0 %2879
      %2881 = vrot.lane.b32.xlu0 %v2818, 112
      %v2882 = vpop.permute.xlu0 %2881
      %v2915 = vadd.f32 %v2781, %v2820
      %v2916 = vadd.f32 %v2782, %v2822
      %v2917 = vadd.f32 %v2783, %v2824
      %v2918 = vadd.f32 %v2784, %v2826
      %v2919 = vadd.f32 %v2785, %v2828
      %v2920 = vadd.f32 %v2786, %v2830
      %v2921 = vadd.f32 %v2787, %v2832
      %v2922 = vadd.f32 %v2788, %v2834
      %v2923 = vadd.f32 %v2789, %v2836
      %v2924 = vadd.f32 %v2790, %v2838
      %v2925 = vadd.f32 %v2791, %v2840
      %v2926 = vadd.f32 %v2792, %v2842
      %v2927 = vadd.f32 %v2793, %v2844
      %v2928 = vadd.f32 %v2794, %v2846
      %v2929 = vadd.f32 %v2795, %v2848
      %v2930 = vadd.f32 %v2796, %v2850
      %v2931 = vadd.f32 %v2797, %v2852
      %v2932 = vadd.f32 %v2798, %v2854
      %v2933 = vadd.f32 %v2799, %v2856
      %v2934 = vadd.f32 %v2800, %v2858
      %v2935 = vadd.f32 %v2801, %v2860
      %v2936 = vadd.f32 %v2802, %v2862
      %v2937 = vadd.f32 %v2803, %v2864
      %v2938 = vadd.f32 %v2804, %v2866
      %v2939 = vadd.f32 %v2805, %v2868
      %v2940 = vadd.f32 %v2806, %v2870
      %v2941 = vadd.f32 %v2807, %v2872
      %v2942 = vadd.f32 %v2808, %v2874
      %v2943 = vadd.f32 %v2809, %v2876
      %v2944 = vadd.f32 %v2810, %v2878
      %v2945 = vadd.f32 %v2811, %v2880
      %v2946 = vadd.f32 %v2812, %v2882
      %v2947 = vrot.slane %v2203, 2
      %v2948 = vrot.slane %v2205, 2
      %v2949 = vsel %vm2474, %v2947, %v2948
      %v2950 = vrot.slane %v2208, 2
      %v2951 = vsel %vm2474, %v2948, %v2950
      %2952 = vrot.lane.b32.xlu0 %v2482, 108
      %v2953 = vpop.permute.xlu0 %2952
      %2954 = vrot.lane.b32.xlu0 %v2484, 108
      %v2955 = vpop.permute.xlu0 %2954
      %2956 = vrot.lane.b32.xlu0 %v2487, 108
      %v2957 = vpop.permute.xlu0 %2956
      %2958 = vrot.lane.b32.xlu0 %v2489, 108
      %v2959 = vpop.permute.xlu0 %2958
      %2960 = vrot.lane.b32.xlu0 %v2492, 108
      %v2961 = vpop.permute.xlu0 %2960
      %2962 = vrot.lane.b32.xlu0 %v2494, 108
      %v2963 = vpop.permute.xlu0 %2962
      %2964 = vrot.lane.b32.xlu0 %v2497, 108
      %v2965 = vpop.permute.xlu0 %2964
      %2966 = vrot.lane.b32.xlu0 %v2499, 108
      %v2967 = vpop.permute.xlu0 %2966
      %2968 = vrot.lane.b32.xlu0 %v2502, 108
      %v2969 = vpop.permute.xlu0 %2968
      %2970 = vrot.lane.b32.xlu0 %v2504, 108
      %v2971 = vpop.permute.xlu0 %2970
      %2972 = vrot.lane.b32.xlu0 %v2507, 108
      %v2973 = vpop.permute.xlu0 %2972
      %2974 = vrot.lane.b32.xlu0 %v2509, 108
      %v2975 = vpop.permute.xlu0 %2974
      %2976 = vrot.lane.b32.xlu0 %v2512, 108
      %v2977 = vpop.permute.xlu0 %2976
      %2978 = vrot.lane.b32.xlu0 %v2514, 108
      %v2979 = vpop.permute.xlu0 %2978
      %2980 = vrot.lane.b32.xlu0 %v2517, 108
      %v2981 = vpop.permute.xlu0 %2980
      %2982 = vrot.lane.b32.xlu0 %v2519, 108
      %v2983 = vpop.permute.xlu0 %2982
      %2984 = vrot.lane.b32.xlu0 %v2522, 108
      %v2985 = vpop.permute.xlu0 %2984
      %2986 = vrot.lane.b32.xlu0 %v2524, 108
      %v2987 = vpop.permute.xlu0 %2986
      %2988 = vrot.lane.b32.xlu0 %v2527, 108
      %v2989 = vpop.permute.xlu0 %2988
      %2990 = vrot.lane.b32.xlu0 %v2529, 108
      %v2991 = vpop.permute.xlu0 %2990
      %2992 = vrot.lane.b32.xlu0 %v2532, 108
      %v2993 = vpop.permute.xlu0 %2992
      %2994 = vrot.lane.b32.xlu0 %v2534, 108
      %v2995 = vpop.permute.xlu0 %2994
      %2996 = vrot.lane.b32.xlu0 %v2537, 108
      %v2997 = vpop.permute.xlu0 %2996
      %2998 = vrot.lane.b32.xlu0 %v2539, 108
      %v2999 = vpop.permute.xlu0 %2998
      %3000 = vrot.lane.b32.xlu0 %v2542, 108
      %v3001 = vpop.permute.xlu0 %3000
      %3002 = vrot.lane.b32.xlu0 %v2544, 108
      %v3003 = vpop.permute.xlu0 %3002
      %3004 = vrot.lane.b32.xlu0 %v2547, 108
      %v3005 = vpop.permute.xlu0 %3004
      %3006 = vrot.lane.b32.xlu0 %v2549, 108
      %v3007 = vpop.permute.xlu0 %3006
      %3008 = vrot.lane.b32.xlu0 %v2552, 108
      %v3009 = vpop.permute.xlu0 %3008
      %3010 = vrot.lane.b32.xlu0 %v2554, 108
      %v3011 = vpop.permute.xlu0 %3010
      %3012 = vrot.lane.b32.xlu0 %v2949, 108
      %v3013 = vpop.permute.xlu0 %3012
      %3014 = vrot.lane.b32.xlu0 %v2951, 108
      %v3015 = vpop.permute.xlu0 %3014
      %v3048 = vadd.f32 %v2915, %v2953
      %v3049 = vadd.f32 %v2916, %v2955
      %v3050 = vadd.f32 %v2917, %v2957
      %v3051 = vadd.f32 %v2918, %v2959
      %v3052 = vadd.f32 %v2919, %v2961
      %v3053 = vadd.f32 %v2920, %v2963
      %v3054 = vadd.f32 %v2921, %v2965
      %v3055 = vadd.f32 %v2922, %v2967
      %v3056 = vadd.f32 %v2923, %v2969
      %v3057 = vadd.f32 %v2924, %v2971
      %v3058 = vadd.f32 %v2925, %v2973
      %v3059 = vadd.f32 %v2926, %v2975
      %v3060 = vadd.f32 %v2927, %v2977
      %v3061 = vadd.f32 %v2928, %v2979
      %v3062 = vadd.f32 %v2929, %v2981
      %v3063 = vadd.f32 %v2930, %v2983
      %v3064 = vadd.f32 %v2931, %v2985
      %v3065 = vadd.f32 %v2932, %v2987
      %v3066 = vadd.f32 %v2933, %v2989
      %v3067 = vadd.f32 %v2934, %v2991
      %v3068 = vadd.f32 %v2935, %v2993
      %v3069 = vadd.f32 %v2936, %v2995
      %v3070 = vadd.f32 %v2937, %v2997
      %v3071 = vadd.f32 %v2938, %v2999
      %v3072 = vadd.f32 %v2939, %v3001
      %v3073 = vadd.f32 %v2940, %v3003
      %v3074 = vadd.f32 %v2941, %v3005
      %v3075 = vadd.f32 %v2942, %v3007
      %v3076 = vadd.f32 %v2943, %v3009
      %v3077 = vadd.f32 %v2944, %v3011
      %v3078 = vadd.f32 %v2945, %v3013
      %v3079 = vadd.f32 %v2946, %v3015
      %3082 = vrot.lane.b32.xlu0 %v2098, 104
      %v3083 = vpop.permute.xlu0 %3082
      %3084 = vrot.lane.b32.xlu0 %v2100, 104
      %v3085 = vpop.permute.xlu0 %3084
      %3086 = vrot.lane.b32.xlu0 %v2105, 104
      %v3087 = vpop.permute.xlu0 %3086
      %3088 = vrot.lane.b32.xlu0 %v2108, 104
      %v3089 = vpop.permute.xlu0 %3088
      %3090 = vrot.lane.b32.xlu0 %v2113, 104
      %v3091 = vpop.permute.xlu0 %3090
      %3092 = vrot.lane.b32.xlu0 %v2115, 104
      %v3093 = vpop.permute.xlu0 %3092
      %3094 = vrot.lane.b32.xlu0 %v2120, 104
      %v3095 = vpop.permute.xlu0 %3094
      %3096 = vrot.lane.b32.xlu0 %v2123, 104
      %v3097 = vpop.permute.xlu0 %3096
      %3098 = vrot.lane.b32.xlu0 %v2128, 104
      %v3099 = vpop.permute.xlu0 %3098
      %3100 = vrot.lane.b32.xlu0 %v2130, 104
      %v3101 = vpop.permute.xlu0 %3100
      %3102 = vrot.lane.b32.xlu0 %v2135, 104
      %v3103 = vpop.permute.xlu0 %3102
      %3104 = vrot.lane.b32.xlu0 %v2138, 104
      %v3105 = vpop.permute.xlu0 %3104
      %3106 = vrot.lane.b32.xlu0 %v2143, 104
      %v3107 = vpop.permute.xlu0 %3106
      %3108 = vrot.lane.b32.xlu0 %v2145, 104
      %v3109 = vpop.permute.xlu0 %3108
      %3110 = vrot.lane.b32.xlu0 %v2150, 104
      %v3111 = vpop.permute.xlu0 %3110
      %3112 = vrot.lane.b32.xlu0 %v2153, 104
      %v3113 = vpop.permute.xlu0 %3112
      %3114 = vrot.lane.b32.xlu0 %v2158, 104
      %v3115 = vpop.permute.xlu0 %3114
      %3116 = vrot.lane.b32.xlu0 %v2160, 104
      %v3117 = vpop.permute.xlu0 %3116
      %3118 = vrot.lane.b32.xlu0 %v2165, 104
      %v3119 = vpop.permute.xlu0 %3118
      %3120 = vrot.lane.b32.xlu0 %v2168, 104
      %v3121 = vpop.permute.xlu0 %3120
      %3122 = vrot.lane.b32.xlu0 %v2173, 104
      %v3123 = vpop.permute.xlu0 %3122
      %3124 = vrot.lane.b32.xlu0 %v2175, 104
      %v3125 = vpop.permute.xlu0 %3124
      %3126 = vrot.lane.b32.xlu0 %v2180, 104
      %v3127 = vpop.permute.xlu0 %3126
      %3128 = vrot.lane.b32.xlu0 %v2183, 104
      %v3129 = vpop.permute.xlu0 %3128
      %3130 = vrot.lane.b32.xlu0 %v2188, 104
      %v3131 = vpop.permute.xlu0 %3130
      %3132 = vrot.lane.b32.xlu0 %v2190, 104
      %v3133 = vpop.permute.xlu0 %3132
      %3134 = vrot.lane.b32.xlu0 %v2195, 104
      %v3135 = vpop.permute.xlu0 %3134
      %3136 = vrot.lane.b32.xlu0 %v2198, 104
      %v3137 = vpop.permute.xlu0 %3136
      %3138 = vrot.lane.b32.xlu0 %v2203, 104
      %v3139 = vpop.permute.xlu0 %3138
      %3140 = vrot.lane.b32.xlu0 %v2205, 104
      %v3141 = vpop.permute.xlu0 %3140
      %3142 = vrot.lane.b32.xlu0 %v2210, 104
      %v3143 = vpop.permute.xlu0 %3142
      %3144 = vrot.lane.b32.xlu0 %v2213, 104
      %v3145 = vpop.permute.xlu0 %3144
      %v3178 = vadd.f32 %v3048, %v3083
      %v3179 = vadd.f32 %v3049, %v3085
      %v3180 = vadd.f32 %v3050, %v3087
      %v3181 = vadd.f32 %v3051, %v3089
      %v3182 = vadd.f32 %v3052, %v3091
      %v3183 = vadd.f32 %v3053, %v3093
      %v3184 = vadd.f32 %v3054, %v3095
      %v3185 = vadd.f32 %v3055, %v3097
      %v3186 = vadd.f32 %v3056, %v3099
      %v3187 = vadd.f32 %v3057, %v3101
      %v3188 = vadd.f32 %v3058, %v3103
      %v3189 = vadd.f32 %v3059, %v3105
      %v3190 = vadd.f32 %v3060, %v3107
      %v3191 = vadd.f32 %v3061, %v3109
      %v3192 = vadd.f32 %v3062, %v3111
      %v3193 = vadd.f32 %v3063, %v3113
      %v3194 = vadd.f32 %v3064, %v3115
      %v3195 = vadd.f32 %v3065, %v3117
      %v3196 = vadd.f32 %v3066, %v3119
      %v3197 = vadd.f32 %v3067, %v3121
      %v3198 = vadd.f32 %v3068, %v3123
      %v3199 = vadd.f32 %v3069, %v3125
      %v3200 = vadd.f32 %v3070, %v3127
      %v3201 = vadd.f32 %v3071, %v3129
      %v3202 = vadd.f32 %v3072, %v3131
      %v3203 = vadd.f32 %v3073, %v3133
      %v3204 = vadd.f32 %v3074, %v3135
      %v3205 = vadd.f32 %v3075, %v3137
      %v3206 = vadd.f32 %v3076, %v3139
      %v3207 = vadd.f32 %v3077, %v3141
      %v3208 = vadd.f32 %v3078, %v3143
      %v3209 = vadd.f32 %v3079, %v3145
      %v3211 = vrot.slane %v2210, 1
      %v3212 = vrot.slane %v2213, 1
      %v3213 = vsel %vm2265, %v3211, %v3212
      %v3214 = vrot.slane %v2215, 1
      %v3215 = vsel %vm2265, %v3212, %v3214
      %3216 = vrot.lane.b32.xlu0 %v2278, 100
      %v3217 = vpop.permute.xlu0 %3216
      %3218 = vrot.lane.b32.xlu0 %v2280, 100
      %v3219 = vpop.permute.xlu0 %3218
      %3220 = vrot.lane.b32.xlu0 %v2283, 100
      %v3221 = vpop.permute.xlu0 %3220
      %3222 = vrot.lane.b32.xlu0 %v2285, 100
      %v3223 = vpop.permute.xlu0 %3222
      %3224 = vrot.lane.b32.xlu0 %v2288, 100
      %v3225 = vpop.permute.xlu0 %3224
      %3226 = vrot.lane.b32.xlu0 %v2290, 100
      %v3227 = vpop.permute.xlu0 %3226
      %3228 = vrot.lane.b32.xlu0 %v2293, 100
      %v3229 = vpop.permute.xlu0 %3228
      %3230 = vrot.lane.b32.xlu0 %v2295, 100
      %v3231 = vpop.permute.xlu0 %3230
      %3232 = vrot.lane.b32.xlu0 %v2298, 100
      %v3233 = vpop.permute.xlu0 %3232
      %3234 = vrot.lane.b32.xlu0 %v2300, 100
      %v3235 = vpop.permute.xlu0 %3234
      %3236 = vrot.lane.b32.xlu0 %v2303, 100
      %v3237 = vpop.permute.xlu0 %3236
      %3238 = vrot.lane.b32.xlu0 %v2305, 100
      %v3239 = vpop.permute.xlu0 %3238
      %3240 = vrot.lane.b32.xlu0 %v2308, 100
      %v3241 = vpop.permute.xlu0 %3240
      %3242 = vrot.lane.b32.xlu0 %v2310, 100
      %v3243 = vpop.permute.xlu0 %3242
      %3244 = vrot.lane.b32.xlu0 %v2313, 100
      %v3245 = vpop.permute.xlu0 %3244
      %3246 = vrot.lane.b32.xlu0 %v2315, 100
      %v3247 = vpop.permute.xlu0 %3246
      %3248 = vrot.lane.b32.xlu0 %v2318, 100
      %v3249 = vpop.permute.xlu0 %3248
      %3250 = vrot.lane.b32.xlu0 %v2320, 100
      %v3251 = vpop.permute.xlu0 %3250
      %3252 = vrot.lane.b32.xlu0 %v2323, 100
      %v3253 = vpop.permute.xlu0 %3252
      %3254 = vrot.lane.b32.xlu0 %v2325, 100
      %v3255 = vpop.permute.xlu0 %3254
      %3256 = vrot.lane.b32.xlu0 %v2328, 100
      %v3257 = vpop.permute.xlu0 %3256
      %3258 = vrot.lane.b32.xlu0 %v2330, 100
      %v3259 = vpop.permute.xlu0 %3258
      %3260 = vrot.lane.b32.xlu0 %v2333, 100
      %v3261 = vpop.permute.xlu0 %3260
      %3262 = vrot.lane.b32.xlu0 %v2335, 100
      %v3263 = vpop.permute.xlu0 %3262
      %3264 = vrot.lane.b32.xlu0 %v2338, 100
      %v3265 = vpop.permute.xlu0 %3264
      %3266 = vrot.lane.b32.xlu0 %v2340, 100
      %v3267 = vpop.permute.xlu0 %3266
      %3268 = vrot.lane.b32.xlu0 %v2343, 100
      %v3269 = vpop.permute.xlu0 %3268
      %3270 = vrot.lane.b32.xlu0 %v2345, 100
      %v3271 = vpop.permute.xlu0 %3270
      %3272 = vrot.lane.b32.xlu0 %v2816, 100
      %v3273 = vpop.permute.xlu0 %3272
      %3274 = vrot.lane.b32.xlu0 %v2818, 100
      %v3275 = vpop.permute.xlu0 %3274
      %3276 = vrot.lane.b32.xlu0 %v3213, 100
      %v3277 = vpop.permute.xlu0 %3276
      %3278 = vrot.lane.b32.xlu0 %v3215, 100
      %v3279 = vpop.permute.xlu0 %3278
      %v3312 = vadd.f32 %v3178, %v3217
      %v3313 = vadd.f32 %v3179, %v3219
      %v3314 = vadd.f32 %v3180, %v3221
      %v3315 = vadd.f32 %v3181, %v3223
      %v3316 = vadd.f32 %v3182, %v3225
      %v3317 = vadd.f32 %v3183, %v3227
      %v3318 = vadd.f32 %v3184, %v3229
      %v3319 = vadd.f32 %v3185, %v3231
      %v3320 = vadd.f32 %v3186, %v3233
      %v3321 = vadd.f32 %v3187, %v3235
      %v3322 = vadd.f32 %v3188, %v3237
      %v3323 = vadd.f32 %v3189, %v3239
      %v3324 = vadd.f32 %v3190, %v3241
      %v3325 = vadd.f32 %v3191, %v3243
      %v3326 = vadd.f32 %v3192, %v3245
      %v3327 = vadd.f32 %v3193, %v3247
      %v3328 = vadd.f32 %v3194, %v3249
      %v3329 = vadd.f32 %v3195, %v3251
      %v3330 = vadd.f32 %v3196, %v3253
      %v3331 = vadd.f32 %v3197, %v3255
      %v3332 = vadd.f32 %v3198, %v3257
      %v3333 = vadd.f32 %v3199, %v3259
      %v3334 = vadd.f32 %v3200, %v3261
      %v3335 = vadd.f32 %v3201, %v3263
      %v3336 = vadd.f32 %v3202, %v3265
      %v3337 = vadd.f32 %v3203, %v3267
      %v3338 = vadd.f32 %v3204, %v3269
      %v3339 = vadd.f32 %v3205, %v3271
      %v3340 = vadd.f32 %v3206, %v3273
      %v3341 = vadd.f32 %v3207, %v3275
      %v3342 = vadd.f32 %v3208, %v3277
      %v3343 = vadd.f32 %v3209, %v3279
      %v3344 = vrot.slane %v2210, 2
      %v3345 = vrot.slane %v2213, 2
      %v3346 = vsel %vm2474, %v3344, %v3345
      %v3347 = vrot.slane %v2215, 2
      %v3348 = vsel %vm2474, %v3345, %v3347
      %3349 = vrot.lane.b32.xlu0 %v2487, 96
      %v3350 = vpop.permute.xlu0 %3349
      %3351 = vrot.lane.b32.xlu0 %v2489, 96
      %v3352 = vpop.permute.xlu0 %3351
      %3353 = vrot.lane.b32.xlu0 %v2492, 96
      %v3354 = vpop.permute.xlu0 %3353
      %3355 = vrot.lane.b32.xlu0 %v2494, 96
      %v3356 = vpop.permute.xlu0 %3355
      %3357 = vrot.lane.b32.xlu0 %v2497, 96
      %v3358 = vpop.permute.xlu0 %3357
      %3359 = vrot.lane.b32.xlu0 %v2499, 96
      %v3360 = vpop.permute.xlu0 %3359
      %3361 = vrot.lane.b32.xlu0 %v2502, 96
      %v3362 = vpop.permute.xlu0 %3361
      %3363 = vrot.lane.b32.xlu0 %v2504, 96
      %v3364 = vpop.permute.xlu0 %3363
      %3365 = vrot.lane.b32.xlu0 %v2507, 96
      %v3366 = vpop.permute.xlu0 %3365
      %3367 = vrot.lane.b32.xlu0 %v2509, 96
      %v3368 = vpop.permute.xlu0 %3367
      %3369 = vrot.lane.b32.xlu0 %v2512, 96
      %v3370 = vpop.permute.xlu0 %3369
      %3371 = vrot.lane.b32.xlu0 %v2514, 96
      %v3372 = vpop.permute.xlu0 %3371
      %3373 = vrot.lane.b32.xlu0 %v2517, 96
      %v3374 = vpop.permute.xlu0 %3373
      %3375 = vrot.lane.b32.xlu0 %v2519, 96
      %v3376 = vpop.permute.xlu0 %3375
      %3377 = vrot.lane.b32.xlu0 %v2522, 96
      %v3378 = vpop.permute.xlu0 %3377
      %3379 = vrot.lane.b32.xlu0 %v2524, 96
      %v3380 = vpop.permute.xlu0 %3379
      %3381 = vrot.lane.b32.xlu0 %v2527, 96
      %v3382 = vpop.permute.xlu0 %3381
      %3383 = vrot.lane.b32.xlu0 %v2529, 96
      %v3384 = vpop.permute.xlu0 %3383
      %3385 = vrot.lane.b32.xlu0 %v2532, 96
      %v3386 = vpop.permute.xlu0 %3385
      %3387 = vrot.lane.b32.xlu0 %v2534, 96
      %v3388 = vpop.permute.xlu0 %3387
      %3389 = vrot.lane.b32.xlu0 %v2537, 96
      %v3390 = vpop.permute.xlu0 %3389
      %3391 = vrot.lane.b32.xlu0 %v2539, 96
      %v3392 = vpop.permute.xlu0 %3391
      %3393 = vrot.lane.b32.xlu0 %v2542, 96
      %v3394 = vpop.permute.xlu0 %3393
      %3395 = vrot.lane.b32.xlu0 %v2544, 96
      %v3396 = vpop.permute.xlu0 %3395
      %3397 = vrot.lane.b32.xlu0 %v2547, 96
      %v3398 = vpop.permute.xlu0 %3397
      %3399 = vrot.lane.b32.xlu0 %v2549, 96
      %v3400 = vpop.permute.xlu0 %3399
      %3401 = vrot.lane.b32.xlu0 %v2552, 96
      %v3402 = vpop.permute.xlu0 %3401
      %3403 = vrot.lane.b32.xlu0 %v2554, 96
      %v3404 = vpop.permute.xlu0 %3403
      %3405 = vrot.lane.b32.xlu0 %v2949, 96
      %v3406 = vpop.permute.xlu0 %3405
      %3407 = vrot.lane.b32.xlu0 %v2951, 96
      %v3408 = vpop.permute.xlu0 %3407
      %3409 = vrot.lane.b32.xlu0 %v3346, 96
      %v3410 = vpop.permute.xlu0 %3409
      %3411 = vrot.lane.b32.xlu0 %v3348, 96
      %v3412 = vpop.permute.xlu0 %3411
      %v3445 = vadd.f32 %v3312, %v3350
      %v3446 = vadd.f32 %v3313, %v3352
      %v3447 = vadd.f32 %v3314, %v3354
      %v3448 = vadd.f32 %v3315, %v3356
      %v3449 = vadd.f32 %v3316, %v3358
      %v3450 = vadd.f32 %v3317, %v3360
      %v3451 = vadd.f32 %v3318, %v3362
      %v3452 = vadd.f32 %v3319, %v3364
      %v3453 = vadd.f32 %v3320, %v3366
      %v3454 = vadd.f32 %v3321, %v3368
      %v3455 = vadd.f32 %v3322, %v3370
      %v3456 = vadd.f32 %v3323, %v3372
      %v3457 = vadd.f32 %v3324, %v3374
      %v3458 = vadd.f32 %v3325, %v3376
      %v3459 = vadd.f32 %v3326, %v3378
      %v3460 = vadd.f32 %v3327, %v3380
      %v3461 = vadd.f32 %v3328, %v3382
      %v3462 = vadd.f32 %v3329, %v3384
      %v3463 = vadd.f32 %v3330, %v3386
      %v3464 = vadd.f32 %v3331, %v3388
      %v3465 = vadd.f32 %v3332, %v3390
      %v3466 = vadd.f32 %v3333, %v3392
      %v3467 = vadd.f32 %v3334, %v3394
      %v3468 = vadd.f32 %v3335, %v3396
      %v3469 = vadd.f32 %v3336, %v3398
      %v3470 = vadd.f32 %v3337, %v3400
      %v3471 = vadd.f32 %v3338, %v3402
      %v3472 = vadd.f32 %v3339, %v3404
      %v3473 = vadd.f32 %v3340, %v3406
      %v3474 = vadd.f32 %v3341, %v3408
      %v3475 = vadd.f32 %v3342, %v3410
      %v3476 = vadd.f32 %v3343, %v3412
      %v3477 = vld [vmem:[%s4] sm:$0x1]
      %v3479 = vperm.slane %v3477, 0
      %v3481 = vadd.f32 %v3445, %v3479
      %v3482 = vadd.f32 %v3446, %v3479
      %v3483 = vadd.f32 %v3447, %v3479
      %v3484 = vadd.f32 %v3448, %v3479
      %v3485 = vadd.f32 %v3449, %v3479
      %v3486 = vadd.f32 %v3450, %v3479
      %v3487 = vadd.f32 %v3451, %v3479
      %v3488 = vadd.f32 %v3452, %v3479
      %v3489 = vadd.f32 %v3453, %v3479
      %v3490 = vadd.f32 %v3454, %v3479
      %v3491 = vadd.f32 %v3455, %v3479
      %v3492 = vadd.f32 %v3456, %v3479
      %v3493 = vadd.f32 %v3457, %v3479
      %v3494 = vadd.f32 %v3458, %v3479
      %v3495 = vadd.f32 %v3459, %v3479
      %v3496 = vadd.f32 %v3460, %v3479
      %v3497 = vadd.f32 %v3461, %v3479
      %v3498 = vadd.f32 %v3462, %v3479
      %v3499 = vadd.f32 %v3463, %v3479
      %v3500 = vadd.f32 %v3464, %v3479
      %v3501 = vadd.f32 %v3465, %v3479
      %v3502 = vadd.f32 %v3466, %v3479
      %v3503 = vadd.f32 %v3467, %v3479
      %v3504 = vadd.f32 %v3468, %v3479
      %v3505 = vadd.f32 %v3469, %v3479
      %v3506 = vadd.f32 %v3470, %v3479
      %v3507 = vadd.f32 %v3471, %v3479
      %v3508 = vadd.f32 %v3472, %v3479
      %v3509 = vadd.f32 %v3473, %v3479
      %v3510 = vadd.f32 %v3474, %v3479
      %v3511 = vadd.f32 %v3475, %v3479
      %v3512 = vadd.f32 %v3476, %v3479
      %vm3513 = vcmask 31744
      %3514 = vst.msk [vmem:[%s224] sm:$0xff] %vm3513, %v3481
      %3515 = vst.msk [vmem:[%s224 + $0x8] sm:$0xff] %vm3513, %v3482
      %3516 = vst.msk [vmem:[%s224 + $0x10] sm:$0xff] %vm3513, %v3483
      %3517 = vst.msk [vmem:[%s224 + $0x18] sm:$0xff] %vm3513, %v3484
      %3518 = vst.msk [vmem:[%s224 + $0x20] sm:$0xff] %vm3513, %v3485
      %3519 = vst.msk [vmem:[%s224 + $0x28] sm:$0xff] %vm3513, %v3486
      %3520 = vst.msk [vmem:[%s224 + $0x30] sm:$0xff] %vm3513, %v3487
      %3521 = vst.msk [vmem:[%s224 + $0x38] sm:$0xff] %vm3513, %v3488
      %3522 = vst.msk [vmem:[%s224 + $0x40] sm:$0xff] %vm3513, %v3489
      %3523 = vst.msk [vmem:[%s224 + $0x48] sm:$0xff] %vm3513, %v3490
      %3524 = vst.msk [vmem:[%s224 + $0x50] sm:$0xff] %vm3513, %v3491
      %3525 = vst.msk [vmem:[%s224 + $0x58] sm:$0xff] %vm3513, %v3492
      %3526 = vst.msk [vmem:[%s224 + $0x60] sm:$0xff] %vm3513, %v3493
      %3527 = vst.msk [vmem:[%s224 + $0x68] sm:$0xff] %vm3513, %v3494
      %3528 = vst.msk [vmem:[%s224 + $0x70] sm:$0xff] %vm3513, %v3495
      %3529 = vst.msk [vmem:[%s224 + $0x78] sm:$0xff] %vm3513, %v3496
      %3530 = vst.msk [vmem:[%s224 + $0x80] sm:$0xff] %vm3513, %v3497
      %3531 = vst.msk [vmem:[%s224 + $0x88] sm:$0xff] %vm3513, %v3498
      %3532 = vst.msk [vmem:[%s224 + $0x90] sm:$0xff] %vm3513, %v3499
      %3533 = vst.msk [vmem:[%s224 + $0x98] sm:$0xff] %vm3513, %v3500
      %3534 = vst.msk [vmem:[%s224 + $0xa0] sm:$0xff] %vm3513, %v3501
      %3535 = vst.msk [vmem:[%s224 + $0xa8] sm:$0xff] %vm3513, %v3502
      %3536 = vst.msk [vmem:[%s224 + $0xb0] sm:$0xff] %vm3513, %v3503
      %3537 = vst.msk [vmem:[%s224 + $0xb8] sm:$0xff] %vm3513, %v3504
      %3538 = vst.msk [vmem:[%s224 + $0xc0] sm:$0xff] %vm3513, %v3505
      %3539 = vst.msk [vmem:[%s224 + $0xc8] sm:$0xff] %vm3513, %v3506
      %3540 = vst.msk [vmem:[%s224 + $0xd0] sm:$0xff] %vm3513, %v3507
      %3541 = vst.msk [vmem:[%s224 + $0xd8] sm:$0xff] %vm3513, %v3508
      %3542 = vst.msk [vmem:[%s224 + $0xe0] sm:$0xff] %vm3513, %v3509
      %3543 = vst.msk [vmem:[%s224 + $0xe8] sm:$0xff] %vm3513, %v3510
      %3544 = vst.msk [vmem:[%s224 + $0xf0] sm:$0xff] %vm3513, %v3511
      %3545 = vst.msk [vmem:[%s224 + $0xf8] sm:$0xff] %vm3513, %v3512
      %p3546 = scmp.lt.s32.totalorder %s16, 1
      %s3547 = scalar_select %p3546, %s16, 1
      %s3548 = smul.addr %s3547, 32
      %s3549 = smul.addr %s3548, 8
      %s3550 = scalar_lea.vmem %s5, %s3549
      // Predicated region
      $region41: #{unet_output_layer.1} parent=39 // pred_check
        %p3551 = pneg %p144
      $region42: #{unet_output_layer.1} parent=39 // pred_check_branch
        %3553 = sbr.rel (%p3551) target = $region44
      $region43: #{unet_output_layer.1} parent=39 // pred_region
        _
      $region44: #{unet_output_layer.1} parent=39 // pred_fallthru
        _
    $region40: #{unet_output_layer.1} parent=5 // pred_fallthru
      _
    %p3554 = scmp.le.s32.totalorder 2, %s11
    // Predicated region
    $region45: #{unet_output_layer.1} parent=5 // pred_check
      %p3555 = pneg %p3554
    $region46: #{unet_output_layer.1} parent=5 // pred_check_branch
      %3557 = sbr.rel (%p3555) target = $region48
    $region47: #{unet_output_layer.1} parent=5 // pred_region
      %s3558 = ssub.s32 %s11, 2
      // Predicated region
      $region49: #{unet_output_layer.1} parent=47 // pred_check
        %p3559 = pneg %p150
      $region50: #{unet_output_layer.1} parent=47 // pred_check_branch
        %3561 = sbr.rel (%p3559) target = $region52
      $region51: #{unet_output_layer.1} parent=47 // pred_region
        %p3562 = scmp.lt.s32.totalorder %s17, 1
        %s3563 = scalar_select %p3562, %s17, 1
        %s3564 = smul.addr %s3563, 32
        %s3565 = smul.addr %s3564, 8
        %s3566 = scalar_lea.vmem %s5, %s3565
      $region52: #{unet_output_layer.1} parent=47 // pred_fallthru
        _
    $region48: #{unet_output_layer.1} parent=5 // pred_fallthru
      _
  $region6: #{unet_output_layer.1} parent=0 // loop_footer
    %s15 = sadd.s32 1, %s11
  $region7: #{unet_output_layer.1} parent=0 // loop_footer_branch
    %10 = sbr.rel target = $region3
  $region8: #{unet_output_layer.1} parent=0 // loop_exit
    _

</llo_original>
